<compile_context>
chip_gen: v6e
topology: v6e:2x2x1
jax: 0.10.0
libtpu: 0.0.40
codegen_flags: <defaults>
</compile_context>

<pallas_src>
import functools

import numpy as np
import jax
import jax.numpy as jnp
from jax.experimental import pallas as pl
from jax.experimental.pallas import tpu as pltpu

BN_EPS = 1e-5


# -----------------------------------------------------------------------------
# Host-side bilinear interpolation helpers (PyTorch align_corners=False semantics)
# -----------------------------------------------------------------------------
def bilinear_taps(in_size, scale):
    out_size = in_size * scale
    j = np.arange(out_size)
    src = (j + 0.5) / scale - 0.5
    src = np.maximum(src, 0.0)
    i0 = np.minimum(np.floor(src).astype(np.int64), in_size - 1)
    i1 = np.minimum(i0 + 1, in_size - 1)
    lam = (src - i0).astype(np.float32)
    return i0, i1, lam


def bilinear_matrix(in_size, scale):
    i0, i1, lam = bilinear_taps(in_size, scale)
    out_size = in_size * scale
    m = np.zeros((out_size, in_size), np.float32)
    m[np.arange(out_size), i0] += 1.0 - lam
    m[np.arange(out_size), i1] += lam
    return m


# -----------------------------------------------------------------------------
# Pallas kernel: one FPN level (conv -> relu -> bn(train) -> conv -> upsample)
# -----------------------------------------------------------------------------
def _fpn_level_kernel(xpad_ref, w1_ref, b1_ref, gamma_ref, beta_ref,
                      w2_ref, b2_ref, mask_ref, mh_ref,
                      out_ref, p1_ref, p2_ref, t_ref,
                      *, N, H, W, Cin, Cmid, Cout, scale, w_i0, w_i1, w_lam):
    He, We = H + 2, W + 2          # extended conv1 output domain (gives conv2's padding)
    Hout, Wout = H * scale, W * scale
    Re = N * He * We               # extended flattened pixel count
    R = N * H * W                  # original flattened pixel count
    Q = Wout * Cout                # lane-dense output width

    # ---- conv1 as ONE im2col matmul: patches (Re, 9*Cin) bf16, MXU f32 accumulation ----
    xpad = xpad_ref[...]                                     # (N, H+4, W+4, Cin) bf16
    for kh in range(3):
        for kw in range(3):
            tap = kh * 3 + kw
            p1_ref[:, tap * Cin:(tap + 1) * Cin] = (
                xpad[:, kh:kh + He, kw:kw + We, :].reshape(Re, Cin))
    acc1 = jnp.dot(p1_ref[...], w1_ref[...],
                   preferred_element_type=jnp.float32)       # (Re, Cmid) f32
    acc1 = jnp.maximum(acc1 + b1_ref[...], 0.0)              # bias + ReLU

    # ---- BatchNorm2d (training-mode batch stats over interior pixels), folded ----
    mask = mask_ref[...]                                     # (Re, 1): 1 interior, 0 ring
    am = acc1 * mask                                         # masked activations (reused)
    inv_cnt = 1.0 / float(R)
    mean = jnp.sum(am, axis=0, keepdims=True) * inv_cnt      # (1, Cmid)
    var = jnp.sum(am * am, axis=0, keepdims=True) * inv_cnt - mean * mean
    scale_c = gamma_ref[...] * jax.lax.rsqrt(var + BN_EPS)   # fold into scale/shift
    shift_c = beta_ref[...] - mean * scale_c
    y = (am * scale_c + shift_c) * mask                      # ring stays 0 == zero padding

    # ---- conv2 as ONE im2col matmul on the original H x W domain ----
    y4 = y.astype(jnp.bfloat16).reshape(N, He, We, Cmid)
    for kh in range(3):
        for kw in range(3):
            tap = kh * 3 + kw
            p2_ref[:, tap * Cmid:(tap + 1) * Cmid] = (
                y4[:, kh:kh + H, kw:kw + W, :].reshape(R, Cmid))
    acc2 = jnp.dot(p2_ref[...], w2_ref[...],
                   preferred_element_type=jnp.float32)       # (R, Cout) f32
    acc2 = acc2 + b2_ref[...]

    # ---- separable bilinear upsample (align_corners=False) ----
    # width pass: 2-tap lerp per output column -> lane-dense (N*H, Wout*Cout) scratch
    a3 = acc2.reshape(N * H, W, Cout)
    for wo in range(Wout):
        i0, i1, lam = w_i0[wo], w_i1[wo], w_lam[wo]
        if lam == 0.0:
            col = a3[:, i0:i0 + 1, :].reshape(N * H, Cout)
        else:
            col = (a3[:, i0:i0 + 1, :].reshape(N * H, Cout) * (1.0 - lam)
                   + a3[:, i1:i1 + 1, :].reshape(N * H, Cout) * lam)
        t_ref[:, wo * Cout:(wo + 1) * Cout] = col.astype(t_ref.dtype)

    # height pass: one wide MXU matmul per image against the tiny resident (Hout, H)
    # interpolation matrix (interp weights stay in vregs; matmul N-dim = Wout*Cout).
    mh = mh_ref[...]                                         # (Hout, H) bf16
    for n in range(N):
        seg = t_ref[n * H:(n + 1) * H, :]                    # (H, Q) bf16
        out_ref[n * Hout:(n + 1) * Hout, :] = jnp.dot(
            mh, seg, preferred_element_type=jnp.float32)


# -----------------------------------------------------------------------------
# Wrapper: one pyramid level through the Pallas kernel (NHWC in / NHWC out)
# -----------------------------------------------------------------------------
def fpn_level(x_nhwc, params, scale):
    w1, b1, gamma, beta, w2, b2 = params
    N, H, W, Cin = x_nhwc.shape
    Cmid = w1.shape[2]
    Cout = w2.shape[2]
    He, We = H + 2, W + 2
    Hout, Wout = H * scale, W * scale

    # zero-pad by 2: conv1 is evaluated on the (H+2, W+2) extended domain so that
    # conv2's zero padding is obtained by masking the 1-pixel ring of the BN output.
    xpad = jnp.pad(x_nhwc, ((0, 0), (2, 2), (2, 2), (0, 0))).astype(jnp.bfloat16)
    w1f = w1.reshape(9 * Cin, Cmid).astype(jnp.bfloat16)
    w2f = w2.reshape(9 * Cmid, Cout).astype(jnp.bfloat16)

    mask = np.zeros((N, He, We, 1), np.float32)
    mask[:, 1:He - 1, 1:We - 1, :] = 1.0
    mask = jnp.asarray(mask.reshape(N * He * We, 1))

    mh = jnp.asarray(bilinear_matrix(H, scale)).astype(jnp.bfloat16)   # (Hout, H)
    w_i0, w_i1, w_lam = bilinear_taps(W, scale)

    kernel = functools.partial(
        _fpn_level_kernel,
        N=N, H=H, W=W, Cin=Cin, Cmid=Cmid, Cout=Cout, scale=scale,
        w_i0=tuple(int(v) for v in w_i0),
        w_i1=tuple(int(v) for v in w_i1),
        w_lam=tuple(float(v) for v in w_lam))

    vmem = pl.BlockSpec(memory_space=pltpu.MemorySpace.VMEM)
    out_flat = pl.pallas_call(
        kernel,
        out_shape=jax.ShapeDtypeStruct((N * Hout, Wout * Cout), jnp.float32),
        in_specs=[vmem] * 9,
        out_specs=vmem,
        scratch_shapes=[
            pltpu.VMEM((N * He * We, 9 * Cin), jnp.bfloat16),   # conv1 im2col patches
            pltpu.VMEM((N * H * W, 9 * Cmid), jnp.bfloat16),    # conv2 im2col patches
            pltpu.VMEM((N * H, Wout * Cout), jnp.bfloat16),     # width-interp result
        ],
        compiler_params=pltpu.CompilerParams(vmem_limit_bytes=32 * 1024 * 1024),
    )(xpad, w1f, b1, gamma, beta, w2f, b2, mask, mh)

    return out_flat.reshape(N, Hout, Wout, Cout)


def fpn_forward(xs_nchw, last_layer_nchw, params):
    """Full FPN forward (matches the torch module). Inputs/outputs are NCHW."""
    n = len(xs_nchw)
    outs = []
    for i, (x, p) in enumerate(zip(xs_nchw, params)):
        scale = 2 ** (n - i)
        o_nhwc = fpn_level(jnp.transpose(x, (0, 2, 3, 1)), p, scale)
        outs.append(jnp.transpose(o_nhwc, (0, 3, 1, 2)))
    outs.append(last_layer_nchw)
    return jnp.concatenate(outs, axis=1)


# -----------------------------------------------------------------------------
# Pure-JAX reference for the correctness check. MXU operands in the kernel are
# bf16, so the reference quantizes the inputs / conv weights the same way and the
# comparison tolerance is widened accordingly (intermediate bf16 rounds remain).
# -----------------------------------------------------------------------------
def _q(a):
    return a.astype(jnp.bfloat16).astype(jnp.float32)


def _ref_level(x_nchw, params, scale):
    w1, b1, gamma, beta, w2, b2 = params
    cin = x_nchw.shape[1]
    cmid, cout = w1.shape[2], w2.shape[2]
    w1_oihw = jnp.transpose(_q(w1).reshape(3, 3, cin, cmid), (3, 2, 0, 1))
    w2_oihw = jnp.transpose(_q(w2).reshape(3, 3, cmid, cout), (3, 2, 0, 1))
    dn = ('NCHW', 'OIHW', 'NCHW')
    z = jax.lax.conv_general_dilated(_q(x_nchw), w1_oihw, (1, 1), 'SAME',
                                     dimension_numbers=dn)
    z = jnp.maximum(z + b1.reshape(1, cmid, 1, 1), 0.0)
    mu = jnp.mean(z, axis=(0, 2, 3), keepdims=True)
    var = jnp.mean((z - mu) ** 2, axis=(0, 2, 3), keepdims=True)
    z = (z - mu) * jax.lax.rsqrt(var + BN_EPS)
    z = z * gamma.reshape(1, cmid, 1, 1) + beta.reshape(1, cmid, 1, 1)
    z = jax.lax.conv_general_dilated(z, w2_oihw, (1, 1), 'SAME',
                                     dimension_numbers=dn)
    z = z + b2.reshape(1, cout, 1, 1)
    N, _, H, W = x_nchw.shape
    mh = jnp.asarray(bilinear_matrix(H, scale))
    mw = jnp.asarray(bilinear_matrix(W, scale))
    up = jnp.einsum('oh,nchw->ncow', mh, z)
    up = jnp.einsum('pw,ncow->ncop', mw, up)
    return up


def fpn_forward_ref(xs_nchw, last_layer_nchw, params):
    n = len(xs_nchw)
    outs = [_ref_level(x, p, 2 ** (n - i))
            for i, (x, p) in enumerate(zip(xs_nchw, params))]
    outs.append(last_layer_nchw)
    return jnp.concatenate(outs, axis=1)


# -----------------------------------------------------------------------------
# Deterministic parameter init (shapes as in the torch module __init__)
# -----------------------------------------------------------------------------
def make_level_params(key, cin, cout):
    cmid = cout * 2
    k1, k2, k3, k4, k5, k6 = jax.random.split(key, 6)
    w1 = 0.2 * jax.random.normal(k1, (9, cin, cmid), jnp.float32)      # conv1 (3,3,Cin,Cmid) flat
    b1 = 0.1 * jax.random.normal(k2, (1, cmid), jnp.float32)
    gamma = 1.0 + 0.1 * jax.random.normal(k3, (1, cmid), jnp.float32)  # BN weight
    beta = 0.1 * jax.random.normal(k4, (1, cmid), jnp.float32)         # BN bias
    w2 = 0.2 * jax.random.normal(k5, (9, cmid, cout), jnp.float32)     # conv2 (3,3,Cmid,Cout) flat
    b2 = 0.1 * jax.random.normal(k6, (1, cout), jnp.float32)
    return (w1, b1, gamma, beta, w2, b2)


if __name__ == "__main__":
    key = jax.random.PRNGKey(0)
    input_channels = [8, 6]
    output_channels = [4, 3]
    n_levels = len(input_channels)
    N = 2
    base = 4                                    # smallest pyramid spatial size
    H_final = base * (2 ** n_levels)            # 16 (spatial size after upsampling)
    c_last = 5

    keys = jax.random.split(key, n_levels + 2)
    xs = []
    for i, cin in enumerate(input_channels):
        h = base * (2 ** i)
        xs.append(jax.random.normal(keys[i], (N, cin, h, h), jnp.float32))
    last_layer = jax.random.normal(keys[n_levels], (N, c_last, H_final, H_final),
                                   jnp.float32)

    pkeys = jax.random.split(keys[n_levels + 1], n_levels)
    params = [make_level_params(k, cin, cout)
              for k, cin, cout in zip(pkeys, input_channels, output_channels)]

    out = fpn_forward(xs, last_layer, params)
    out = jax.block_until_ready(out)

    assert out.shape == (N, sum(output_channels) + c_last, H_final, H_final), out.shape

    ref = jax.block_until_ready(fpn_forward_ref(xs, last_layer, params))
    # bf16 MXU operands in the kernel vs. f32 math in the reference -> relaxed tolerance.
    np.testing.assert_allclose(np.asarray(out), np.asarray(ref),
                               rtol=2e-2, atol=2e-2)

    print("KERNEL_OK")
</pallas_src>

<mosaic_0001>
module attributes {stable_mosaic.version = 11 : i64} {
  func.func @_fpn_level_kernel(%arg0: memref<2x8x8x8xbf16, #tpu.memory_space<vmem>>, %arg1: memref<72x8xbf16, #tpu.memory_space<vmem>>, %arg2: memref<1x8xf32, #tpu.memory_space<vmem>>, %arg3: memref<1x8xf32, #tpu.memory_space<vmem>>, %arg4: memref<1x8xf32, #tpu.memory_space<vmem>>, %arg5: memref<72x4xbf16, #tpu.memory_space<vmem>>, %arg6: memref<1x4xf32, #tpu.memory_space<vmem>>, %arg7: memref<72x1xf32, #tpu.memory_space<vmem>>, %arg8: memref<16x4xbf16, #tpu.memory_space<vmem>>, %arg9: memref<32x64xf32, #tpu.memory_space<vmem>>, %arg10: memref<72x72xbf16, #tpu.memory_space<vmem>>, %arg11: memref<32x72xbf16, #tpu.memory_space<vmem>>, %arg12: memref<8x64xbf16, #tpu.memory_space<vmem>>) attributes {dimension_semantics = [], scalar_prefetch = 0 : i64, scratch_operands = 3 : i64, tpu.core_type = #tpu.core_type<tc>} {
    %c0 = arith.constant 0 : index
    %c0_0 = arith.constant 0 : index
    %c0_1 = arith.constant 0 : index
    %c0_2 = arith.constant 0 : index
    %0 = vector.load %arg0[%c0, %c0_0, %c0_1, %c0_2] : memref<2x8x8x8xbf16, #tpu.memory_space<vmem>>, vector<2x8x8x8xbf16>
    %1 = vector.extract_strided_slice %0 {offsets = [0, 0, 0, 0], sizes = [2, 6, 6, 8], strides = [1, 1, 1, 1]} : vector<2x8x8x8xbf16> to vector<2x6x6x8xbf16>
    %2 = vector.shape_cast %1 : vector<2x6x6x8xbf16> to vector<72x8xbf16>
    %c0_3 = arith.constant 0 : index
    %c0_4 = arith.constant 0 : index
    %3 = vector.load %arg10[%c0_3, %c0_4] : memref<72x72xbf16, #tpu.memory_space<vmem>>, vector<72x8xbf16>
    tpu.vector_store %arg10[%c0_3, %c0_4], %2 {strides = array<i32>} : memref<72x72xbf16, #tpu.memory_space<vmem>>, vector<72x8xbf16>,
    %4 = vector.extract_strided_slice %0 {offsets = [0, 0, 1, 0], sizes = [2, 6, 6, 8], strides = [1, 1, 1, 1]} : vector<2x8x8x8xbf16> to vector<2x6x6x8xbf16>
    %5 = vector.shape_cast %4 : vector<2x6x6x8xbf16> to vector<72x8xbf16>
    %c0_5 = arith.constant 0 : index
    %c8 = arith.constant 8 : index
    %6 = vector.load %arg10[%c0_5, %c8] : memref<72x72xbf16, #tpu.memory_space<vmem>>, vector<72x8xbf16>
    tpu.vector_store %arg10[%c0_5, %c8], %5 {strides = array<i32>} : memref<72x72xbf16, #tpu.memory_space<vmem>>, vector<72x8xbf16>,
    %7 = vector.extract_strided_slice %0 {offsets = [0, 0, 2, 0], sizes = [2, 6, 6, 8], strides = [1, 1, 1, 1]} : vector<2x8x8x8xbf16> to vector<2x6x6x8xbf16>
    %8 = vector.shape_cast %7 : vector<2x6x6x8xbf16> to vector<72x8xbf16>
    %c0_6 = arith.constant 0 : index
    %c16 = arith.constant 16 : index
    %9 = vector.load %arg10[%c0_6, %c16] : memref<72x72xbf16, #tpu.memory_space<vmem>>, vector<72x8xbf16>
    tpu.vector_store %arg10[%c0_6, %c16], %8 {strides = array<i32>} : memref<72x72xbf16, #tpu.memory_space<vmem>>, vector<72x8xbf16>,
    %10 = vector.extract_strided_slice %0 {offsets = [0, 1, 0, 0], sizes = [2, 6, 6, 8], strides = [1, 1, 1, 1]} : vector<2x8x8x8xbf16> to vector<2x6x6x8xbf16>
    %11 = vector.shape_cast %10 : vector<2x6x6x8xbf16> to vector<72x8xbf16>
    %c0_7 = arith.constant 0 : index
    %c24 = arith.constant 24 : index
    %12 = vector.load %arg10[%c0_7, %c24] : memref<72x72xbf16, #tpu.memory_space<vmem>>, vector<72x8xbf16>
    tpu.vector_store %arg10[%c0_7, %c24], %11 {strides = array<i32>} : memref<72x72xbf16, #tpu.memory_space<vmem>>, vector<72x8xbf16>,
    %13 = vector.extract_strided_slice %0 {offsets = [0, 1, 1, 0], sizes = [2, 6, 6, 8], strides = [1, 1, 1, 1]} : vector<2x8x8x8xbf16> to vector<2x6x6x8xbf16>
    %14 = vector.shape_cast %13 : vector<2x6x6x8xbf16> to vector<72x8xbf16>
    %c0_8 = arith.constant 0 : index
    %c32 = arith.constant 32 : index
    %15 = vector.load %arg10[%c0_8, %c32] : memref<72x72xbf16, #tpu.memory_space<vmem>>, vector<72x8xbf16>
    tpu.vector_store %arg10[%c0_8, %c32], %14 {strides = array<i32>} : memref<72x72xbf16, #tpu.memory_space<vmem>>, vector<72x8xbf16>,
    %16 = vector.extract_strided_slice %0 {offsets = [0, 1, 2, 0], sizes = [2, 6, 6, 8], strides = [1, 1, 1, 1]} : vector<2x8x8x8xbf16> to vector<2x6x6x8xbf16>
    %17 = vector.shape_cast %16 : vector<2x6x6x8xbf16> to vector<72x8xbf16>
    %c0_9 = arith.constant 0 : index
    %c40 = arith.constant 40 : index
    %18 = vector.load %arg10[%c0_9, %c40] : memref<72x72xbf16, #tpu.memory_space<vmem>>, vector<72x8xbf16>
    tpu.vector_store %arg10[%c0_9, %c40], %17 {strides = array<i32>} : memref<72x72xbf16, #tpu.memory_space<vmem>>, vector<72x8xbf16>,
    %19 = vector.extract_strided_slice %0 {offsets = [0, 2, 0, 0], sizes = [2, 6, 6, 8], strides = [1, 1, 1, 1]} : vector<2x8x8x8xbf16> to vector<2x6x6x8xbf16>
    %20 = vector.shape_cast %19 : vector<2x6x6x8xbf16> to vector<72x8xbf16>
    %c0_10 = arith.constant 0 : index
    %c48 = arith.constant 48 : index
    %21 = vector.load %arg10[%c0_10, %c48] : memref<72x72xbf16, #tpu.memory_space<vmem>>, vector<72x8xbf16>
    tpu.vector_store %arg10[%c0_10, %c48], %20 {strides = array<i32>} : memref<72x72xbf16, #tpu.memory_space<vmem>>, vector<72x8xbf16>,
    %22 = vector.extract_strided_slice %0 {offsets = [0, 2, 1, 0], sizes = [2, 6, 6, 8], strides = [1, 1, 1, 1]} : vector<2x8x8x8xbf16> to vector<2x6x6x8xbf16>
    %23 = vector.shape_cast %22 : vector<2x6x6x8xbf16> to vector<72x8xbf16>
    %c0_11 = arith.constant 0 : index
    %c56 = arith.constant 56 : index
    %24 = vector.load %arg10[%c0_11, %c56] : memref<72x72xbf16, #tpu.memory_space<vmem>>, vector<72x8xbf16>
    tpu.vector_store %arg10[%c0_11, %c56], %23 {strides = array<i32>} : memref<72x72xbf16, #tpu.memory_space<vmem>>, vector<72x8xbf16>,
    %25 = vector.extract_strided_slice %0 {offsets = [0, 2, 2, 0], sizes = [2, 6, 6, 8], strides = [1, 1, 1, 1]} : vector<2x8x8x8xbf16> to vector<2x6x6x8xbf16>
    %26 = vector.shape_cast %25 : vector<2x6x6x8xbf16> to vector<72x8xbf16>
    %c0_12 = arith.constant 0 : index
    %c64 = arith.constant 64 : index
    %27 = vector.load %arg10[%c0_12, %c64] : memref<72x72xbf16, #tpu.memory_space<vmem>>, vector<72x8xbf16>
    tpu.vector_store %arg10[%c0_12, %c64], %26 {strides = array<i32>} : memref<72x72xbf16, #tpu.memory_space<vmem>>, vector<72x8xbf16>,
    %c0_13 = arith.constant 0 : index
    %c0_14 = arith.constant 0 : index
    %28 = vector.load %arg10[%c0_13, %c0_14] : memref<72x72xbf16, #tpu.memory_space<vmem>>, vector<72x72xbf16>
    %c0_15 = arith.constant 0 : index
    %c0_16 = arith.constant 0 : index
    %29 = vector.load %arg1[%c0_15, %c0_16] : memref<72x8xbf16, #tpu.memory_space<vmem>>, vector<72x8xbf16>
    %cst = arith.constant dense<0.000000e+00> : vector<72x8xf32>
    %30 = tpu.matmul %28, %29, %cst {dimension_numbers = #tpu.dot_dimension_numbers<[1], [0], [0], [1], [0, 0, 1, 1], [], []>} : vector<72x72xbf16>, vector<72x8xbf16>, vector<72x8xf32> -> vector<72x8xf32>
    %c0_17 = arith.constant 0 : index
    %c0_18 = arith.constant 0 : index
    %31 = vector.load %arg2[%c0_17, %c0_18] : memref<1x8xf32, #tpu.memory_space<vmem>>, vector<1x8xf32>
    %32 = vector.broadcast %31 : vector<1x8xf32> to vector<72x8xf32>
    %33 = arith.addf %30, %32 : vector<72x8xf32>
    %cst_19 = arith.constant 0.000000e+00 : f32
    %34 = vector.broadcast %cst_19 : f32 to vector<72x8xf32>
    %35 = arith.maximumf %33, %34 : vector<72x8xf32>
    %c0_20 = arith.constant 0 : index
    %c0_21 = arith.constant 0 : index
    %36 = vector.load %arg7[%c0_20, %c0_21] : memref<72x1xf32, #tpu.memory_space<vmem>>, vector<72x1xf32>
    %37 = vector.broadcast %36 : vector<72x1xf32> to vector<72x8xf32>
    %38 = arith.mulf %35, %37 : vector<72x8xf32>
    %cst_22 = arith.constant dense<0.000000e+00> : vector<8xf32>
    %39 = vector.multi_reduction <add>, %38, %cst_22 [0] : vector<72x8xf32> to vector<8xf32>
    %40 = vector.shape_cast %39 : vector<8xf32> to vector<1x8xf32>
    %cst_23 = arith.constant 3.125000e-02 : f32
    %41 = vector.broadcast %cst_23 : f32 to vector<1x8xf32>
    %42 = arith.mulf %40, %41 : vector<1x8xf32>
    %43 = arith.mulf %38, %38 : vector<72x8xf32>
    %cst_24 = arith.constant dense<0.000000e+00> : vector<8xf32>
    %44 = vector.multi_reduction <add>, %43, %cst_24 [0] : vector<72x8xf32> to vector<8xf32>
    %45 = vector.shape_cast %44 : vector<8xf32> to vector<1x8xf32>
    %cst_25 = arith.constant 3.125000e-02 : f32
    %46 = vector.broadcast %cst_25 : f32 to vector<1x8xf32>
    %47 = arith.mulf %45, %46 : vector<1x8xf32>
    %48 = arith.mulf %42, %42 : vector<1x8xf32>
    %49 = arith.subf %47, %48 : vector<1x8xf32>
    %c0_26 = arith.constant 0 : index
    %c0_27 = arith.constant 0 : index
    %50 = vector.load %arg3[%c0_26, %c0_27] : memref<1x8xf32, #tpu.memory_space<vmem>>, vector<1x8xf32>
    %cst_28 = arith.constant 9.99999974E-6 : f32
    %51 = vector.broadcast %cst_28 : f32 to vector<1x8xf32>
    %52 = arith.addf %49, %51 : vector<1x8xf32>
    %53 = math.rsqrt %52 : vector<1x8xf32>
    %54 = arith.mulf %50, %53 : vector<1x8xf32>
    %c0_29 = arith.constant 0 : index
    %c0_30 = arith.constant 0 : index
    %55 = vector.load %arg4[%c0_29, %c0_30] : memref<1x8xf32, #tpu.memory_space<vmem>>, vector<1x8xf32>
    %56 = arith.mulf %42, %54 : vector<1x8xf32>
    %57 = arith.subf %55, %56 : vector<1x8xf32>
    %58 = vector.broadcast %54 : vector<1x8xf32> to vector<72x8xf32>
    %59 = arith.mulf %38, %58 : vector<72x8xf32>
    %60 = vector.broadcast %57 : vector<1x8xf32> to vector<72x8xf32>
    %61 = arith.addf %59, %60 : vector<72x8xf32>
    %62 = vector.broadcast %36 : vector<72x1xf32> to vector<72x8xf32>
    %63 = arith.mulf %61, %62 : vector<72x8xf32>
    %64 = arith.truncf %63 : vector<72x8xf32> to vector<72x8xbf16>
    %65 = vector.shape_cast %64 : vector<72x8xbf16> to vector<2x6x6x8xbf16>
    %66 = vector.extract_strided_slice %65 {offsets = [0, 0, 0, 0], sizes = [2, 4, 4, 8], strides = [1, 1, 1, 1]} : vector<2x6x6x8xbf16> to vector<2x4x4x8xbf16>
    %67 = vector.shape_cast %66 : vector<2x4x4x8xbf16> to vector<32x8xbf16>
    %c0_31 = arith.constant 0 : index
    %c0_32 = arith.constant 0 : index
    %68 = vector.load %arg11[%c0_31, %c0_32] : memref<32x72xbf16, #tpu.memory_space<vmem>>, vector<32x8xbf16>
    tpu.vector_store %arg11[%c0_31, %c0_32], %67 {strides = array<i32>} : memref<32x72xbf16, #tpu.memory_space<vmem>>, vector<32x8xbf16>,
    %69 = vector.extract_strided_slice %65 {offsets = [0, 0, 1, 0], sizes = [2, 4, 4, 8], strides = [1, 1, 1, 1]} : vector<2x6x6x8xbf16> to vector<2x4x4x8xbf16>
    %70 = vector.shape_cast %69 : vector<2x4x4x8xbf16> to vector<32x8xbf16>
    %c0_33 = arith.constant 0 : index
    %c8_34 = arith.constant 8 : index
    %71 = vector.load %arg11[%c0_33, %c8_34] : memref<32x72xbf16, #tpu.memory_space<vmem>>, vector<32x8xbf16>
    tpu.vector_store %arg11[%c0_33, %c8_34], %70 {strides = array<i32>} : memref<32x72xbf16, #tpu.memory_space<vmem>>, vector<32x8xbf16>,
    %72 = vector.extract_strided_slice %65 {offsets = [0, 0, 2, 0], sizes = [2, 4, 4, 8], strides = [1, 1, 1, 1]} : vector<2x6x6x8xbf16> to vector<2x4x4x8xbf16>
    %73 = vector.shape_cast %72 : vector<2x4x4x8xbf16> to vector<32x8xbf16>
    %c0_35 = arith.constant 0 : index
    %c16_36 = arith.constant 16 : index
    %74 = vector.load %arg11[%c0_35, %c16_36] : memref<32x72xbf16, #tpu.memory_space<vmem>>, vector<32x8xbf16>
    tpu.vector_store %arg11[%c0_35, %c16_36], %73 {strides = array<i32>} : memref<32x72xbf16, #tpu.memory_space<vmem>>, vector<32x8xbf16>,
    %75 = vector.extract_strided_slice %65 {offsets = [0, 1, 0, 0], sizes = [2, 4, 4, 8], strides = [1, 1, 1, 1]} : vector<2x6x6x8xbf16> to vector<2x4x4x8xbf16>
    %76 = vector.shape_cast %75 : vector<2x4x4x8xbf16> to vector<32x8xbf16>
    %c0_37 = arith.constant 0 : index
    %c24_38 = arith.constant 24 : index
    %77 = vector.load %arg11[%c0_37, %c24_38] : memref<32x72xbf16, #tpu.memory_space<vmem>>, vector<32x8xbf16>
    tpu.vector_store %arg11[%c0_37, %c24_38], %76 {strides = array<i32>} : memref<32x72xbf16, #tpu.memory_space<vmem>>, vector<32x8xbf16>,
    %78 = vector.extract_strided_slice %65 {offsets = [0, 1, 1, 0], sizes = [2, 4, 4, 8], strides = [1, 1, 1, 1]} : vector<2x6x6x8xbf16> to vector<2x4x4x8xbf16>
    %79 = vector.shape_cast %78 : vector<2x4x4x8xbf16> to vector<32x8xbf16>
    %c0_39 = arith.constant 0 : index
    %c32_40 = arith.constant 32 : index
    %80 = vector.load %arg11[%c0_39, %c32_40] : memref<32x72xbf16, #tpu.memory_space<vmem>>, vector<32x8xbf16>
    tpu.vector_store %arg11[%c0_39, %c32_40], %79 {strides = array<i32>} : memref<32x72xbf16, #tpu.memory_space<vmem>>, vector<32x8xbf16>,
    %81 = vector.extract_strided_slice %65 {offsets = [0, 1, 2, 0], sizes = [2, 4, 4, 8], strides = [1, 1, 1, 1]} : vector<2x6x6x8xbf16> to vector<2x4x4x8xbf16>
    %82 = vector.shape_cast %81 : vector<2x4x4x8xbf16> to vector<32x8xbf16>
    %c0_41 = arith.constant 0 : index
    %c40_42 = arith.constant 40 : index
    %83 = vector.load %arg11[%c0_41, %c40_42] : memref<32x72xbf16, #tpu.memory_space<vmem>>, vector<32x8xbf16>
    tpu.vector_store %arg11[%c0_41, %c40_42], %82 {strides = array<i32>} : memref<32x72xbf16, #tpu.memory_space<vmem>>, vector<32x8xbf16>,
    %84 = vector.extract_strided_slice %65 {offsets = [0, 2, 0, 0], sizes = [2, 4, 4, 8], strides = [1, 1, 1, 1]} : vector<2x6x6x8xbf16> to vector<2x4x4x8xbf16>
    %85 = vector.shape_cast %84 : vector<2x4x4x8xbf16> to vector<32x8xbf16>
    %c0_43 = arith.constant 0 : index
    %c48_44 = arith.constant 48 : index
    %86 = vector.load %arg11[%c0_43, %c48_44] : memref<32x72xbf16, #tpu.memory_space<vmem>>, vector<32x8xbf16>
    tpu.vector_store %arg11[%c0_43, %c48_44], %85 {strides = array<i32>} : memref<32x72xbf16, #tpu.memory_space<vmem>>, vector<32x8xbf16>,
    %87 = vector.extract_strided_slice %65 {offsets = [0, 2, 1, 0], sizes = [2, 4, 4, 8], strides = [1, 1, 1, 1]} : vector<2x6x6x8xbf16> to vector<2x4x4x8xbf16>
    %88 = vector.shape_cast %87 : vector<2x4x4x8xbf16> to vector<32x8xbf16>
    %c0_45 = arith.constant 0 : index
    %c56_46 = arith.constant 56 : index
    %89 = vector.load %arg11[%c0_45, %c56_46] : memref<32x72xbf16, #tpu.memory_space<vmem>>, vector<32x8xbf16>
    tpu.vector_store %arg11[%c0_45, %c56_46], %88 {strides = array<i32>} : memref<32x72xbf16, #tpu.memory_space<vmem>>, vector<32x8xbf16>,
    %90 = vector.extract_strided_slice %65 {offsets = [0, 2, 2, 0], sizes = [2, 4, 4, 8], strides = [1, 1, 1, 1]} : vector<2x6x6x8xbf16> to vector<2x4x4x8xbf16>
    %91 = vector.shape_cast %90 : vector<2x4x4x8xbf16> to vector<32x8xbf16>
    %c0_47 = arith.constant 0 : index
    %c64_48 = arith.constant 64 : index
    %92 = vector.load %arg11[%c0_47, %c64_48] : memref<32x72xbf16, #tpu.memory_space<vmem>>, vector<32x8xbf16>
    tpu.vector_store %arg11[%c0_47, %c64_48], %91 {strides = array<i32>} : memref<32x72xbf16, #tpu.memory_space<vmem>>, vector<32x8xbf16>,
    %c0_49 = arith.constant 0 : index
    %c0_50 = arith.constant 0 : index
    %93 = vector.load %arg11[%c0_49, %c0_50] : memref<32x72xbf16, #tpu.memory_space<vmem>>, vector<32x72xbf16>
    %c0_51 = arith.constant 0 : index
    %c0_52 = arith.constant 0 : index
    %94 = vector.load %arg5[%c0_51, %c0_52] : memref<72x4xbf16, #tpu.memory_space<vmem>>, vector<72x4xbf16>
    %cst_53 = arith.constant dense<0.000000e+00> : vector<32x4xf32>
    %95 = tpu.matmul %93, %94, %cst_53 {dimension_numbers = #tpu.dot_dimension_numbers<[1], [0], [0], [1], [0, 0, 1, 1], [], []>} : vector<32x72xbf16>, vector<72x4xbf16>, vector<32x4xf32> -> vector<32x4xf32>
    %c0_54 = arith.constant 0 : index
    %c0_55 = arith.constant 0 : index
    %96 = vector.load %arg6[%c0_54, %c0_55] : memref<1x4xf32, #tpu.memory_space<vmem>>, vector<1x4xf32>
    %97 = vector.broadcast %96 : vector<1x4xf32> to vector<32x4xf32>
    %98 = arith.addf %95, %97 : vector<32x4xf32>
    %99 = vector.shape_cast %98 : vector<32x4xf32> to vector<8x4x4xf32>
    %100 = vector.extract_strided_slice %99 {offsets = [0, 0, 0], sizes = [8, 1, 4], strides = [1, 1, 1]} : vector<8x4x4xf32> to vector<8x1x4xf32>
    %101 = vector.shape_cast %100 : vector<8x1x4xf32> to vector<8x4xf32>
    %102 = arith.truncf %101 : vector<8x4xf32> to vector<8x4xbf16>
    %c0_56 = arith.constant 0 : index
    %c0_57 = arith.constant 0 : index
    %103 = vector.load %arg12[%c0_56, %c0_57] : memref<8x64xbf16, #tpu.memory_space<vmem>>, vector<8x4xbf16>
    tpu.vector_store %arg12[%c0_56, %c0_57], %102 {strides = array<i32>} : memref<8x64xbf16, #tpu.memory_space<vmem>>, vector<8x4xbf16>,
    %104 = vector.extract_strided_slice %99 {offsets = [0, 0, 0], sizes = [8, 1, 4], strides = [1, 1, 1]} : vector<8x4x4xf32> to vector<8x1x4xf32>
    %105 = vector.shape_cast %104 : vector<8x1x4xf32> to vector<8x4xf32>
    %106 = arith.truncf %105 : vector<8x4xf32> to vector<8x4xbf16>
    %c0_58 = arith.constant 0 : index
    %c4 = arith.constant 4 : index
    %107 = vector.load %arg12[%c0_58, %c4] : memref<8x64xbf16, #tpu.memory_space<vmem>>, vector<8x4xbf16>
    tpu.vector_store %arg12[%c0_58, %c4], %106 {strides = array<i32>} : memref<8x64xbf16, #tpu.memory_space<vmem>>, vector<8x4xbf16>,
    %108 = vector.extract_strided_slice %99 {offsets = [0, 0, 0], sizes = [8, 1, 4], strides = [1, 1, 1]} : vector<8x4x4xf32> to vector<8x1x4xf32>
    %109 = vector.shape_cast %108 : vector<8x1x4xf32> to vector<8x4xf32>
    %cst_59 = arith.constant 8.750000e-01 : f32
    %110 = vector.broadcast %cst_59 : f32 to vector<8x4xf32>
    %111 = arith.mulf %109, %110 : vector<8x4xf32>
    %112 = vector.extract_strided_slice %99 {offsets = [0, 1, 0], sizes = [8, 1, 4], strides = [1, 1, 1]} : vector<8x4x4xf32> to vector<8x1x4xf32>
    %113 = vector.shape_cast %112 : vector<8x1x4xf32> to vector<8x4xf32>
    %cst_60 = arith.constant 1.250000e-01 : f32
    %114 = vector.broadcast %cst_60 : f32 to vector<8x4xf32>
    %115 = arith.mulf %113, %114 : vector<8x4xf32>
    %116 = arith.addf %111, %115 : vector<8x4xf32>
    %117 = arith.truncf %116 : vector<8x4xf32> to vector<8x4xbf16>
    %c0_61 = arith.constant 0 : index
    %c8_62 = arith.constant 8 : index
    %118 = vector.load %arg12[%c0_61, %c8_62] : memref<8x64xbf16, #tpu.memory_space<vmem>>, vector<8x4xbf16>
    tpu.vector_store %arg12[%c0_61, %c8_62], %117 {strides = array<i32>} : memref<8x64xbf16, #tpu.memory_space<vmem>>, vector<8x4xbf16>,
    %119 = vector.extract_strided_slice %99 {offsets = [0, 0, 0], sizes = [8, 1, 4], strides = [1, 1, 1]} : vector<8x4x4xf32> to vector<8x1x4xf32>
    %120 = vector.shape_cast %119 : vector<8x1x4xf32> to vector<8x4xf32>
    %cst_63 = arith.constant 6.250000e-01 : f32
    %121 = vector.broadcast %cst_63 : f32 to vector<8x4xf32>
    %122 = arith.mulf %120, %121 : vector<8x4xf32>
    %123 = vector.extract_strided_slice %99 {offsets = [0, 1, 0], sizes = [8, 1, 4], strides = [1, 1, 1]} : vector<8x4x4xf32> to vector<8x1x4xf32>
    %124 = vector.shape_cast %123 : vector<8x1x4xf32> to vector<8x4xf32>
    %cst_64 = arith.constant 3.750000e-01 : f32
    %125 = vector.broadcast %cst_64 : f32 to vector<8x4xf32>
    %126 = arith.mulf %124, %125 : vector<8x4xf32>
    %127 = arith.addf %122, %126 : vector<8x4xf32>
    %128 = arith.truncf %127 : vector<8x4xf32> to vector<8x4xbf16>
    %c0_65 = arith.constant 0 : index
    %c12 = arith.constant 12 : index
    %129 = vector.load %arg12[%c0_65, %c12] : memref<8x64xbf16, #tpu.memory_space<vmem>>, vector<8x4xbf16>
    tpu.vector_store %arg12[%c0_65, %c12], %128 {strides = array<i32>} : memref<8x64xbf16, #tpu.memory_space<vmem>>, vector<8x4xbf16>,
    %130 = vector.extract_strided_slice %99 {offsets = [0, 0, 0], sizes = [8, 1, 4], strides = [1, 1, 1]} : vector<8x4x4xf32> to vector<8x1x4xf32>
    %131 = vector.shape_cast %130 : vector<8x1x4xf32> to vector<8x4xf32>
    %cst_66 = arith.constant 3.750000e-01 : f32
    %132 = vector.broadcast %cst_66 : f32 to vector<8x4xf32>
    %133 = arith.mulf %131, %132 : vector<8x4xf32>
    %134 = vector.extract_strided_slice %99 {offsets = [0, 1, 0], sizes = [8, 1, 4], strides = [1, 1, 1]} : vector<8x4x4xf32> to vector<8x1x4xf32>
    %135 = vector.shape_cast %134 : vector<8x1x4xf32> to vector<8x4xf32>
    %cst_67 = arith.constant 6.250000e-01 : f32
    %136 = vector.broadcast %cst_67 : f32 to vector<8x4xf32>
    %137 = arith.mulf %135, %136 : vector<8x4xf32>
    %138 = arith.addf %133, %137 : vector<8x4xf32>
    %139 = arith.truncf %138 : vector<8x4xf32> to vector<8x4xbf16>
    %c0_68 = arith.constant 0 : index
    %c16_69 = arith.constant 16 : index
    %140 = vector.load %arg12[%c0_68, %c16_69] : memref<8x64xbf16, #tpu.memory_space<vmem>>, vector<8x4xbf16>
    tpu.vector_store %arg12[%c0_68, %c16_69], %139 {strides = array<i32>} : memref<8x64xbf16, #tpu.memory_space<vmem>>, vector<8x4xbf16>,
    %141 = vector.extract_strided_slice %99 {offsets = [0, 0, 0], sizes = [8, 1, 4], strides = [1, 1, 1]} : vector<8x4x4xf32> to vector<8x1x4xf32>
    %142 = vector.shape_cast %141 : vector<8x1x4xf32> to vector<8x4xf32>
    %cst_70 = arith.constant 1.250000e-01 : f32
    %143 = vector.broadcast %cst_70 : f32 to vector<8x4xf32>
    %144 = arith.mulf %142, %143 : vector<8x4xf32>
    %145 = vector.extract_strided_slice %99 {offsets = [0, 1, 0], sizes = [8, 1, 4], strides = [1, 1, 1]} : vector<8x4x4xf32> to vector<8x1x4xf32>
    %146 = vector.shape_cast %145 : vector<8x1x4xf32> to vector<8x4xf32>
    %cst_71 = arith.constant 8.750000e-01 : f32
    %147 = vector.broadcast %cst_71 : f32 to vector<8x4xf32>
    %148 = arith.mulf %146, %147 : vector<8x4xf32>
    %149 = arith.addf %144, %148 : vector<8x4xf32>
    %150 = arith.truncf %149 : vector<8x4xf32> to vector<8x4xbf16>
    %c0_72 = arith.constant 0 : index
    %c20 = arith.constant 20 : index
    %151 = vector.load %arg12[%c0_72, %c20] : memref<8x64xbf16, #tpu.memory_space<vmem>>, vector<8x4xbf16>
    tpu.vector_store %arg12[%c0_72, %c20], %150 {strides = array<i32>} : memref<8x64xbf16, #tpu.memory_space<vmem>>, vector<8x4xbf16>,
    %152 = vector.extract_strided_slice %99 {offsets = [0, 1, 0], sizes = [8, 1, 4], strides = [1, 1, 1]} : vector<8x4x4xf32> to vector<8x1x4xf32>
    %153 = vector.shape_cast %152 : vector<8x1x4xf32> to vector<8x4xf32>
    %cst_73 = arith.constant 8.750000e-01 : f32
    %154 = vector.broadcast %cst_73 : f32 to vector<8x4xf32>
    %155 = arith.mulf %153, %154 : vector<8x4xf32>
    %156 = vector.extract_strided_slice %99 {offsets = [0, 2, 0], sizes = [8, 1, 4], strides = [1, 1, 1]} : vector<8x4x4xf32> to vector<8x1x4xf32>
    %157 = vector.shape_cast %156 : vector<8x1x4xf32> to vector<8x4xf32>
    %cst_74 = arith.constant 1.250000e-01 : f32
    %158 = vector.broadcast %cst_74 : f32 to vector<8x4xf32>
    %159 = arith.mulf %157, %158 : vector<8x4xf32>
    %160 = arith.addf %155, %159 : vector<8x4xf32>
    %161 = arith.truncf %160 : vector<8x4xf32> to vector<8x4xbf16>
    %c0_75 = arith.constant 0 : index
    %c24_76 = arith.constant 24 : index
    %162 = vector.load %arg12[%c0_75, %c24_76] : memref<8x64xbf16, #tpu.memory_space<vmem>>, vector<8x4xbf16>
    tpu.vector_store %arg12[%c0_75, %c24_76], %161 {strides = array<i32>} : memref<8x64xbf16, #tpu.memory_space<vmem>>, vector<8x4xbf16>,
    %163 = vector.extract_strided_slice %99 {offsets = [0, 1, 0], sizes = [8, 1, 4], strides = [1, 1, 1]} : vector<8x4x4xf32> to vector<8x1x4xf32>
    %164 = vector.shape_cast %163 : vector<8x1x4xf32> to vector<8x4xf32>
    %cst_77 = arith.constant 6.250000e-01 : f32
    %165 = vector.broadcast %cst_77 : f32 to vector<8x4xf32>
    %166 = arith.mulf %164, %165 : vector<8x4xf32>
    %167 = vector.extract_strided_slice %99 {offsets = [0, 2, 0], sizes = [8, 1, 4], strides = [1, 1, 1]} : vector<8x4x4xf32> to vector<8x1x4xf32>
    %168 = vector.shape_cast %167 : vector<8x1x4xf32> to vector<8x4xf32>
    %cst_78 = arith.constant 3.750000e-01 : f32
    %169 = vector.broadcast %cst_78 : f32 to vector<8x4xf32>
    %170 = arith.mulf %168, %169 : vector<8x4xf32>
    %171 = arith.addf %166, %170 : vector<8x4xf32>
    %172 = arith.truncf %171 : vector<8x4xf32> to vector<8x4xbf16>
    %c0_79 = arith.constant 0 : index
    %c28 = arith.constant 28 : index
    %173 = vector.load %arg12[%c0_79, %c28] : memref<8x64xbf16, #tpu.memory_space<vmem>>, vector<8x4xbf16>
    tpu.vector_store %arg12[%c0_79, %c28], %172 {strides = array<i32>} : memref<8x64xbf16, #tpu.memory_space<vmem>>, vector<8x4xbf16>,
    %174 = vector.extract_strided_slice %99 {offsets = [0, 1, 0], sizes = [8, 1, 4], strides = [1, 1, 1]} : vector<8x4x4xf32> to vector<8x1x4xf32>
    %175 = vector.shape_cast %174 : vector<8x1x4xf32> to vector<8x4xf32>
    %cst_80 = arith.constant 3.750000e-01 : f32
    %176 = vector.broadcast %cst_80 : f32 to vector<8x4xf32>
    %177 = arith.mulf %175, %176 : vector<8x4xf32>
    %178 = vector.extract_strided_slice %99 {offsets = [0, 2, 0], sizes = [8, 1, 4], strides = [1, 1, 1]} : vector<8x4x4xf32> to vector<8x1x4xf32>
    %179 = vector.shape_cast %178 : vector<8x1x4xf32> to vector<8x4xf32>
    %cst_81 = arith.constant 6.250000e-01 : f32
    %180 = vector.broadcast %cst_81 : f32 to vector<8x4xf32>
    %181 = arith.mulf %179, %180 : vector<8x4xf32>
    %182 = arith.addf %177, %181 : vector<8x4xf32>
    %183 = arith.truncf %182 : vector<8x4xf32> to vector<8x4xbf16>
    %c0_82 = arith.constant 0 : index
    %c32_83 = arith.constant 32 : index
    %184 = vector.load %arg12[%c0_82, %c32_83] : memref<8x64xbf16, #tpu.memory_space<vmem>>, vector<8x4xbf16>
    tpu.vector_store %arg12[%c0_82, %c32_83], %183 {strides = array<i32>} : memref<8x64xbf16, #tpu.memory_space<vmem>>, vector<8x4xbf16>,
    %185 = vector.extract_strided_slice %99 {offsets = [0, 1, 0], sizes = [8, 1, 4], strides = [1, 1, 1]} : vector<8x4x4xf32> to vector<8x1x4xf32>
    %186 = vector.shape_cast %185 : vector<8x1x4xf32> to vector<8x4xf32>
    %cst_84 = arith.constant 1.250000e-01 : f32
    %187 = vector.broadcast %cst_84 : f32 to vector<8x4xf32>
    %188 = arith.mulf %186, %187 : vector<8x4xf32>
    %189 = vector.extract_strided_slice %99 {offsets = [0, 2, 0], sizes = [8, 1, 4], strides = [1, 1, 1]} : vector<8x4x4xf32> to vector<8x1x4xf32>
    %190 = vector.shape_cast %189 : vector<8x1x4xf32> to vector<8x4xf32>
    %cst_85 = arith.constant 8.750000e-01 : f32
    %191 = vector.broadcast %cst_85 : f32 to vector<8x4xf32>
    %192 = arith.mulf %190, %191 : vector<8x4xf32>
    %193 = arith.addf %188, %192 : vector<8x4xf32>
    %194 = arith.truncf %193 : vector<8x4xf32> to vector<8x4xbf16>
    %c0_86 = arith.constant 0 : index
    %c36 = arith.constant 36 : index
    %195 = vector.load %arg12[%c0_86, %c36] : memref<8x64xbf16, #tpu.memory_space<vmem>>, vector<8x4xbf16>
    tpu.vector_store %arg12[%c0_86, %c36], %194 {strides = array<i32>} : memref<8x64xbf16, #tpu.memory_space<vmem>>, vector<8x4xbf16>,
    %196 = vector.extract_strided_slice %99 {offsets = [0, 2, 0], sizes = [8, 1, 4], strides = [1, 1, 1]} : vector<8x4x4xf32> to vector<8x1x4xf32>
    %197 = vector.shape_cast %196 : vector<8x1x4xf32> to vector<8x4xf32>
    %cst_87 = arith.constant 8.750000e-01 : f32
    %198 = vector.broadcast %cst_87 : f32 to vector<8x4xf32>
    %199 = arith.mulf %197, %198 : vector<8x4xf32>
    %200 = vector.extract_strided_slice %99 {offsets = [0, 3, 0], sizes = [8, 1, 4], strides = [1, 1, 1]} : vector<8x4x4xf32> to vector<8x1x4xf32>
    %201 = vector.shape_cast %200 : vector<8x1x4xf32> to vector<8x4xf32>
    %cst_88 = arith.constant 1.250000e-01 : f32
    %202 = vector.broadcast %cst_88 : f32 to vector<8x4xf32>
    %203 = arith.mulf %201, %202 : vector<8x4xf32>
    %204 = arith.addf %199, %203 : vector<8x4xf32>
    %205 = arith.truncf %204 : vector<8x4xf32> to vector<8x4xbf16>
    %c0_89 = arith.constant 0 : index
    %c40_90 = arith.constant 40 : index
    %206 = vector.load %arg12[%c0_89, %c40_90] : memref<8x64xbf16, #tpu.memory_space<vmem>>, vector<8x4xbf16>
    tpu.vector_store %arg12[%c0_89, %c40_90], %205 {strides = array<i32>} : memref<8x64xbf16, #tpu.memory_space<vmem>>, vector<8x4xbf16>,
    %207 = vector.extract_strided_slice %99 {offsets = [0, 2, 0], sizes = [8, 1, 4], strides = [1, 1, 1]} : vector<8x4x4xf32> to vector<8x1x4xf32>
    %208 = vector.shape_cast %207 : vector<8x1x4xf32> to vector<8x4xf32>
    %cst_91 = arith.constant 6.250000e-01 : f32
    %209 = vector.broadcast %cst_91 : f32 to vector<8x4xf32>
    %210 = arith.mulf %208, %209 : vector<8x4xf32>
    %211 = vector.extract_strided_slice %99 {offsets = [0, 3, 0], sizes = [8, 1, 4], strides = [1, 1, 1]} : vector<8x4x4xf32> to vector<8x1x4xf32>
    %212 = vector.shape_cast %211 : vector<8x1x4xf32> to vector<8x4xf32>
    %cst_92 = arith.constant 3.750000e-01 : f32
    %213 = vector.broadcast %cst_92 : f32 to vector<8x4xf32>
    %214 = arith.mulf %212, %213 : vector<8x4xf32>
    %215 = arith.addf %210, %214 : vector<8x4xf32>
    %216 = arith.truncf %215 : vector<8x4xf32> to vector<8x4xbf16>
    %c0_93 = arith.constant 0 : index
    %c44 = arith.constant 44 : index
    %217 = vector.load %arg12[%c0_93, %c44] : memref<8x64xbf16, #tpu.memory_space<vmem>>, vector<8x4xbf16>
    tpu.vector_store %arg12[%c0_93, %c44], %216 {strides = array<i32>} : memref<8x64xbf16, #tpu.memory_space<vmem>>, vector<8x4xbf16>,
    %218 = vector.extract_strided_slice %99 {offsets = [0, 2, 0], sizes = [8, 1, 4], strides = [1, 1, 1]} : vector<8x4x4xf32> to vector<8x1x4xf32>
    %219 = vector.shape_cast %218 : vector<8x1x4xf32> to vector<8x4xf32>
    %cst_94 = arith.constant 3.750000e-01 : f32
    %220 = vector.broadcast %cst_94 : f32 to vector<8x4xf32>
    %221 = arith.mulf %219, %220 : vector<8x4xf32>
    %222 = vector.extract_strided_slice %99 {offsets = [0, 3, 0], sizes = [8, 1, 4], strides = [1, 1, 1]} : vector<8x4x4xf32> to vector<8x1x4xf32>
    %223 = vector.shape_cast %222 : vector<8x1x4xf32> to vector<8x4xf32>
    %cst_95 = arith.constant 6.250000e-01 : f32
    %224 = vector.broadcast %cst_95 : f32 to vector<8x4xf32>
    %225 = arith.mulf %223, %224 : vector<8x4xf32>
    %226 = arith.addf %221, %225 : vector<8x4xf32>
    %227 = arith.truncf %226 : vector<8x4xf32> to vector<8x4xbf16>
    %c0_96 = arith.constant 0 : index
    %c48_97 = arith.constant 48 : index
    %228 = vector.load %arg12[%c0_96, %c48_97] : memref<8x64xbf16, #tpu.memory_space<vmem>>, vector<8x4xbf16>
    tpu.vector_store %arg12[%c0_96, %c48_97], %227 {strides = array<i32>} : memref<8x64xbf16, #tpu.memory_space<vmem>>, vector<8x4xbf16>,
    %229 = vector.extract_strided_slice %99 {offsets = [0, 2, 0], sizes = [8, 1, 4], strides = [1, 1, 1]} : vector<8x4x4xf32> to vector<8x1x4xf32>
    %230 = vector.shape_cast %229 : vector<8x1x4xf32> to vector<8x4xf32>
    %cst_98 = arith.constant 1.250000e-01 : f32
    %231 = vector.broadcast %cst_98 : f32 to vector<8x4xf32>
    %232 = arith.mulf %230, %231 : vector<8x4xf32>
    %233 = vector.extract_strided_slice %99 {offsets = [0, 3, 0], sizes = [8, 1, 4], strides = [1, 1, 1]} : vector<8x4x4xf32> to vector<8x1x4xf32>
    %234 = vector.shape_cast %233 : vector<8x1x4xf32> to vector<8x4xf32>
    %cst_99 = arith.constant 8.750000e-01 : f32
    %235 = vector.broadcast %cst_99 : f32 to vector<8x4xf32>
    %236 = arith.mulf %234, %235 : vector<8x4xf32>
    %237 = arith.addf %232, %236 : vector<8x4xf32>
    %238 = arith.truncf %237 : vector<8x4xf32> to vector<8x4xbf16>
    %c0_100 = arith.constant 0 : index
    %c52 = arith.constant 52 : index
    %239 = vector.load %arg12[%c0_100, %c52] : memref<8x64xbf16, #tpu.memory_space<vmem>>, vector<8x4xbf16>
    tpu.vector_store %arg12[%c0_100, %c52], %238 {strides = array<i32>} : memref<8x64xbf16, #tpu.memory_space<vmem>>, vector<8x4xbf16>,
    %240 = vector.extract_strided_slice %99 {offsets = [0, 3, 0], sizes = [8, 1, 4], strides = [1, 1, 1]} : vector<8x4x4xf32> to vector<8x1x4xf32>
    %241 = vector.shape_cast %240 : vector<8x1x4xf32> to vector<8x4xf32>
    %cst_101 = arith.constant 8.750000e-01 : f32
    %242 = vector.broadcast %cst_101 : f32 to vector<8x4xf32>
    %243 = arith.mulf %241, %242 : vector<8x4xf32>
    %244 = vector.extract_strided_slice %99 {offsets = [0, 3, 0], sizes = [8, 1, 4], strides = [1, 1, 1]} : vector<8x4x4xf32> to vector<8x1x4xf32>
    %245 = vector.shape_cast %244 : vector<8x1x4xf32> to vector<8x4xf32>
    %cst_102 = arith.constant 1.250000e-01 : f32
    %246 = vector.broadcast %cst_102 : f32 to vector<8x4xf32>
    %247 = arith.mulf %245, %246 : vector<8x4xf32>
    %248 = arith.addf %243, %247 : vector<8x4xf32>
    %249 = arith.truncf %248 : vector<8x4xf32> to vector<8x4xbf16>
    %c0_103 = arith.constant 0 : index
    %c56_104 = arith.constant 56 : index
    %250 = vector.load %arg12[%c0_103, %c56_104] : memref<8x64xbf16, #tpu.memory_space<vmem>>, vector<8x4xbf16>
    tpu.vector_store %arg12[%c0_103, %c56_104], %249 {strides = array<i32>} : memref<8x64xbf16, #tpu.memory_space<vmem>>, vector<8x4xbf16>,
    %251 = vector.extract_strided_slice %99 {offsets = [0, 3, 0], sizes = [8, 1, 4], strides = [1, 1, 1]} : vector<8x4x4xf32> to vector<8x1x4xf32>
    %252 = vector.shape_cast %251 : vector<8x1x4xf32> to vector<8x4xf32>
    %cst_105 = arith.constant 6.250000e-01 : f32
    %253 = vector.broadcast %cst_105 : f32 to vector<8x4xf32>
    %254 = arith.mulf %252, %253 : vector<8x4xf32>
    %255 = vector.extract_strided_slice %99 {offsets = [0, 3, 0], sizes = [8, 1, 4], strides = [1, 1, 1]} : vector<8x4x4xf32> to vector<8x1x4xf32>
    %256 = vector.shape_cast %255 : vector<8x1x4xf32> to vector<8x4xf32>
    %cst_106 = arith.constant 3.750000e-01 : f32
    %257 = vector.broadcast %cst_106 : f32 to vector<8x4xf32>
    %258 = arith.mulf %256, %257 : vector<8x4xf32>
    %259 = arith.addf %254, %258 : vector<8x4xf32>
    %260 = arith.truncf %259 : vector<8x4xf32> to vector<8x4xbf16>
    %c0_107 = arith.constant 0 : index
    %c60 = arith.constant 60 : index
    %261 = vector.load %arg12[%c0_107, %c60] : memref<8x64xbf16, #tpu.memory_space<vmem>>, vector<8x4xbf16>
    tpu.vector_store %arg12[%c0_107, %c60], %260 {strides = array<i32>} : memref<8x64xbf16, #tpu.memory_space<vmem>>, vector<8x4xbf16>,
    %c0_108 = arith.constant 0 : index
    %c0_109 = arith.constant 0 : index
    %262 = vector.load %arg8[%c0_108, %c0_109] : memref<16x4xbf16, #tpu.memory_space<vmem>>, vector<16x4xbf16>
    %c0_110 = arith.constant 0 : index
    %c0_111 = arith.constant 0 : index
    %263 = vector.load %arg12[%c0_110, %c0_111] : memref<8x64xbf16, #tpu.memory_space<vmem>>, vector<4x64xbf16>
    %cst_112 = arith.constant dense<0.000000e+00> : vector<16x64xf32>
    %264 = tpu.matmul %262, %263, %cst_112 {dimension_numbers = #tpu.dot_dimension_numbers<[1], [0], [0], [1], [0, 0, 1, 1], [], []>} : vector<16x4xbf16>, vector<4x64xbf16>, vector<16x64xf32> -> vector<16x64xf32>
    %c0_113 = arith.constant 0 : index
    %c0_114 = arith.constant 0 : index
    %265 = vector.load %arg9[%c0_113, %c0_114] : memref<32x64xf32, #tpu.memory_space<vmem>>, vector<16x64xf32>
    tpu.vector_store %arg9[%c0_113, %c0_114], %264 {strides = array<i32>} : memref<32x64xf32, #tpu.memory_space<vmem>>, vector<16x64xf32>,
    %c4_115 = arith.constant 4 : index
    %c0_116 = arith.constant 0 : index
    %266 = vector.load %arg12[%c4_115, %c0_116] : memref<8x64xbf16, #tpu.memory_space<vmem>>, vector<4x64xbf16>
    %cst_117 = arith.constant dense<0.000000e+00> : vector<16x64xf32>
    %267 = tpu.matmul %262, %266, %cst_117 {dimension_numbers = #tpu.dot_dimension_numbers<[1], [0], [0], [1], [0, 0, 1, 1], [], []>} : vector<16x4xbf16>, vector<4x64xbf16>, vector<16x64xf32> -> vector<16x64xf32>
    %c16_118 = arith.constant 16 : index
    %c0_119 = arith.constant 0 : index
    %268 = vector.load %arg9[%c16_118, %c0_119] : memref<32x64xf32, #tpu.memory_space<vmem>>, vector<16x64xf32>
    tpu.vector_store %arg9[%c16_118, %c0_119], %267 {strides = array<i32>} : memref<32x64xf32, #tpu.memory_space<vmem>>, vector<16x64xf32>,
    return
  }
}

</mosaic_0001>

<llo_original>
// kernel: tpu_custom_call.1
$region0: #{tpu_custom_call.1}
  #allocation0 [shape = 'u32[]', space=smem, size = 0x4, offset = 0x4, fixed_abs, tag = 'smem constant byte address 0x4 - core index']
  #allocation1 [shape = 'u32[144,128]{1,0:T(1,128)}', space=vmem, size = 0x12000, scoped, tag = 'internal scratch']
  #allocation2 [shape = 'bf16[72,72]{1,0:T(8,128)(2,1)}', space=vmem, size = 0x4800, scoped, tag = 'scratch operand']
  #allocation3 [shape = 'bf16[32,72]{1,0:T(8,128)(2,1)}', space=vmem, size = 0x2000, scoped, tag = 'scratch operand']
  #allocation4 [shape = 'bf16[8,64]{1,0:T(8,128)(2,1)}', space=vmem, size = 0x800, scoped, tag = 'scratch operand']
  %s0 = inlined_call_operand.vmem [shape: bf16[2,8,8,8], index: 0, kind: input, shape index: {}]
  %s1 = inlined_call_operand.vmem [shape: bf16[72,8], index: 1, kind: input, shape index: {}]
  %s2 = inlined_call_operand.vmem [shape: f32[1,8], index: 2, kind: input, shape index: {}]
  %s3 = inlined_call_operand.vmem [shape: f32[1,8], index: 3, kind: input, shape index: {}]
  %s4 = inlined_call_operand.vmem [shape: f32[1,8], index: 4, kind: input, shape index: {}]
  %s5 = inlined_call_operand.vmem [shape: bf16[72,4], index: 5, kind: input, shape index: {}]
  %s6 = inlined_call_operand.vmem [shape: f32[1,4], index: 6, kind: input, shape index: {}]
  %s7 = inlined_call_operand.vmem [shape: f32[72,1], index: 7, kind: input, shape index: {}]
  %s8 = inlined_call_operand.vmem [shape: bf16[16,4], index: 8, kind: input, shape index: {}]
  %s9 = inlined_call_operand.hbm [shape: f32[32,64], index: 9, kind: output, shape index: {}]
  %s10 = sld [smem:[#allocation0]]
  $region46: #{tpu_custom_call.1} parent=0
    _
  %s12 = ssub.s32 1, %s10
  %s13 = scalar_select 0, %s12, %s10
  $region1: #{tpu_custom_call.1} parent=0
    #allocation5 [shape = 'u8[16384]{0}', space=vmem, size = 0x4000, scoped, tag = 'output window, operand 0, single buffered']
    #allocation6 [shape = 's32[1]{0}', space=sflag, size = 0x4, scoped, tag = 'scoped memory for tpu_custom_call.1']
    %14 = vsyncpa [#allocation6], 0
    // Predicated region
    $region2: #{tpu_custom_call.1} parent=1 // pred_check
      _
    $region3: #{tpu_custom_call.1} parent=1 // pred_check_branch
      %16 = sbr.rel (0) target = $region5
    $region4: #{tpu_custom_call.1} parent=1 // pred_region
      _
    $region5: #{tpu_custom_call.1} parent=1 // pred_fallthru
      _
    // Predicated region
    $region6: #{tpu_custom_call.1} parent=1 // pred_check
      _
    $region7: #{tpu_custom_call.1} parent=1 // pred_check_branch
      %18 = sbr.rel (0) target = $region9
    $region8: #{tpu_custom_call.1} parent=1 // pred_region
      _
    $region9: #{tpu_custom_call.1} parent=1 // pred_fallthru
      _
    // Predicated region
    $region10: #{tpu_custom_call.1} parent=1 // pred_check
      _
    $region11: #{tpu_custom_call.1} parent=1 // pred_check_branch
      %20 = sbr.rel (0) target = $region13
    $region12: #{tpu_custom_call.1} parent=1 // pred_region
      _
    $region13: #{tpu_custom_call.1} parent=1 // pred_fallthru
      _
    // Predicated region
    $region14: #{tpu_custom_call.1} parent=1 // pred_check
      _
    $region15: #{tpu_custom_call.1} parent=1 // pred_check_branch
      %22 = sbr.rel (0) target = $region17
    $region16: #{tpu_custom_call.1} parent=1 // pred_region
      _
    $region17: #{tpu_custom_call.1} parent=1 // pred_fallthru
      _
    // Predicated region
    $region18: #{tpu_custom_call.1} parent=1 // pred_check
      _
    $region19: #{tpu_custom_call.1} parent=1 // pred_check_branch
      %24 = sbr.rel (0) target = $region21
    $region20: #{tpu_custom_call.1} parent=1 // pred_region
      _
    $region21: #{tpu_custom_call.1} parent=1 // pred_fallthru
      _
    // Predicated region
    $region22: #{tpu_custom_call.1} parent=1 // pred_check
      _
    $region23: #{tpu_custom_call.1} parent=1 // pred_check_branch
      %26 = sbr.rel (0) target = $region25
    $region24: #{tpu_custom_call.1} parent=1 // pred_region
      _
    $region25: #{tpu_custom_call.1} parent=1 // pred_fallthru
      _
    // Predicated region
    $region26: #{tpu_custom_call.1} parent=1 // pred_check
      _
    $region27: #{tpu_custom_call.1} parent=1 // pred_check_branch
      %28 = sbr.rel (0) target = $region29
    $region28: #{tpu_custom_call.1} parent=1 // pred_region
      _
    $region29: #{tpu_custom_call.1} parent=1 // pred_fallthru
      _
    // Predicated region
    $region30: #{tpu_custom_call.1} parent=1 // pred_check
      _
    $region31: #{tpu_custom_call.1} parent=1 // pred_check_branch
      %30 = sbr.rel (0) target = $region33
    $region32: #{tpu_custom_call.1} parent=1 // pred_region
      _
    $region33: #{tpu_custom_call.1} parent=1 // pred_fallthru
      _
    // Predicated region
    $region34: #{tpu_custom_call.1} parent=1 // pred_check
      _
    $region35: #{tpu_custom_call.1} parent=1 // pred_check_branch
      %32 = sbr.rel (0) target = $region37
    $region36: #{tpu_custom_call.1} parent=1 // pred_region
      _
    $region37: #{tpu_custom_call.1} parent=1 // pred_fallthru
      _
    %v34 = vld [vmem:[%s0] sm:$0xf]
    %v35 = vld [vmem:[%s0 + $0x4] sm:$0xf]
    %v36 = vld [vmem:[%s0 + $0x8] sm:$0xf]
    %v37 = vld [vmem:[%s0 + $0xc] sm:$0xf]
    %v38 = vld [vmem:[%s0 + $0x10] sm:$0xf]
    %v39 = vld [vmem:[%s0 + $0x14] sm:$0xf]
    %v40 = vld [vmem:[%s0 + $0x18] sm:$0xf]
    %v41 = vld [vmem:[%s0 + $0x1c] sm:$0xf]
    %v42 = vld [vmem:[%s0 + $0x20] sm:$0xf]
    %v43 = vld [vmem:[%s0 + $0x24] sm:$0xf]
    %v44 = vld [vmem:[%s0 + $0x28] sm:$0xf]
    %v45 = vld [vmem:[%s0 + $0x2c] sm:$0xf]
    %v46 = vld [vmem:[%s0 + $0x30] sm:$0xf]
    %v47 = vld [vmem:[%s0 + $0x34] sm:$0xf]
    %v48 = vld [vmem:[%s0 + $0x38] sm:$0xf]
    %v49 = vld [vmem:[%s0 + $0x3c] sm:$0xf]
    %v63 = vunpack.c.l.s4 1966171168
    %v64 = vunpack.c.0.s8 %v63
    %v65 = vlaneseq
    %v66 = vshrl.u32 %v65, 7
    %v67 = vsub.s32 %v64, %v66
    %v68 = vrot.slane %v34, %v67
    %v69 = vcombine.high %v68, %v68
    %v71 = vunpack.c.l.s4 1966171168
    %v72 = vunpack.c.0.s8 %v71
    %v73 = vlaneseq
    %v74 = vshrl.u32 %v73, 7
    %v75 = vsub.s32 %v72, %v74
    %v76 = vrot.slane %v68, %v75
    %v78 = vunpack.c.l.s4 1966171168
    %v79 = vunpack.c.0.s8 %v78
    %v80 = vlaneseq
    %v81 = vshrl.u32 %v80, 7
    %v82 = vsub.s32 %v79, %v81
    %v83 = vrot.slane %v69, %v82
    %v84 = vcombine.high %v76, %v76
    %v86 = vunpack.c.l.s4 1966171168
    %v87 = vunpack.c.0.s8 %v86
    %v88 = vlaneseq
    %v89 = vshrl.u32 %v88, 7
    %v90 = vsub.s32 %v87, %v89
    %v91 = vrot.slane %v35, %v90
    %v92 = vcombine.high %v91, %v91
    %v94 = vunpack.c.l.s4 1966171168
    %v95 = vunpack.c.0.s8 %v94
    %v96 = vlaneseq
    %v97 = vshrl.u32 %v96, 7
    %v98 = vsub.s32 %v95, %v97
    %v99 = vrot.slane %v91, %v98
    %v101 = vunpack.c.l.s4 1966171168
    %v102 = vunpack.c.0.s8 %v101
    %v103 = vlaneseq
    %v104 = vshrl.u32 %v103, 7
    %v105 = vsub.s32 %v102, %v104
    %v106 = vrot.slane %v92, %v105
    %v107 = vcombine.high %v99, %v99
    %v109 = vunpack.c.l.s4 1966171168
    %v110 = vunpack.c.0.s8 %v109
    %v111 = vlaneseq
    %v112 = vshrl.u32 %v111, 7
    %v113 = vsub.s32 %v110, %v112
    %v114 = vrot.slane %v36, %v113
    %v115 = vcombine.high %v114, %v114
    %v117 = vunpack.c.l.s4 1966171168
    %v118 = vunpack.c.0.s8 %v117
    %v119 = vlaneseq
    %v120 = vshrl.u32 %v119, 7
    %v121 = vsub.s32 %v118, %v120
    %v122 = vrot.slane %v114, %v121
    %v124 = vunpack.c.l.s4 1966171168
    %v125 = vunpack.c.0.s8 %v124
    %v126 = vlaneseq
    %v127 = vshrl.u32 %v126, 7
    %v128 = vsub.s32 %v125, %v127
    %v129 = vrot.slane %v115, %v128
    %v130 = vcombine.high %v122, %v122
    %v132 = vunpack.c.l.s4 1966171168
    %v133 = vunpack.c.0.s8 %v132
    %v134 = vlaneseq
    %v135 = vshrl.u32 %v134, 7
    %v136 = vsub.s32 %v133, %v135
    %v137 = vrot.slane %v37, %v136
    %v138 = vcombine.high %v137, %v137
    %v140 = vunpack.c.l.s4 1966171168
    %v141 = vunpack.c.0.s8 %v140
    %v142 = vlaneseq
    %v143 = vshrl.u32 %v142, 7
    %v144 = vsub.s32 %v141, %v143
    %v145 = vrot.slane %v137, %v144
    %v147 = vunpack.c.l.s4 1966171168
    %v148 = vunpack.c.0.s8 %v147
    %v149 = vlaneseq
    %v150 = vshrl.u32 %v149, 7
    %v151 = vsub.s32 %v148, %v150
    %v152 = vrot.slane %v138, %v151
    %v153 = vcombine.high %v145, %v145
    %v155 = vunpack.c.l.s4 1966171168
    %v156 = vunpack.c.0.s8 %v155
    %v157 = vlaneseq
    %v158 = vshrl.u32 %v157, 7
    %v159 = vsub.s32 %v156, %v158
    %v160 = vrot.slane %v38, %v159
    %v161 = vcombine.high %v160, %v160
    %v163 = vunpack.c.l.s4 1966171168
    %v164 = vunpack.c.0.s8 %v163
    %v165 = vlaneseq
    %v166 = vshrl.u32 %v165, 7
    %v167 = vsub.s32 %v164, %v166
    %v168 = vrot.slane %v160, %v167
    %v170 = vunpack.c.l.s4 1966171168
    %v171 = vunpack.c.0.s8 %v170
    %v172 = vlaneseq
    %v173 = vshrl.u32 %v172, 7
    %v174 = vsub.s32 %v171, %v173
    %v175 = vrot.slane %v161, %v174
    %v176 = vcombine.high %v168, %v168
    %v178 = vunpack.c.l.s4 1966171168
    %v179 = vunpack.c.0.s8 %v178
    %v180 = vlaneseq
    %v181 = vshrl.u32 %v180, 7
    %v182 = vsub.s32 %v179, %v181
    %v183 = vrot.slane %v39, %v182
    %v184 = vcombine.high %v183, %v183
    %v186 = vunpack.c.l.s4 1966171168
    %v187 = vunpack.c.0.s8 %v186
    %v188 = vlaneseq
    %v189 = vshrl.u32 %v188, 7
    %v190 = vsub.s32 %v187, %v189
    %v191 = vrot.slane %v183, %v190
    %v193 = vunpack.c.l.s4 1966171168
    %v194 = vunpack.c.0.s8 %v193
    %v195 = vlaneseq
    %v196 = vshrl.u32 %v195, 7
    %v197 = vsub.s32 %v194, %v196
    %v198 = vrot.slane %v184, %v197
    %v199 = vcombine.high %v191, %v191
    %v201 = vunpack.c.l.s4 1966171168
    %v202 = vunpack.c.0.s8 %v201
    %v203 = vlaneseq
    %v204 = vshrl.u32 %v203, 7
    %v205 = vsub.s32 %v202, %v204
    %v206 = vrot.slane %v42, %v205
    %v207 = vcombine.high %v206, %v206
    %v209 = vunpack.c.l.s4 1966171168
    %v210 = vunpack.c.0.s8 %v209
    %v211 = vlaneseq
    %v212 = vshrl.u32 %v211, 7
    %v213 = vsub.s32 %v210, %v212
    %v214 = vrot.slane %v206, %v213
    %v216 = vunpack.c.l.s4 1966171168
    %v217 = vunpack.c.0.s8 %v216
    %v218 = vlaneseq
    %v219 = vshrl.u32 %v218, 7
    %v220 = vsub.s32 %v217, %v219
    %v221 = vrot.slane %v207, %v220
    %v222 = vcombine.high %v214, %v214
    %v224 = vunpack.c.l.s4 1966171168
    %v225 = vunpack.c.0.s8 %v224
    %v226 = vlaneseq
    %v227 = vshrl.u32 %v226, 7
    %v228 = vsub.s32 %v225, %v227
    %v229 = vrot.slane %v43, %v228
    %v230 = vcombine.high %v229, %v229
    %v232 = vunpack.c.l.s4 1966171168
    %v233 = vunpack.c.0.s8 %v232
    %v234 = vlaneseq
    %v235 = vshrl.u32 %v234, 7
    %v236 = vsub.s32 %v233, %v235
    %v237 = vrot.slane %v229, %v236
    %v239 = vunpack.c.l.s4 1966171168
    %v240 = vunpack.c.0.s8 %v239
    %v241 = vlaneseq
    %v242 = vshrl.u32 %v241, 7
    %v243 = vsub.s32 %v240, %v242
    %v244 = vrot.slane %v230, %v243
    %v245 = vcombine.high %v237, %v237
    %v247 = vunpack.c.l.s4 1966171168
    %v248 = vunpack.c.0.s8 %v247
    %v249 = vlaneseq
    %v250 = vshrl.u32 %v249, 7
    %v251 = vsub.s32 %v248, %v250
    %v252 = vrot.slane %v44, %v251
    %v253 = vcombine.high %v252, %v252
    %v255 = vunpack.c.l.s4 1966171168
    %v256 = vunpack.c.0.s8 %v255
    %v257 = vlaneseq
    %v258 = vshrl.u32 %v257, 7
    %v259 = vsub.s32 %v256, %v258
    %v260 = vrot.slane %v252, %v259
    %v262 = vunpack.c.l.s4 1966171168
    %v263 = vunpack.c.0.s8 %v262
    %v264 = vlaneseq
    %v265 = vshrl.u32 %v264, 7
    %v266 = vsub.s32 %v263, %v265
    %v267 = vrot.slane %v253, %v266
    %v268 = vcombine.high %v260, %v260
    %v270 = vunpack.c.l.s4 1966171168
    %v271 = vunpack.c.0.s8 %v270
    %v272 = vlaneseq
    %v273 = vshrl.u32 %v272, 7
    %v274 = vsub.s32 %v271, %v273
    %v275 = vrot.slane %v45, %v274
    %v276 = vcombine.high %v275, %v275
    %v278 = vunpack.c.l.s4 1966171168
    %v279 = vunpack.c.0.s8 %v278
    %v280 = vlaneseq
    %v281 = vshrl.u32 %v280, 7
    %v282 = vsub.s32 %v279, %v281
    %v283 = vrot.slane %v275, %v282
    %v285 = vunpack.c.l.s4 1966171168
    %v286 = vunpack.c.0.s8 %v285
    %v287 = vlaneseq
    %v288 = vshrl.u32 %v287, 7
    %v289 = vsub.s32 %v286, %v288
    %v290 = vrot.slane %v276, %v289
    %v291 = vcombine.high %v283, %v283
    %v293 = vunpack.c.l.s4 1966171168
    %v294 = vunpack.c.0.s8 %v293
    %v295 = vlaneseq
    %v296 = vshrl.u32 %v295, 7
    %v297 = vsub.s32 %v294, %v296
    %v298 = vrot.slane %v46, %v297
    %v299 = vcombine.high %v298, %v298
    %v301 = vunpack.c.l.s4 1966171168
    %v302 = vunpack.c.0.s8 %v301
    %v303 = vlaneseq
    %v304 = vshrl.u32 %v303, 7
    %v305 = vsub.s32 %v302, %v304
    %v306 = vrot.slane %v298, %v305
    %v308 = vunpack.c.l.s4 1966171168
    %v309 = vunpack.c.0.s8 %v308
    %v310 = vlaneseq
    %v311 = vshrl.u32 %v310, 7
    %v312 = vsub.s32 %v309, %v311
    %v313 = vrot.slane %v299, %v312
    %v314 = vcombine.high %v306, %v306
    %v316 = vunpack.c.l.s4 1966171168
    %v317 = vunpack.c.0.s8 %v316
    %v318 = vlaneseq
    %v319 = vshrl.u32 %v318, 7
    %v320 = vsub.s32 %v317, %v319
    %v321 = vrot.slane %v47, %v320
    %v322 = vcombine.high %v321, %v321
    %v324 = vunpack.c.l.s4 1966171168
    %v325 = vunpack.c.0.s8 %v324
    %v326 = vlaneseq
    %v327 = vshrl.u32 %v326, 7
    %v328 = vsub.s32 %v325, %v327
    %v329 = vrot.slane %v321, %v328
    %v331 = vunpack.c.l.s4 1966171168
    %v332 = vunpack.c.0.s8 %v331
    %v333 = vlaneseq
    %v334 = vshrl.u32 %v333, 7
    %v335 = vsub.s32 %v332, %v334
    %v336 = vrot.slane %v322, %v335
    %v337 = vcombine.high %v329, %v329
    %v338 = vcombine.low %v76, %v84
    %v339 = vcombine.low %v83, %v99
    %v341 = vunpack.c.l.s4 1935823168
    %v342 = vunpack.c.0.s8 %v341
    %v343 = vlaneseq
    %v344 = vshrl.u32 %v343, 7
    %v345 = vsub.s32 %v342, %v344
    %v346 = vrot.slane %v338, %v345
    %v348 = vunpack.c.l.s4 1935823168
    %v349 = vunpack.c.0.s8 %v348
    %v350 = vlaneseq
    %v351 = vshrl.u32 %v350, 7
    %v352 = vsub.s32 %v349, %v351
    %v353 = vrot.slane %v339, %v352
    %v354 = vcombine.low %v346, %v353
    %v356 = vunpack.c.l.s4 1935823168
    %v357 = vunpack.c.0.s8 %v356
    %v358 = vlaneseq
    %v359 = vshrl.u32 %v358, 7
    %v360 = vsub.s32 %v357, %v359
    %v361 = vrot.slane %v354, %v360
    %v362 = vcombine.low %v106, %v122
    %v363 = vcombine.low %v107, %v129
    %v365 = vunpack.c.l.s4 1935823168
    %v366 = vunpack.c.0.s8 %v365
    %v367 = vlaneseq
    %v368 = vshrl.u32 %v367, 7
    %v369 = vsub.s32 %v366, %v368
    %v370 = vrot.slane %v362, %v369
    %v372 = vunpack.c.l.s4 1935823168
    %v373 = vunpack.c.0.s8 %v372
    %v374 = vlaneseq
    %v375 = vshrl.u32 %v374, 7
    %v376 = vsub.s32 %v373, %v375
    %v377 = vrot.slane %v363, %v376
    %v378 = vcombine.low %v370, %v377
    %v380 = vunpack.c.l.s4 1935823168
    %v381 = vunpack.c.0.s8 %v380
    %v382 = vlaneseq
    %v383 = vshrl.u32 %v382, 7
    %v384 = vsub.s32 %v381, %v383
    %v385 = vrot.slane %v378, %v384
    %v386 = vcombine.low %v130, %v152
    %v387 = vcombine.low %v145, %v153
    %v389 = vunpack.c.l.s4 1935823168
    %v390 = vunpack.c.0.s8 %v389
    %v391 = vlaneseq
    %v392 = vshrl.u32 %v391, 7
    %v393 = vsub.s32 %v390, %v392
    %v394 = vrot.slane %v386, %v393
    %v396 = vunpack.c.l.s4 1935823168
    %v397 = vunpack.c.0.s8 %v396
    %v398 = vlaneseq
    %v399 = vshrl.u32 %v398, 7
    %v400 = vsub.s32 %v397, %v399
    %v401 = vrot.slane %v387, %v400
    %v402 = vcombine.low %v394, %v401
    %v404 = vunpack.c.l.s4 1935823168
    %v405 = vunpack.c.0.s8 %v404
    %v406 = vlaneseq
    %v407 = vshrl.u32 %v406, 7
    %v408 = vsub.s32 %v405, %v407
    %v409 = vrot.slane %v402, %v408
    %v410 = vcombine.low %v168, %v176
    %v411 = vcombine.low %v175, %v191
    %v413 = vunpack.c.l.s4 1935823168
    %v414 = vunpack.c.0.s8 %v413
    %v415 = vlaneseq
    %v416 = vshrl.u32 %v415, 7
    %v417 = vsub.s32 %v414, %v416
    %v418 = vrot.slane %v410, %v417
    %v420 = vunpack.c.l.s4 1935823168
    %v421 = vunpack.c.0.s8 %v420
    %v422 = vlaneseq
    %v423 = vshrl.u32 %v422, 7
    %v424 = vsub.s32 %v421, %v423
    %v425 = vrot.slane %v411, %v424
    %v426 = vcombine.low %v418, %v425
    %v428 = vunpack.c.l.s4 1935823168
    %v429 = vunpack.c.0.s8 %v428
    %v430 = vlaneseq
    %v431 = vshrl.u32 %v430, 7
    %v432 = vsub.s32 %v429, %v431
    %v433 = vrot.slane %v426, %v432
    %v434 = vcombine.low %v198, %v214
    %v435 = vcombine.low %v199, %v221
    %v437 = vunpack.c.l.s4 1935823168
    %v438 = vunpack.c.0.s8 %v437
    %v439 = vlaneseq
    %v440 = vshrl.u32 %v439, 7
    %v441 = vsub.s32 %v438, %v440
    %v442 = vrot.slane %v434, %v441
    %v444 = vunpack.c.l.s4 1935823168
    %v445 = vunpack.c.0.s8 %v444
    %v446 = vlaneseq
    %v447 = vshrl.u32 %v446, 7
    %v448 = vsub.s32 %v445, %v447
    %v449 = vrot.slane %v435, %v448
    %v450 = vcombine.low %v442, %v449
    %v452 = vunpack.c.l.s4 1935823168
    %v453 = vunpack.c.0.s8 %v452
    %v454 = vlaneseq
    %v455 = vshrl.u32 %v454, 7
    %v456 = vsub.s32 %v453, %v455
    %v457 = vrot.slane %v450, %v456
    %v458 = vcombine.low %v222, %v244
    %v459 = vcombine.low %v237, %v245
    %v461 = vunpack.c.l.s4 1935823168
    %v462 = vunpack.c.0.s8 %v461
    %v463 = vlaneseq
    %v464 = vshrl.u32 %v463, 7
    %v465 = vsub.s32 %v462, %v464
    %v466 = vrot.slane %v458, %v465
    %v468 = vunpack.c.l.s4 1935823168
    %v469 = vunpack.c.0.s8 %v468
    %v470 = vlaneseq
    %v471 = vshrl.u32 %v470, 7
    %v472 = vsub.s32 %v469, %v471
    %v473 = vrot.slane %v459, %v472
    %v474 = vcombine.low %v466, %v473
    %v476 = vunpack.c.l.s4 1935823168
    %v477 = vunpack.c.0.s8 %v476
    %v478 = vlaneseq
    %v479 = vshrl.u32 %v478, 7
    %v480 = vsub.s32 %v477, %v479
    %v481 = vrot.slane %v474, %v480
    %v482 = vcombine.low %v260, %v268
    %v483 = vcombine.low %v267, %v283
    %v485 = vunpack.c.l.s4 1935823168
    %v486 = vunpack.c.0.s8 %v485
    %v487 = vlaneseq
    %v488 = vshrl.u32 %v487, 7
    %v489 = vsub.s32 %v486, %v488
    %v490 = vrot.slane %v482, %v489
    %v492 = vunpack.c.l.s4 1935823168
    %v493 = vunpack.c.0.s8 %v492
    %v494 = vlaneseq
    %v495 = vshrl.u32 %v494, 7
    %v496 = vsub.s32 %v493, %v495
    %v497 = vrot.slane %v483, %v496
    %v498 = vcombine.low %v490, %v497
    %v500 = vunpack.c.l.s4 1935823168
    %v501 = vunpack.c.0.s8 %v500
    %v502 = vlaneseq
    %v503 = vshrl.u32 %v502, 7
    %v504 = vsub.s32 %v501, %v503
    %v505 = vrot.slane %v498, %v504
    %v506 = vcombine.low %v290, %v306
    %v507 = vcombine.low %v291, %v313
    %v509 = vunpack.c.l.s4 1935823168
    %v510 = vunpack.c.0.s8 %v509
    %v511 = vlaneseq
    %v512 = vshrl.u32 %v511, 7
    %v513 = vsub.s32 %v510, %v512
    %v514 = vrot.slane %v506, %v513
    %v516 = vunpack.c.l.s4 1935823168
    %v517 = vunpack.c.0.s8 %v516
    %v518 = vlaneseq
    %v519 = vshrl.u32 %v518, 7
    %v520 = vsub.s32 %v517, %v519
    %v521 = vrot.slane %v507, %v520
    %v522 = vcombine.low %v514, %v521
    %v524 = vunpack.c.l.s4 1935823168
    %v525 = vunpack.c.0.s8 %v524
    %v526 = vlaneseq
    %v527 = vshrl.u32 %v526, 7
    %v528 = vsub.s32 %v525, %v527
    %v529 = vrot.slane %v522, %v528
    %v530 = vcombine.low %v314, %v336
    %v531 = vcombine.low %v329, %v337
    %v533 = vunpack.c.l.s4 1935823168
    %v534 = vunpack.c.0.s8 %v533
    %v535 = vlaneseq
    %v536 = vshrl.u32 %v535, 7
    %v537 = vsub.s32 %v534, %v536
    %v538 = vrot.slane %v530, %v537
    %v540 = vunpack.c.l.s4 1935823168
    %v541 = vunpack.c.0.s8 %v540
    %v542 = vlaneseq
    %v543 = vshrl.u32 %v542, 7
    %v544 = vsub.s32 %v541, %v543
    %v545 = vrot.slane %v531, %v544
    %v546 = vcombine.low %v538, %v545
    %v548 = vunpack.c.l.s4 1935823168
    %v549 = vunpack.c.0.s8 %v548
    %v550 = vlaneseq
    %v551 = vshrl.u32 %v550, 7
    %v552 = vsub.s32 %v549, %v551
    %v553 = vrot.slane %v546, %v552
    %vm563 = vcmask 60416
    %564 = vst.msk [vmem:[#allocation2] sm:$0xf] %vm563, %v361
    %565 = vst.msk [vmem:[#allocation2 + $0x4] sm:$0xf] %vm563, %v385
    %566 = vst.msk [vmem:[#allocation2 + $0x8] sm:$0xf] %vm563, %v409
    %567 = vst.msk [vmem:[#allocation2 + $0xc] sm:$0xf] %vm563, %v433
    %568 = vst.msk [vmem:[#allocation2 + $0x10] sm:$0xf] %vm563, %v457
    %569 = vst.msk [vmem:[#allocation2 + $0x14] sm:$0xf] %vm563, %v481
    %570 = vst.msk [vmem:[#allocation2 + $0x18] sm:$0xf] %vm563, %v505
    %571 = vst.msk [vmem:[#allocation2 + $0x1c] sm:$0xf] %vm563, %v529
    %572 = vst.msk [vmem:[#allocation2 + $0x20] sm:$0xf] %vm563, %v553
    %v573 = vcombine.high %v83, %v83
    %v574 = vcombine.high %v106, %v106
    %v575 = vcombine.high %v129, %v129
    %v576 = vcombine.high %v152, %v152
    %v577 = vcombine.high %v175, %v175
    %v578 = vcombine.high %v198, %v198
    %v579 = vcombine.high %v221, %v221
    %v580 = vcombine.high %v244, %v244
    %v581 = vcombine.high %v267, %v267
    %v582 = vcombine.high %v290, %v290
    %v583 = vcombine.high %v313, %v313
    %v584 = vcombine.high %v336, %v336
    %vm585 = vsmask.f32 256
    %vm586 = vsmask.f32 1284
    %vm587 = vmor %vm585, %vm586
    %vm588 = vsmask.f32 2312
    %vm589 = vmor %vm587, %vm588
    %vm590 = vsmask.f32 3340
    %vm591 = vmor %vm589, %vm590
    %vm592 = vsmask.f32 4368
    %vm593 = vmor %vm591, %vm592
    %vm594 = vsmask.f32 5396
    %vm595 = vmor %vm593, %vm594
    %vm596 = vsmask.f32 6424
    %vm597 = vmor %vm595, %vm596
    %vm598 = vsmask.f32 7452
    %vm599 = vmor %vm597, %vm598
    %v601 = vshrl.u32 %v76, 16
    %v603 = vrot.slane %v601, 7
    %v604 = vrot.slane %v603, 1
    %v606 = vshll.u32 %v83, 16
    %v608 = vsel %vm599, %v604, %v606
    %v609 = vshrl.u32 %v83, 16
    %v611 = vrot.slane %v609, 7
    %v612 = vrot.slane %v611, 1
    %v614 = vshll.u32 %v84, 16
    %v616 = vsel %vm599, %v612, %v614
    %v617 = vshrl.u32 %v84, 16
    %v619 = vrot.slane %v617, 7
    %v620 = vrot.slane %v619, 1
    %v622 = vshll.u32 %v573, 16
    %v624 = vsel %vm599, %v620, %v622
    %v626 = vshrl.u32 %v99, 16
    %v628 = vrot.slane %v626, 7
    %v629 = vrot.slane %v628, 1
    %v631 = vshll.u32 %v106, 16
    %v633 = vsel %vm599, %v629, %v631
    %v634 = vshrl.u32 %v106, 16
    %v636 = vrot.slane %v634, 7
    %v637 = vrot.slane %v636, 1
    %v639 = vshll.u32 %v107, 16
    %v641 = vsel %vm599, %v637, %v639
    %v642 = vshrl.u32 %v107, 16
    %v644 = vrot.slane %v642, 7
    %v645 = vrot.slane %v644, 1
    %v647 = vshll.u32 %v574, 16
    %v649 = vsel %vm599, %v645, %v647
    %v651 = vshrl.u32 %v122, 16
    %v653 = vrot.slane %v651, 7
    %v654 = vrot.slane %v653, 1
    %v656 = vshll.u32 %v129, 16
    %v658 = vsel %vm599, %v654, %v656
    %v659 = vshrl.u32 %v129, 16
    %v661 = vrot.slane %v659, 7
    %v662 = vrot.slane %v661, 1
    %v664 = vshll.u32 %v130, 16
    %v666 = vsel %vm599, %v662, %v664
    %v667 = vshrl.u32 %v130, 16
    %v669 = vrot.slane %v667, 7
    %v670 = vrot.slane %v669, 1
    %v672 = vshll.u32 %v575, 16
    %v674 = vsel %vm599, %v670, %v672
    %v676 = vshrl.u32 %v145, 16
    %v678 = vrot.slane %v676, 7
    %v679 = vrot.slane %v678, 1
    %v681 = vshll.u32 %v152, 16
    %v683 = vsel %vm599, %v679, %v681
    %v684 = vshrl.u32 %v152, 16
    %v686 = vrot.slane %v684, 7
    %v687 = vrot.slane %v686, 1
    %v689 = vshll.u32 %v153, 16
    %v691 = vsel %vm599, %v687, %v689
    %v692 = vshrl.u32 %v153, 16
    %v694 = vrot.slane %v692, 7
    %v695 = vrot.slane %v694, 1
    %v697 = vshll.u32 %v576, 16
    %v699 = vsel %vm599, %v695, %v697
    %v701 = vshrl.u32 %v168, 16
    %v703 = vrot.slane %v701, 7
    %v704 = vrot.slane %v703, 1
    %v706 = vshll.u32 %v175, 16
    %v708 = vsel %vm599, %v704, %v706
    %v709 = vshrl.u32 %v175, 16
    %v711 = vrot.slane %v709, 7
    %v712 = vrot.slane %v711, 1
    %v714 = vshll.u32 %v176, 16
    %v716 = vsel %vm599, %v712, %v714
    %v717 = vshrl.u32 %v176, 16
    %v719 = vrot.slane %v717, 7
    %v720 = vrot.slane %v719, 1
    %v722 = vshll.u32 %v577, 16
    %v724 = vsel %vm599, %v720, %v722
    %v726 = vshrl.u32 %v191, 16
    %v728 = vrot.slane %v726, 7
    %v729 = vrot.slane %v728, 1
    %v731 = vshll.u32 %v198, 16
    %v733 = vsel %vm599, %v729, %v731
    %v734 = vshrl.u32 %v198, 16
    %v736 = vrot.slane %v734, 7
    %v737 = vrot.slane %v736, 1
    %v739 = vshll.u32 %v199, 16
    %v741 = vsel %vm599, %v737, %v739
    %v742 = vshrl.u32 %v199, 16
    %v744 = vrot.slane %v742, 7
    %v745 = vrot.slane %v744, 1
    %v747 = vshll.u32 %v578, 16
    %v749 = vsel %vm599, %v745, %v747
    %v751 = vshrl.u32 %v214, 16
    %v753 = vrot.slane %v751, 7
    %v754 = vrot.slane %v753, 1
    %v756 = vshll.u32 %v221, 16
    %v758 = vsel %vm599, %v754, %v756
    %v759 = vshrl.u32 %v221, 16
    %v761 = vrot.slane %v759, 7
    %v762 = vrot.slane %v761, 1
    %v764 = vshll.u32 %v222, 16
    %v766 = vsel %vm599, %v762, %v764
    %v767 = vshrl.u32 %v222, 16
    %v769 = vrot.slane %v767, 7
    %v770 = vrot.slane %v769, 1
    %v772 = vshll.u32 %v579, 16
    %v774 = vsel %vm599, %v770, %v772
    %v776 = vshrl.u32 %v237, 16
    %v778 = vrot.slane %v776, 7
    %v779 = vrot.slane %v778, 1
    %v781 = vshll.u32 %v244, 16
    %v783 = vsel %vm599, %v779, %v781
    %v784 = vshrl.u32 %v244, 16
    %v786 = vrot.slane %v784, 7
    %v787 = vrot.slane %v786, 1
    %v789 = vshll.u32 %v245, 16
    %v791 = vsel %vm599, %v787, %v789
    %v792 = vshrl.u32 %v245, 16
    %v794 = vrot.slane %v792, 7
    %v795 = vrot.slane %v794, 1
    %v797 = vshll.u32 %v580, 16
    %v799 = vsel %vm599, %v795, %v797
    %v801 = vshrl.u32 %v260, 16
    %v803 = vrot.slane %v801, 7
    %v804 = vrot.slane %v803, 1
    %v806 = vshll.u32 %v267, 16
    %v808 = vsel %vm599, %v804, %v806
    %v809 = vshrl.u32 %v267, 16
    %v811 = vrot.slane %v809, 7
    %v812 = vrot.slane %v811, 1
    %v814 = vshll.u32 %v268, 16
    %v816 = vsel %vm599, %v812, %v814
    %v817 = vshrl.u32 %v268, 16
    %v819 = vrot.slane %v817, 7
    %v820 = vrot.slane %v819, 1
    %v822 = vshll.u32 %v581, 16
    %v824 = vsel %vm599, %v820, %v822
    %v826 = vshrl.u32 %v283, 16
    %v828 = vrot.slane %v826, 7
    %v829 = vrot.slane %v828, 1
    %v831 = vshll.u32 %v290, 16
    %v833 = vsel %vm599, %v829, %v831
    %v834 = vshrl.u32 %v290, 16
    %v836 = vrot.slane %v834, 7
    %v837 = vrot.slane %v836, 1
    %v839 = vshll.u32 %v291, 16
    %v841 = vsel %vm599, %v837, %v839
    %v842 = vshrl.u32 %v291, 16
    %v844 = vrot.slane %v842, 7
    %v845 = vrot.slane %v844, 1
    %v847 = vshll.u32 %v582, 16
    %v849 = vsel %vm599, %v845, %v847
    %v851 = vshrl.u32 %v306, 16
    %v853 = vrot.slane %v851, 7
    %v854 = vrot.slane %v853, 1
    %v856 = vshll.u32 %v313, 16
    %v858 = vsel %vm599, %v854, %v856
    %v859 = vshrl.u32 %v313, 16
    %v861 = vrot.slane %v859, 7
    %v862 = vrot.slane %v861, 1
    %v864 = vshll.u32 %v314, 16
    %v866 = vsel %vm599, %v862, %v864
    %v867 = vshrl.u32 %v314, 16
    %v869 = vrot.slane %v867, 7
    %v870 = vrot.slane %v869, 1
    %v872 = vshll.u32 %v583, 16
    %v874 = vsel %vm599, %v870, %v872
    %v876 = vshrl.u32 %v329, 16
    %v878 = vrot.slane %v876, 7
    %v879 = vrot.slane %v878, 1
    %v881 = vshll.u32 %v336, 16
    %v883 = vsel %vm599, %v879, %v881
    %v884 = vshrl.u32 %v336, 16
    %v886 = vrot.slane %v884, 7
    %v887 = vrot.slane %v886, 1
    %v889 = vshll.u32 %v337, 16
    %v891 = vsel %vm599, %v887, %v889
    %v892 = vshrl.u32 %v337, 16
    %v894 = vrot.slane %v892, 7
    %v895 = vrot.slane %v894, 1
    %v897 = vshll.u32 %v584, 16
    %v899 = vsel %vm599, %v895, %v897
    %v900 = vcombine.low %v608, %v624
    %v901 = vcombine.low %v616, %v633
    %v903 = vunpack.c.l.s4 1935823168
    %v904 = vunpack.c.0.s8 %v903
    %v905 = vlaneseq
    %v906 = vshrl.u32 %v905, 7
    %v907 = vsub.s32 %v904, %v906
    %v908 = vrot.slane %v900, %v907
    %v910 = vunpack.c.l.s4 1935823168
    %v911 = vunpack.c.0.s8 %v910
    %v912 = vlaneseq
    %v913 = vshrl.u32 %v912, 7
    %v914 = vsub.s32 %v911, %v913
    %v915 = vrot.slane %v901, %v914
    %v916 = vcombine.low %v908, %v915
    %v918 = vunpack.c.l.s4 1935823168
    %v919 = vunpack.c.0.s8 %v918
    %v920 = vlaneseq
    %v921 = vshrl.u32 %v920, 7
    %v922 = vsub.s32 %v919, %v921
    %v923 = vrot.slane %v916, %v922
    %v924 = vcombine.low %v641, %v658
    %v925 = vcombine.low %v649, %v666
    %v927 = vunpack.c.l.s4 1935823168
    %v928 = vunpack.c.0.s8 %v927
    %v929 = vlaneseq
    %v930 = vshrl.u32 %v929, 7
    %v931 = vsub.s32 %v928, %v930
    %v932 = vrot.slane %v924, %v931
    %v934 = vunpack.c.l.s4 1935823168
    %v935 = vunpack.c.0.s8 %v934
    %v936 = vlaneseq
    %v937 = vshrl.u32 %v936, 7
    %v938 = vsub.s32 %v935, %v937
    %v939 = vrot.slane %v925, %v938
    %v940 = vcombine.low %v932, %v939
    %v942 = vunpack.c.l.s4 1935823168
    %v943 = vunpack.c.0.s8 %v942
    %v944 = vlaneseq
    %v945 = vshrl.u32 %v944, 7
    %v946 = vsub.s32 %v943, %v945
    %v947 = vrot.slane %v940, %v946
    %v948 = vcombine.low %v674, %v691
    %v949 = vcombine.low %v683, %v699
    %v951 = vunpack.c.l.s4 1935823168
    %v952 = vunpack.c.0.s8 %v951
    %v953 = vlaneseq
    %v954 = vshrl.u32 %v953, 7
    %v955 = vsub.s32 %v952, %v954
    %v956 = vrot.slane %v948, %v955
    %v958 = vunpack.c.l.s4 1935823168
    %v959 = vunpack.c.0.s8 %v958
    %v960 = vlaneseq
    %v961 = vshrl.u32 %v960, 7
    %v962 = vsub.s32 %v959, %v961
    %v963 = vrot.slane %v949, %v962
    %v964 = vcombine.low %v956, %v963
    %v966 = vunpack.c.l.s4 1935823168
    %v967 = vunpack.c.0.s8 %v966
    %v968 = vlaneseq
    %v969 = vshrl.u32 %v968, 7
    %v970 = vsub.s32 %v967, %v969
    %v971 = vrot.slane %v964, %v970
    %v972 = vcombine.low %v708, %v724
    %v973 = vcombine.low %v716, %v733
    %v975 = vunpack.c.l.s4 1935823168
    %v976 = vunpack.c.0.s8 %v975
    %v977 = vlaneseq
    %v978 = vshrl.u32 %v977, 7
    %v979 = vsub.s32 %v976, %v978
    %v980 = vrot.slane %v972, %v979
    %v982 = vunpack.c.l.s4 1935823168
    %v983 = vunpack.c.0.s8 %v982
    %v984 = vlaneseq
    %v985 = vshrl.u32 %v984, 7
    %v986 = vsub.s32 %v983, %v985
    %v987 = vrot.slane %v973, %v986
    %v988 = vcombine.low %v980, %v987
    %v990 = vunpack.c.l.s4 1935823168
    %v991 = vunpack.c.0.s8 %v990
    %v992 = vlaneseq
    %v993 = vshrl.u32 %v992, 7
    %v994 = vsub.s32 %v991, %v993
    %v995 = vrot.slane %v988, %v994
    %v996 = vcombine.low %v741, %v758
    %v997 = vcombine.low %v749, %v766
    %v999 = vunpack.c.l.s4 1935823168
    %v1000 = vunpack.c.0.s8 %v999
    %v1001 = vlaneseq
    %v1002 = vshrl.u32 %v1001, 7
    %v1003 = vsub.s32 %v1000, %v1002
    %v1004 = vrot.slane %v996, %v1003
    %v1006 = vunpack.c.l.s4 1935823168
    %v1007 = vunpack.c.0.s8 %v1006
    %v1008 = vlaneseq
    %v1009 = vshrl.u32 %v1008, 7
    %v1010 = vsub.s32 %v1007, %v1009
    %v1011 = vrot.slane %v997, %v1010
    %v1012 = vcombine.low %v1004, %v1011
    %v1014 = vunpack.c.l.s4 1935823168
    %v1015 = vunpack.c.0.s8 %v1014
    %v1016 = vlaneseq
    %v1017 = vshrl.u32 %v1016, 7
    %v1018 = vsub.s32 %v1015, %v1017
    %v1019 = vrot.slane %v1012, %v1018
    %v1020 = vcombine.low %v774, %v791
    %v1021 = vcombine.low %v783, %v799
    %v1023 = vunpack.c.l.s4 1935823168
    %v1024 = vunpack.c.0.s8 %v1023
    %v1025 = vlaneseq
    %v1026 = vshrl.u32 %v1025, 7
    %v1027 = vsub.s32 %v1024, %v1026
    %v1028 = vrot.slane %v1020, %v1027
    %v1030 = vunpack.c.l.s4 1935823168
    %v1031 = vunpack.c.0.s8 %v1030
    %v1032 = vlaneseq
    %v1033 = vshrl.u32 %v1032, 7
    %v1034 = vsub.s32 %v1031, %v1033
    %v1035 = vrot.slane %v1021, %v1034
    %v1036 = vcombine.low %v1028, %v1035
    %v1038 = vunpack.c.l.s4 1935823168
    %v1039 = vunpack.c.0.s8 %v1038
    %v1040 = vlaneseq
    %v1041 = vshrl.u32 %v1040, 7
    %v1042 = vsub.s32 %v1039, %v1041
    %v1043 = vrot.slane %v1036, %v1042
    %v1044 = vcombine.low %v808, %v824
    %v1045 = vcombine.low %v816, %v833
    %v1047 = vunpack.c.l.s4 1935823168
    %v1048 = vunpack.c.0.s8 %v1047
    %v1049 = vlaneseq
    %v1050 = vshrl.u32 %v1049, 7
    %v1051 = vsub.s32 %v1048, %v1050
    %v1052 = vrot.slane %v1044, %v1051
    %v1054 = vunpack.c.l.s4 1935823168
    %v1055 = vunpack.c.0.s8 %v1054
    %v1056 = vlaneseq
    %v1057 = vshrl.u32 %v1056, 7
    %v1058 = vsub.s32 %v1055, %v1057
    %v1059 = vrot.slane %v1045, %v1058
    %v1060 = vcombine.low %v1052, %v1059
    %v1062 = vunpack.c.l.s4 1935823168
    %v1063 = vunpack.c.0.s8 %v1062
    %v1064 = vlaneseq
    %v1065 = vshrl.u32 %v1064, 7
    %v1066 = vsub.s32 %v1063, %v1065
    %v1067 = vrot.slane %v1060, %v1066
    %v1068 = vcombine.low %v841, %v858
    %v1069 = vcombine.low %v849, %v866
    %v1071 = vunpack.c.l.s4 1935823168
    %v1072 = vunpack.c.0.s8 %v1071
    %v1073 = vlaneseq
    %v1074 = vshrl.u32 %v1073, 7
    %v1075 = vsub.s32 %v1072, %v1074
    %v1076 = vrot.slane %v1068, %v1075
    %v1078 = vunpack.c.l.s4 1935823168
    %v1079 = vunpack.c.0.s8 %v1078
    %v1080 = vlaneseq
    %v1081 = vshrl.u32 %v1080, 7
    %v1082 = vsub.s32 %v1079, %v1081
    %v1083 = vrot.slane %v1069, %v1082
    %v1084 = vcombine.low %v1076, %v1083
    %v1086 = vunpack.c.l.s4 1935823168
    %v1087 = vunpack.c.0.s8 %v1086
    %v1088 = vlaneseq
    %v1089 = vshrl.u32 %v1088, 7
    %v1090 = vsub.s32 %v1087, %v1089
    %v1091 = vrot.slane %v1084, %v1090
    %v1092 = vcombine.low %v874, %v891
    %v1093 = vcombine.low %v883, %v899
    %v1095 = vunpack.c.l.s4 1935823168
    %v1096 = vunpack.c.0.s8 %v1095
    %v1097 = vlaneseq
    %v1098 = vshrl.u32 %v1097, 7
    %v1099 = vsub.s32 %v1096, %v1098
    %v1100 = vrot.slane %v1092, %v1099
    %v1102 = vunpack.c.l.s4 1935823168
    %v1103 = vunpack.c.0.s8 %v1102
    %v1104 = vlaneseq
    %v1105 = vshrl.u32 %v1104, 7
    %v1106 = vsub.s32 %v1103, %v1105
    %v1107 = vrot.slane %v1093, %v1106
    %v1108 = vcombine.low %v1100, %v1107
    %v1110 = vunpack.c.l.s4 1935823168
    %v1111 = vunpack.c.0.s8 %v1110
    %v1112 = vlaneseq
    %v1113 = vshrl.u32 %v1112, 7
    %v1114 = vsub.s32 %v1111, %v1113
    %v1115 = vrot.slane %v1108, %v1114
    %1116 = vrot.lane.b32.xlu0 %v923, 8
    %v1117 = vpop.permute.xlu0 %1116
    %1118 = vrot.lane.b32.xlu0 %v947, 8
    %v1119 = vpop.permute.xlu0 %1118
    %1120 = vrot.lane.b32.xlu0 %v971, 8
    %v1121 = vpop.permute.xlu0 %1120
    %1122 = vrot.lane.b32.xlu0 %v995, 8
    %v1123 = vpop.permute.xlu0 %1122
    %1124 = vrot.lane.b32.xlu0 %v1019, 8
    %v1125 = vpop.permute.xlu0 %1124
    %1126 = vrot.lane.b32.xlu0 %v1043, 8
    %v1127 = vpop.permute.xlu0 %1126
    %1128 = vrot.lane.b32.xlu0 %v1067, 8
    %v1129 = vpop.permute.xlu0 %1128
    %1130 = vrot.lane.b32.xlu0 %v1091, 8
    %v1131 = vpop.permute.xlu0 %1130
    %1132 = vrot.lane.b32.xlu0 %v1115, 8
    %v1133 = vpop.permute.xlu0 %1132
    %vm1143 = vcmask 126016
    %1144 = vst.msk [vmem:[#allocation2] sm:$0xf] %vm1143, %v1117
    %1145 = vst.msk [vmem:[#allocation2 + $0x4] sm:$0xf] %vm1143, %v1119
    %1146 = vst.msk [vmem:[#allocation2 + $0x8] sm:$0xf] %vm1143, %v1121
    %1147 = vst.msk [vmem:[#allocation2 + $0xc] sm:$0xf] %vm1143, %v1123
    %1148 = vst.msk [vmem:[#allocation2 + $0x10] sm:$0xf] %vm1143, %v1125
    %1149 = vst.msk [vmem:[#allocation2 + $0x14] sm:$0xf] %vm1143, %v1127
    %1150 = vst.msk [vmem:[#allocation2 + $0x18] sm:$0xf] %vm1143, %v1129
    %1151 = vst.msk [vmem:[#allocation2 + $0x1c] sm:$0xf] %vm1143, %v1131
    %1152 = vst.msk [vmem:[#allocation2 + $0x20] sm:$0xf] %vm1143, %v1133
    %v1153 = vcombine.low %v83, %v573
    %v1154 = vcombine.low %v84, %v106
    %v1156 = vunpack.c.l.s4 1935823168
    %v1157 = vunpack.c.0.s8 %v1156
    %v1158 = vlaneseq
    %v1159 = vshrl.u32 %v1158, 7
    %v1160 = vsub.s32 %v1157, %v1159
    %v1161 = vrot.slane %v1153, %v1160
    %v1163 = vunpack.c.l.s4 1935823168
    %v1164 = vunpack.c.0.s8 %v1163
    %v1165 = vlaneseq
    %v1166 = vshrl.u32 %v1165, 7
    %v1167 = vsub.s32 %v1164, %v1166
    %v1168 = vrot.slane %v1154, %v1167
    %v1169 = vcombine.low %v1161, %v1168
    %v1171 = vunpack.c.l.s4 1935823168
    %v1172 = vunpack.c.0.s8 %v1171
    %v1173 = vlaneseq
    %v1174 = vshrl.u32 %v1173, 7
    %v1175 = vsub.s32 %v1172, %v1174
    %v1176 = vrot.slane %v1169, %v1175
    %v1177 = vcombine.low %v574, %v130
    %v1179 = vunpack.c.l.s4 1935823168
    %v1180 = vunpack.c.0.s8 %v1179
    %v1181 = vlaneseq
    %v1182 = vshrl.u32 %v1181, 7
    %v1183 = vsub.s32 %v1180, %v1182
    %v1184 = vrot.slane %v1177, %v1183
    %v1185 = vcombine.low %v377, %v1184
    %v1187 = vunpack.c.l.s4 1935823168
    %v1188 = vunpack.c.0.s8 %v1187
    %v1189 = vlaneseq
    %v1190 = vshrl.u32 %v1189, 7
    %v1191 = vsub.s32 %v1188, %v1190
    %v1192 = vrot.slane %v1185, %v1191
    %v1193 = vcombine.low %v575, %v153
    %v1194 = vcombine.low %v152, %v576
    %v1196 = vunpack.c.l.s4 1935823168
    %v1197 = vunpack.c.0.s8 %v1196
    %v1198 = vlaneseq
    %v1199 = vshrl.u32 %v1198, 7
    %v1200 = vsub.s32 %v1197, %v1199
    %v1201 = vrot.slane %v1193, %v1200
    %v1203 = vunpack.c.l.s4 1935823168
    %v1204 = vunpack.c.0.s8 %v1203
    %v1205 = vlaneseq
    %v1206 = vshrl.u32 %v1205, 7
    %v1207 = vsub.s32 %v1204, %v1206
    %v1208 = vrot.slane %v1194, %v1207
    %v1209 = vcombine.low %v1201, %v1208
    %v1211 = vunpack.c.l.s4 1935823168
    %v1212 = vunpack.c.0.s8 %v1211
    %v1213 = vlaneseq
    %v1214 = vshrl.u32 %v1213, 7
    %v1215 = vsub.s32 %v1212, %v1214
    %v1216 = vrot.slane %v1209, %v1215
    %v1217 = vcombine.low %v175, %v577
    %v1218 = vcombine.low %v176, %v198
    %v1220 = vunpack.c.l.s4 1935823168
    %v1221 = vunpack.c.0.s8 %v1220
    %v1222 = vlaneseq
    %v1223 = vshrl.u32 %v1222, 7
    %v1224 = vsub.s32 %v1221, %v1223
    %v1225 = vrot.slane %v1217, %v1224
    %v1227 = vunpack.c.l.s4 1935823168
    %v1228 = vunpack.c.0.s8 %v1227
    %v1229 = vlaneseq
    %v1230 = vshrl.u32 %v1229, 7
    %v1231 = vsub.s32 %v1228, %v1230
    %v1232 = vrot.slane %v1218, %v1231
    %v1233 = vcombine.low %v1225, %v1232
    %v1235 = vunpack.c.l.s4 1935823168
    %v1236 = vunpack.c.0.s8 %v1235
    %v1237 = vlaneseq
    %v1238 = vshrl.u32 %v1237, 7
    %v1239 = vsub.s32 %v1236, %v1238
    %v1240 = vrot.slane %v1233, %v1239
    %v1241 = vcombine.low %v578, %v222
    %v1243 = vunpack.c.l.s4 1935823168
    %v1244 = vunpack.c.0.s8 %v1243
    %v1245 = vlaneseq
    %v1246 = vshrl.u32 %v1245, 7
    %v1247 = vsub.s32 %v1244, %v1246
    %v1248 = vrot.slane %v1241, %v1247
    %v1249 = vcombine.low %v449, %v1248
    %v1251 = vunpack.c.l.s4 1935823168
    %v1252 = vunpack.c.0.s8 %v1251
    %v1253 = vlaneseq
    %v1254 = vshrl.u32 %v1253, 7
    %v1255 = vsub.s32 %v1252, %v1254
    %v1256 = vrot.slane %v1249, %v1255
    %v1257 = vcombine.low %v579, %v245
    %v1258 = vcombine.low %v244, %v580
    %v1260 = vunpack.c.l.s4 1935823168
    %v1261 = vunpack.c.0.s8 %v1260
    %v1262 = vlaneseq
    %v1263 = vshrl.u32 %v1262, 7
    %v1264 = vsub.s32 %v1261, %v1263
    %v1265 = vrot.slane %v1257, %v1264
    %v1267 = vunpack.c.l.s4 1935823168
    %v1268 = vunpack.c.0.s8 %v1267
    %v1269 = vlaneseq
    %v1270 = vshrl.u32 %v1269, 7
    %v1271 = vsub.s32 %v1268, %v1270
    %v1272 = vrot.slane %v1258, %v1271
    %v1273 = vcombine.low %v1265, %v1272
    %v1275 = vunpack.c.l.s4 1935823168
    %v1276 = vunpack.c.0.s8 %v1275
    %v1277 = vlaneseq
    %v1278 = vshrl.u32 %v1277, 7
    %v1279 = vsub.s32 %v1276, %v1278
    %v1280 = vrot.slane %v1273, %v1279
    %v1281 = vcombine.low %v267, %v581
    %v1282 = vcombine.low %v268, %v290
    %v1284 = vunpack.c.l.s4 1935823168
    %v1285 = vunpack.c.0.s8 %v1284
    %v1286 = vlaneseq
    %v1287 = vshrl.u32 %v1286, 7
    %v1288 = vsub.s32 %v1285, %v1287
    %v1289 = vrot.slane %v1281, %v1288
    %v1291 = vunpack.c.l.s4 1935823168
    %v1292 = vunpack.c.0.s8 %v1291
    %v1293 = vlaneseq
    %v1294 = vshrl.u32 %v1293, 7
    %v1295 = vsub.s32 %v1292, %v1294
    %v1296 = vrot.slane %v1282, %v1295
    %v1297 = vcombine.low %v1289, %v1296
    %v1299 = vunpack.c.l.s4 1935823168
    %v1300 = vunpack.c.0.s8 %v1299
    %v1301 = vlaneseq
    %v1302 = vshrl.u32 %v1301, 7
    %v1303 = vsub.s32 %v1300, %v1302
    %v1304 = vrot.slane %v1297, %v1303
    %v1305 = vcombine.low %v582, %v314
    %v1307 = vunpack.c.l.s4 1935823168
    %v1308 = vunpack.c.0.s8 %v1307
    %v1309 = vlaneseq
    %v1310 = vshrl.u32 %v1309, 7
    %v1311 = vsub.s32 %v1308, %v1310
    %v1312 = vrot.slane %v1305, %v1311
    %v1313 = vcombine.low %v521, %v1312
    %v1315 = vunpack.c.l.s4 1935823168
    %v1316 = vunpack.c.0.s8 %v1315
    %v1317 = vlaneseq
    %v1318 = vshrl.u32 %v1317, 7
    %v1319 = vsub.s32 %v1316, %v1318
    %v1320 = vrot.slane %v1313, %v1319
    %v1321 = vcombine.low %v583, %v337
    %v1322 = vcombine.low %v336, %v584
    %v1324 = vunpack.c.l.s4 1935823168
    %v1325 = vunpack.c.0.s8 %v1324
    %v1326 = vlaneseq
    %v1327 = vshrl.u32 %v1326, 7
    %v1328 = vsub.s32 %v1325, %v1327
    %v1329 = vrot.slane %v1321, %v1328
    %v1331 = vunpack.c.l.s4 1935823168
    %v1332 = vunpack.c.0.s8 %v1331
    %v1333 = vlaneseq
    %v1334 = vshrl.u32 %v1333, 7
    %v1335 = vsub.s32 %v1332, %v1334
    %v1336 = vrot.slane %v1322, %v1335
    %v1337 = vcombine.low %v1329, %v1336
    %v1339 = vunpack.c.l.s4 1935823168
    %v1340 = vunpack.c.0.s8 %v1339
    %v1341 = vlaneseq
    %v1342 = vshrl.u32 %v1341, 7
    %v1343 = vsub.s32 %v1340, %v1342
    %v1344 = vrot.slane %v1337, %v1343
    %1345 = vrot.lane.b32.xlu0 %v1176, 16
    %v1346 = vpop.permute.xlu0 %1345
    %1347 = vrot.lane.b32.xlu0 %v1192, 16
    %v1348 = vpop.permute.xlu0 %1347
    %1349 = vrot.lane.b32.xlu0 %v1216, 16
    %v1350 = vpop.permute.xlu0 %1349
    %1351 = vrot.lane.b32.xlu0 %v1240, 16
    %v1352 = vpop.permute.xlu0 %1351
    %1353 = vrot.lane.b32.xlu0 %v1256, 16
    %v1354 = vpop.permute.xlu0 %1353
    %1355 = vrot.lane.b32.xlu0 %v1280, 16
    %v1356 = vpop.permute.xlu0 %1355
    %1357 = vrot.lane.b32.xlu0 %v1304, 16
    %v1358 = vpop.permute.xlu0 %1357
    %1359 = vrot.lane.b32.xlu0 %v1320, 16
    %v1360 = vpop.permute.xlu0 %1359
    %1361 = vrot.lane.b32.xlu0 %v1344, 16
    %v1362 = vpop.permute.xlu0 %1361
    %vm1372 = vcmask 191616
    %1373 = vst.msk [vmem:[#allocation2] sm:$0xf] %vm1372, %v1346
    %1374 = vst.msk [vmem:[#allocation2 + $0x4] sm:$0xf] %vm1372, %v1348
    %1375 = vst.msk [vmem:[#allocation2 + $0x8] sm:$0xf] %vm1372, %v1350
    %1376 = vst.msk [vmem:[#allocation2 + $0xc] sm:$0xf] %vm1372, %v1352
    %1377 = vst.msk [vmem:[#allocation2 + $0x10] sm:$0xf] %vm1372, %v1354
    %1378 = vst.msk [vmem:[#allocation2 + $0x14] sm:$0xf] %vm1372, %v1356
    %1379 = vst.msk [vmem:[#allocation2 + $0x18] sm:$0xf] %vm1372, %v1358
    %1380 = vst.msk [vmem:[#allocation2 + $0x1c] sm:$0xf] %vm1372, %v1360
    %1381 = vst.msk [vmem:[#allocation2 + $0x20] sm:$0xf] %vm1372, %v1362
    %v1385 = vunpack.c.l.s4 1966171168
    %v1386 = vunpack.c.0.s8 %v1385
    %v1387 = vlaneseq
    %v1388 = vshrl.u32 %v1387, 7
    %v1389 = vsub.s32 %v1386, %v1388
    %v1390 = vrot.slane %v40, %v1389
    %v1391 = vcombine.high %v1390, %v1390
    %v1393 = vunpack.c.l.s4 1966171168
    %v1394 = vunpack.c.0.s8 %v1393
    %v1395 = vlaneseq
    %v1396 = vshrl.u32 %v1395, 7
    %v1397 = vsub.s32 %v1394, %v1396
    %v1398 = vrot.slane %v1390, %v1397
    %v1400 = vunpack.c.l.s4 1966171168
    %v1401 = vunpack.c.0.s8 %v1400
    %v1402 = vlaneseq
    %v1403 = vshrl.u32 %v1402, 7
    %v1404 = vsub.s32 %v1401, %v1403
    %v1405 = vrot.slane %v1391, %v1404
    %v1406 = vcombine.high %v1398, %v1398
    %v1408 = vunpack.c.l.s4 1966171168
    %v1409 = vunpack.c.0.s8 %v1408
    %v1410 = vlaneseq
    %v1411 = vshrl.u32 %v1410, 7
    %v1412 = vsub.s32 %v1409, %v1411
    %v1413 = vrot.slane %v48, %v1412
    %v1414 = vcombine.high %v1413, %v1413
    %v1416 = vunpack.c.l.s4 1966171168
    %v1417 = vunpack.c.0.s8 %v1416
    %v1418 = vlaneseq
    %v1419 = vshrl.u32 %v1418, 7
    %v1420 = vsub.s32 %v1417, %v1419
    %v1421 = vrot.slane %v1413, %v1420
    %v1423 = vunpack.c.l.s4 1966171168
    %v1424 = vunpack.c.0.s8 %v1423
    %v1425 = vlaneseq
    %v1426 = vshrl.u32 %v1425, 7
    %v1427 = vsub.s32 %v1424, %v1426
    %v1428 = vrot.slane %v1414, %v1427
    %v1429 = vcombine.high %v1421, %v1421
    %v1430 = vcombine.low %v99, %v107
    %v1432 = vunpack.c.l.s4 1935823168
    %v1433 = vunpack.c.0.s8 %v1432
    %v1434 = vlaneseq
    %v1435 = vshrl.u32 %v1434, 7
    %v1436 = vsub.s32 %v1433, %v1435
    %v1437 = vrot.slane %v1430, %v1436
    %v1438 = vcombine.low %v1437, %v370
    %v1440 = vunpack.c.l.s4 1935823168
    %v1441 = vunpack.c.0.s8 %v1440
    %v1442 = vlaneseq
    %v1443 = vshrl.u32 %v1442, 7
    %v1444 = vsub.s32 %v1441, %v1443
    %v1445 = vrot.slane %v1438, %v1444
    %v1446 = vcombine.low %v129, %v145
    %v1448 = vunpack.c.l.s4 1935823168
    %v1449 = vunpack.c.0.s8 %v1448
    %v1450 = vlaneseq
    %v1451 = vshrl.u32 %v1450, 7
    %v1452 = vsub.s32 %v1449, %v1451
    %v1453 = vrot.slane %v1446, %v1452
    %v1454 = vcombine.low %v1453, %v394
    %v1456 = vunpack.c.l.s4 1935823168
    %v1457 = vunpack.c.0.s8 %v1456
    %v1458 = vlaneseq
    %v1459 = vshrl.u32 %v1458, 7
    %v1460 = vsub.s32 %v1457, %v1459
    %v1461 = vrot.slane %v1454, %v1460
    %v1462 = vcombine.low %v153, %v175
    %v1464 = vunpack.c.l.s4 1935823168
    %v1465 = vunpack.c.0.s8 %v1464
    %v1466 = vlaneseq
    %v1467 = vshrl.u32 %v1466, 7
    %v1468 = vsub.s32 %v1465, %v1467
    %v1469 = vrot.slane %v1462, %v1468
    %v1470 = vcombine.low %v1469, %v418
    %v1472 = vunpack.c.l.s4 1935823168
    %v1473 = vunpack.c.0.s8 %v1472
    %v1474 = vlaneseq
    %v1475 = vshrl.u32 %v1474, 7
    %v1476 = vsub.s32 %v1473, %v1475
    %v1477 = vrot.slane %v1470, %v1476
    %v1478 = vcombine.low %v191, %v199
    %v1479 = vcombine.low %v198, %v1398
    %v1481 = vunpack.c.l.s4 1935823168
    %v1482 = vunpack.c.0.s8 %v1481
    %v1483 = vlaneseq
    %v1484 = vshrl.u32 %v1483, 7
    %v1485 = vsub.s32 %v1482, %v1484
    %v1486 = vrot.slane %v1478, %v1485
    %v1488 = vunpack.c.l.s4 1935823168
    %v1489 = vunpack.c.0.s8 %v1488
    %v1490 = vlaneseq
    %v1491 = vshrl.u32 %v1490, 7
    %v1492 = vsub.s32 %v1489, %v1491
    %v1493 = vrot.slane %v1479, %v1492
    %v1494 = vcombine.low %v1486, %v1493
    %v1496 = vunpack.c.l.s4 1935823168
    %v1497 = vunpack.c.0.s8 %v1496
    %v1498 = vlaneseq
    %v1499 = vshrl.u32 %v1498, 7
    %v1500 = vsub.s32 %v1497, %v1499
    %v1501 = vrot.slane %v1494, %v1500
    %v1502 = vcombine.low %v1405, %v237
    %v1503 = vcombine.low %v1406, %v244
    %v1505 = vunpack.c.l.s4 1935823168
    %v1506 = vunpack.c.0.s8 %v1505
    %v1507 = vlaneseq
    %v1508 = vshrl.u32 %v1507, 7
    %v1509 = vsub.s32 %v1506, %v1508
    %v1510 = vrot.slane %v1502, %v1509
    %v1512 = vunpack.c.l.s4 1935823168
    %v1513 = vunpack.c.0.s8 %v1512
    %v1514 = vlaneseq
    %v1515 = vshrl.u32 %v1514, 7
    %v1516 = vsub.s32 %v1513, %v1515
    %v1517 = vrot.slane %v1503, %v1516
    %v1518 = vcombine.low %v1510, %v1517
    %v1520 = vunpack.c.l.s4 1935823168
    %v1521 = vunpack.c.0.s8 %v1520
    %v1522 = vlaneseq
    %v1523 = vshrl.u32 %v1522, 7
    %v1524 = vsub.s32 %v1521, %v1523
    %v1525 = vrot.slane %v1518, %v1524
    %v1526 = vcombine.low %v245, %v267
    %v1528 = vunpack.c.l.s4 1935823168
    %v1529 = vunpack.c.0.s8 %v1528
    %v1530 = vlaneseq
    %v1531 = vshrl.u32 %v1530, 7
    %v1532 = vsub.s32 %v1529, %v1531
    %v1533 = vrot.slane %v1526, %v1532
    %v1534 = vcombine.low %v1533, %v490
    %v1536 = vunpack.c.l.s4 1935823168
    %v1537 = vunpack.c.0.s8 %v1536
    %v1538 = vlaneseq
    %v1539 = vshrl.u32 %v1538, 7
    %v1540 = vsub.s32 %v1537, %v1539
    %v1541 = vrot.slane %v1534, %v1540
    %v1542 = vcombine.low %v283, %v291
    %v1544 = vunpack.c.l.s4 1935823168
    %v1545 = vunpack.c.0.s8 %v1544
    %v1546 = vlaneseq
    %v1547 = vshrl.u32 %v1546, 7
    %v1548 = vsub.s32 %v1545, %v1547
    %v1549 = vrot.slane %v1542, %v1548
    %v1550 = vcombine.low %v1549, %v514
    %v1552 = vunpack.c.l.s4 1935823168
    %v1553 = vunpack.c.0.s8 %v1552
    %v1554 = vlaneseq
    %v1555 = vshrl.u32 %v1554, 7
    %v1556 = vsub.s32 %v1553, %v1555
    %v1557 = vrot.slane %v1550, %v1556
    %v1558 = vcombine.low %v313, %v329
    %v1560 = vunpack.c.l.s4 1935823168
    %v1561 = vunpack.c.0.s8 %v1560
    %v1562 = vlaneseq
    %v1563 = vshrl.u32 %v1562, 7
    %v1564 = vsub.s32 %v1561, %v1563
    %v1565 = vrot.slane %v1558, %v1564
    %v1566 = vcombine.low %v1565, %v538
    %v1568 = vunpack.c.l.s4 1935823168
    %v1569 = vunpack.c.0.s8 %v1568
    %v1570 = vlaneseq
    %v1571 = vshrl.u32 %v1570, 7
    %v1572 = vsub.s32 %v1569, %v1571
    %v1573 = vrot.slane %v1566, %v1572
    %v1574 = vcombine.low %v337, %v1428
    %v1575 = vcombine.low %v1421, %v1429
    %v1577 = vunpack.c.l.s4 1935823168
    %v1578 = vunpack.c.0.s8 %v1577
    %v1579 = vlaneseq
    %v1580 = vshrl.u32 %v1579, 7
    %v1581 = vsub.s32 %v1578, %v1580
    %v1582 = vrot.slane %v1574, %v1581
    %v1584 = vunpack.c.l.s4 1935823168
    %v1585 = vunpack.c.0.s8 %v1584
    %v1586 = vlaneseq
    %v1587 = vshrl.u32 %v1586, 7
    %v1588 = vsub.s32 %v1585, %v1587
    %v1589 = vrot.slane %v1575, %v1588
    %v1590 = vcombine.low %v1582, %v1589
    %v1592 = vunpack.c.l.s4 1935823168
    %v1593 = vunpack.c.0.s8 %v1592
    %v1594 = vlaneseq
    %v1595 = vshrl.u32 %v1594, 7
    %v1596 = vsub.s32 %v1593, %v1595
    %v1597 = vrot.slane %v1590, %v1596
    %1598 = vrot.lane.b32.xlu0 %v1445, 24
    %v1599 = vpop.permute.xlu0 %1598
    %1600 = vrot.lane.b32.xlu0 %v1461, 24
    %v1601 = vpop.permute.xlu0 %1600
    %1602 = vrot.lane.b32.xlu0 %v1477, 24
    %v1603 = vpop.permute.xlu0 %1602
    %1604 = vrot.lane.b32.xlu0 %v1501, 24
    %v1605 = vpop.permute.xlu0 %1604
    %1606 = vrot.lane.b32.xlu0 %v1525, 24
    %v1607 = vpop.permute.xlu0 %1606
    %1608 = vrot.lane.b32.xlu0 %v1541, 24
    %v1609 = vpop.permute.xlu0 %1608
    %1610 = vrot.lane.b32.xlu0 %v1557, 24
    %v1611 = vpop.permute.xlu0 %1610
    %1612 = vrot.lane.b32.xlu0 %v1573, 24
    %v1613 = vpop.permute.xlu0 %1612
    %1614 = vrot.lane.b32.xlu0 %v1597, 24
    %v1615 = vpop.permute.xlu0 %1614
    %vm1625 = vcmask 257216
    %1626 = vst.msk [vmem:[#allocation2] sm:$0xf] %vm1625, %v1599
    %1627 = vst.msk [vmem:[#allocation2 + $0x4] sm:$0xf] %vm1625, %v1601
    %1628 = vst.msk [vmem:[#allocation2 + $0x8] sm:$0xf] %vm1625, %v1603
    %1629 = vst.msk [vmem:[#allocation2 + $0xc] sm:$0xf] %vm1625, %v1605
    %1630 = vst.msk [vmem:[#allocation2 + $0x10] sm:$0xf] %vm1625, %v1607
    %1631 = vst.msk [vmem:[#allocation2 + $0x14] sm:$0xf] %vm1625, %v1609
    %1632 = vst.msk [vmem:[#allocation2 + $0x18] sm:$0xf] %vm1625, %v1611
    %1633 = vst.msk [vmem:[#allocation2 + $0x1c] sm:$0xf] %vm1625, %v1613
    %1634 = vst.msk [vmem:[#allocation2 + $0x20] sm:$0xf] %vm1625, %v1615
    %v1635 = vcombine.high %v1405, %v1405
    %v1636 = vcombine.high %v1428, %v1428
    %v1638 = vshrl.u32 %v1398, 16
    %v1640 = vrot.slane %v1638, 7
    %v1641 = vrot.slane %v1640, 1
    %v1643 = vshll.u32 %v1405, 16
    %v1645 = vsel %vm599, %v1641, %v1643
    %v1646 = vshrl.u32 %v1405, 16
    %v1648 = vrot.slane %v1646, 7
    %v1649 = vrot.slane %v1648, 1
    %v1651 = vshll.u32 %v1406, 16
    %v1653 = vsel %vm599, %v1649, %v1651
    %v1654 = vshrl.u32 %v1406, 16
    %v1656 = vrot.slane %v1654, 7
    %v1657 = vrot.slane %v1656, 1
    %v1659 = vshll.u32 %v1635, 16
    %v1661 = vsel %vm599, %v1657, %v1659
    %v1663 = vshrl.u32 %v1421, 16
    %v1665 = vrot.slane %v1663, 7
    %v1666 = vrot.slane %v1665, 1
    %v1668 = vshll.u32 %v1428, 16
    %v1670 = vsel %vm599, %v1666, %v1668
    %v1671 = vshrl.u32 %v1428, 16
    %v1673 = vrot.slane %v1671, 7
    %v1674 = vrot.slane %v1673, 1
    %v1676 = vshll.u32 %v1429, 16
    %v1678 = vsel %vm599, %v1674, %v1676
    %v1679 = vshrl.u32 %v1429, 16
    %v1681 = vrot.slane %v1679, 7
    %v1682 = vrot.slane %v1681, 1
    %v1684 = vshll.u32 %v1636, 16
    %v1686 = vsel %vm599, %v1682, %v1684
    %v1687 = vcombine.low %v633, %v649
    %v1689 = vunpack.c.l.s4 1935823168
    %v1690 = vunpack.c.0.s8 %v1689
    %v1691 = vlaneseq
    %v1692 = vshrl.u32 %v1691, 7
    %v1693 = vsub.s32 %v1690, %v1692
    %v1694 = vrot.slane %v1687, %v1693
    %v1695 = vcombine.low %v1694, %v932
    %v1697 = vunpack.c.l.s4 1935823168
    %v1698 = vunpack.c.0.s8 %v1697
    %v1699 = vlaneseq
    %v1700 = vshrl.u32 %v1699, 7
    %v1701 = vsub.s32 %v1698, %v1700
    %v1702 = vrot.slane %v1695, %v1701
    %v1703 = vcombine.low %v666, %v683
    %v1705 = vunpack.c.l.s4 1935823168
    %v1706 = vunpack.c.0.s8 %v1705
    %v1707 = vlaneseq
    %v1708 = vshrl.u32 %v1707, 7
    %v1709 = vsub.s32 %v1706, %v1708
    %v1710 = vrot.slane %v1703, %v1709
    %v1711 = vcombine.low %v1710, %v956
    %v1713 = vunpack.c.l.s4 1935823168
    %v1714 = vunpack.c.0.s8 %v1713
    %v1715 = vlaneseq
    %v1716 = vshrl.u32 %v1715, 7
    %v1717 = vsub.s32 %v1714, %v1716
    %v1718 = vrot.slane %v1711, %v1717
    %v1719 = vcombine.low %v699, %v716
    %v1721 = vunpack.c.l.s4 1935823168
    %v1722 = vunpack.c.0.s8 %v1721
    %v1723 = vlaneseq
    %v1724 = vshrl.u32 %v1723, 7
    %v1725 = vsub.s32 %v1722, %v1724
    %v1726 = vrot.slane %v1719, %v1725
    %v1727 = vcombine.low %v1726, %v980
    %v1729 = vunpack.c.l.s4 1935823168
    %v1730 = vunpack.c.0.s8 %v1729
    %v1731 = vlaneseq
    %v1732 = vshrl.u32 %v1731, 7
    %v1733 = vsub.s32 %v1730, %v1732
    %v1734 = vrot.slane %v1727, %v1733
    %v1735 = vcombine.low %v733, %v749
    %v1736 = vcombine.low %v741, %v1645
    %v1738 = vunpack.c.l.s4 1935823168
    %v1739 = vunpack.c.0.s8 %v1738
    %v1740 = vlaneseq
    %v1741 = vshrl.u32 %v1740, 7
    %v1742 = vsub.s32 %v1739, %v1741
    %v1743 = vrot.slane %v1735, %v1742
    %v1745 = vunpack.c.l.s4 1935823168
    %v1746 = vunpack.c.0.s8 %v1745
    %v1747 = vlaneseq
    %v1748 = vshrl.u32 %v1747, 7
    %v1749 = vsub.s32 %v1746, %v1748
    %v1750 = vrot.slane %v1736, %v1749
    %v1751 = vcombine.low %v1743, %v1750
    %v1753 = vunpack.c.l.s4 1935823168
    %v1754 = vunpack.c.0.s8 %v1753
    %v1755 = vlaneseq
    %v1756 = vshrl.u32 %v1755, 7
    %v1757 = vsub.s32 %v1754, %v1756
    %v1758 = vrot.slane %v1751, %v1757
    %v1759 = vcombine.low %v1653, %v783
    %v1760 = vcombine.low %v1661, %v791
    %v1762 = vunpack.c.l.s4 1935823168
    %v1763 = vunpack.c.0.s8 %v1762
    %v1764 = vlaneseq
    %v1765 = vshrl.u32 %v1764, 7
    %v1766 = vsub.s32 %v1763, %v1765
    %v1767 = vrot.slane %v1759, %v1766
    %v1769 = vunpack.c.l.s4 1935823168
    %v1770 = vunpack.c.0.s8 %v1769
    %v1771 = vlaneseq
    %v1772 = vshrl.u32 %v1771, 7
    %v1773 = vsub.s32 %v1770, %v1772
    %v1774 = vrot.slane %v1760, %v1773
    %v1775 = vcombine.low %v1767, %v1774
    %v1777 = vunpack.c.l.s4 1935823168
    %v1778 = vunpack.c.0.s8 %v1777
    %v1779 = vlaneseq
    %v1780 = vshrl.u32 %v1779, 7
    %v1781 = vsub.s32 %v1778, %v1780
    %v1782 = vrot.slane %v1775, %v1781
    %v1783 = vcombine.low %v799, %v816
    %v1785 = vunpack.c.l.s4 1935823168
    %v1786 = vunpack.c.0.s8 %v1785
    %v1787 = vlaneseq
    %v1788 = vshrl.u32 %v1787, 7
    %v1789 = vsub.s32 %v1786, %v1788
    %v1790 = vrot.slane %v1783, %v1789
    %v1791 = vcombine.low %v1790, %v1052
    %v1793 = vunpack.c.l.s4 1935823168
    %v1794 = vunpack.c.0.s8 %v1793
    %v1795 = vlaneseq
    %v1796 = vshrl.u32 %v1795, 7
    %v1797 = vsub.s32 %v1794, %v1796
    %v1798 = vrot.slane %v1791, %v1797
    %v1799 = vcombine.low %v833, %v849
    %v1801 = vunpack.c.l.s4 1935823168
    %v1802 = vunpack.c.0.s8 %v1801
    %v1803 = vlaneseq
    %v1804 = vshrl.u32 %v1803, 7
    %v1805 = vsub.s32 %v1802, %v1804
    %v1806 = vrot.slane %v1799, %v1805
    %v1807 = vcombine.low %v1806, %v1076
    %v1809 = vunpack.c.l.s4 1935823168
    %v1810 = vunpack.c.0.s8 %v1809
    %v1811 = vlaneseq
    %v1812 = vshrl.u32 %v1811, 7
    %v1813 = vsub.s32 %v1810, %v1812
    %v1814 = vrot.slane %v1807, %v1813
    %v1815 = vcombine.low %v866, %v883
    %v1817 = vunpack.c.l.s4 1935823168
    %v1818 = vunpack.c.0.s8 %v1817
    %v1819 = vlaneseq
    %v1820 = vshrl.u32 %v1819, 7
    %v1821 = vsub.s32 %v1818, %v1820
    %v1822 = vrot.slane %v1815, %v1821
    %v1823 = vcombine.low %v1822, %v1100
    %v1825 = vunpack.c.l.s4 1935823168
    %v1826 = vunpack.c.0.s8 %v1825
    %v1827 = vlaneseq
    %v1828 = vshrl.u32 %v1827, 7
    %v1829 = vsub.s32 %v1826, %v1828
    %v1830 = vrot.slane %v1823, %v1829
    %v1831 = vcombine.low %v899, %v1678
    %v1832 = vcombine.low %v1670, %v1686
    %v1834 = vunpack.c.l.s4 1935823168
    %v1835 = vunpack.c.0.s8 %v1834
    %v1836 = vlaneseq
    %v1837 = vshrl.u32 %v1836, 7
    %v1838 = vsub.s32 %v1835, %v1837
    %v1839 = vrot.slane %v1831, %v1838
    %v1841 = vunpack.c.l.s4 1935823168
    %v1842 = vunpack.c.0.s8 %v1841
    %v1843 = vlaneseq
    %v1844 = vshrl.u32 %v1843, 7
    %v1845 = vsub.s32 %v1842, %v1844
    %v1846 = vrot.slane %v1832, %v1845
    %v1847 = vcombine.low %v1839, %v1846
    %v1849 = vunpack.c.l.s4 1935823168
    %v1850 = vunpack.c.0.s8 %v1849
    %v1851 = vlaneseq
    %v1852 = vshrl.u32 %v1851, 7
    %v1853 = vsub.s32 %v1850, %v1852
    %v1854 = vrot.slane %v1847, %v1853
    %1855 = vrot.lane.b32.xlu0 %v1702, 32
    %v1856 = vpop.permute.xlu0 %1855
    %1857 = vrot.lane.b32.xlu0 %v1718, 32
    %v1858 = vpop.permute.xlu0 %1857
    %1859 = vrot.lane.b32.xlu0 %v1734, 32
    %v1860 = vpop.permute.xlu0 %1859
    %1861 = vrot.lane.b32.xlu0 %v1758, 32
    %v1862 = vpop.permute.xlu0 %1861
    %1863 = vrot.lane.b32.xlu0 %v1782, 32
    %v1864 = vpop.permute.xlu0 %1863
    %1865 = vrot.lane.b32.xlu0 %v1798, 32
    %v1866 = vpop.permute.xlu0 %1865
    %1867 = vrot.lane.b32.xlu0 %v1814, 32
    %v1868 = vpop.permute.xlu0 %1867
    %1869 = vrot.lane.b32.xlu0 %v1830, 32
    %v1870 = vpop.permute.xlu0 %1869
    %1871 = vrot.lane.b32.xlu0 %v1854, 32
    %v1872 = vpop.permute.xlu0 %1871
    %vm1882 = vcmask 322816
    %1883 = vst.msk [vmem:[#allocation2] sm:$0xf] %vm1882, %v1856
    %1884 = vst.msk [vmem:[#allocation2 + $0x4] sm:$0xf] %vm1882, %v1858
    %1885 = vst.msk [vmem:[#allocation2 + $0x8] sm:$0xf] %vm1882, %v1860
    %1886 = vst.msk [vmem:[#allocation2 + $0xc] sm:$0xf] %vm1882, %v1862
    %1887 = vst.msk [vmem:[#allocation2 + $0x10] sm:$0xf] %vm1882, %v1864
    %1888 = vst.msk [vmem:[#allocation2 + $0x14] sm:$0xf] %vm1882, %v1866
    %1889 = vst.msk [vmem:[#allocation2 + $0x18] sm:$0xf] %vm1882, %v1868
    %1890 = vst.msk [vmem:[#allocation2 + $0x1c] sm:$0xf] %vm1882, %v1870
    %1891 = vst.msk [vmem:[#allocation2 + $0x20] sm:$0xf] %vm1882, %v1872
    %v1892 = vcombine.low %v106, %v574
    %v1894 = vunpack.c.l.s4 1935823168
    %v1895 = vunpack.c.0.s8 %v1894
    %v1896 = vlaneseq
    %v1897 = vshrl.u32 %v1896, 7
    %v1898 = vsub.s32 %v1895, %v1897
    %v1899 = vrot.slane %v1892, %v1898
    %v1900 = vcombine.low %v1899, %v377
    %v1902 = vunpack.c.l.s4 1935823168
    %v1903 = vunpack.c.0.s8 %v1902
    %v1904 = vlaneseq
    %v1905 = vshrl.u32 %v1904, 7
    %v1906 = vsub.s32 %v1903, %v1905
    %v1907 = vrot.slane %v1900, %v1906
    %v1908 = vcombine.low %v394, %v1201
    %v1910 = vunpack.c.l.s4 1935823168
    %v1911 = vunpack.c.0.s8 %v1910
    %v1912 = vlaneseq
    %v1913 = vshrl.u32 %v1912, 7
    %v1914 = vsub.s32 %v1911, %v1913
    %v1915 = vrot.slane %v1908, %v1914
    %v1916 = vcombine.low %v576, %v176
    %v1918 = vunpack.c.l.s4 1935823168
    %v1919 = vunpack.c.0.s8 %v1918
    %v1920 = vlaneseq
    %v1921 = vshrl.u32 %v1920, 7
    %v1922 = vsub.s32 %v1919, %v1921
    %v1923 = vrot.slane %v1916, %v1922
    %v1924 = vcombine.low %v1923, %v1225
    %v1926 = vunpack.c.l.s4 1935823168
    %v1927 = vunpack.c.0.s8 %v1926
    %v1928 = vlaneseq
    %v1929 = vshrl.u32 %v1928, 7
    %v1930 = vsub.s32 %v1927, %v1929
    %v1931 = vrot.slane %v1924, %v1930
    %v1932 = vcombine.low %v198, %v578
    %v1933 = vcombine.low %v199, %v1405
    %v1935 = vunpack.c.l.s4 1935823168
    %v1936 = vunpack.c.0.s8 %v1935
    %v1937 = vlaneseq
    %v1938 = vshrl.u32 %v1937, 7
    %v1939 = vsub.s32 %v1936, %v1938
    %v1940 = vrot.slane %v1932, %v1939
    %v1942 = vunpack.c.l.s4 1935823168
    %v1943 = vunpack.c.0.s8 %v1942
    %v1944 = vlaneseq
    %v1945 = vshrl.u32 %v1944, 7
    %v1946 = vsub.s32 %v1943, %v1945
    %v1947 = vrot.slane %v1933, %v1946
    %v1948 = vcombine.low %v1940, %v1947
    %v1950 = vunpack.c.l.s4 1935823168
    %v1951 = vunpack.c.0.s8 %v1950
    %v1952 = vlaneseq
    %v1953 = vshrl.u32 %v1952, 7
    %v1954 = vsub.s32 %v1951, %v1953
    %v1955 = vrot.slane %v1948, %v1954
    %v1956 = vcombine.low %v1635, %v245
    %v1958 = vunpack.c.l.s4 1935823168
    %v1959 = vunpack.c.0.s8 %v1958
    %v1960 = vlaneseq
    %v1961 = vshrl.u32 %v1960, 7
    %v1962 = vsub.s32 %v1959, %v1961
    %v1963 = vrot.slane %v1956, %v1962
    %v1964 = vcombine.low %v1517, %v1963
    %v1966 = vunpack.c.l.s4 1935823168
    %v1967 = vunpack.c.0.s8 %v1966
    %v1968 = vlaneseq
    %v1969 = vshrl.u32 %v1968, 7
    %v1970 = vsub.s32 %v1967, %v1969
    %v1971 = vrot.slane %v1964, %v1970
    %v1972 = vcombine.low %v580, %v268
    %v1974 = vunpack.c.l.s4 1935823168
    %v1975 = vunpack.c.0.s8 %v1974
    %v1976 = vlaneseq
    %v1977 = vshrl.u32 %v1976, 7
    %v1978 = vsub.s32 %v1975, %v1977
    %v1979 = vrot.slane %v1972, %v1978
    %v1980 = vcombine.low %v1979, %v1289
    %v1982 = vunpack.c.l.s4 1935823168
    %v1983 = vunpack.c.0.s8 %v1982
    %v1984 = vlaneseq
    %v1985 = vshrl.u32 %v1984, 7
    %v1986 = vsub.s32 %v1983, %v1985
    %v1987 = vrot.slane %v1980, %v1986
    %v1988 = vcombine.low %v290, %v582
    %v1990 = vunpack.c.l.s4 1935823168
    %v1991 = vunpack.c.0.s8 %v1990
    %v1992 = vlaneseq
    %v1993 = vshrl.u32 %v1992, 7
    %v1994 = vsub.s32 %v1991, %v1993
    %v1995 = vrot.slane %v1988, %v1994
    %v1996 = vcombine.low %v1995, %v521
    %v1998 = vunpack.c.l.s4 1935823168
    %v1999 = vunpack.c.0.s8 %v1998
    %v2000 = vlaneseq
    %v2001 = vshrl.u32 %v2000, 7
    %v2002 = vsub.s32 %v1999, %v2001
    %v2003 = vrot.slane %v1996, %v2002
    %v2004 = vcombine.low %v538, %v1329
    %v2006 = vunpack.c.l.s4 1935823168
    %v2007 = vunpack.c.0.s8 %v2006
    %v2008 = vlaneseq
    %v2009 = vshrl.u32 %v2008, 7
    %v2010 = vsub.s32 %v2007, %v2009
    %v2011 = vrot.slane %v2004, %v2010
    %v2012 = vcombine.low %v584, %v1429
    %v2013 = vcombine.low %v1428, %v1636
    %v2015 = vunpack.c.l.s4 1935823168
    %v2016 = vunpack.c.0.s8 %v2015
    %v2017 = vlaneseq
    %v2018 = vshrl.u32 %v2017, 7
    %v2019 = vsub.s32 %v2016, %v2018
    %v2020 = vrot.slane %v2012, %v2019
    %v2022 = vunpack.c.l.s4 1935823168
    %v2023 = vunpack.c.0.s8 %v2022
    %v2024 = vlaneseq
    %v2025 = vshrl.u32 %v2024, 7
    %v2026 = vsub.s32 %v2023, %v2025
    %v2027 = vrot.slane %v2013, %v2026
    %v2028 = vcombine.low %v2020, %v2027
    %v2030 = vunpack.c.l.s4 1935823168
    %v2031 = vunpack.c.0.s8 %v2030
    %v2032 = vlaneseq
    %v2033 = vshrl.u32 %v2032, 7
    %v2034 = vsub.s32 %v2031, %v2033
    %v2035 = vrot.slane %v2028, %v2034
    %2036 = vrot.lane.b32.xlu0 %v1907, 40
    %v2037 = vpop.permute.xlu0 %2036
    %2038 = vrot.lane.b32.xlu0 %v1915, 40
    %v2039 = vpop.permute.xlu0 %2038
    %2040 = vrot.lane.b32.xlu0 %v1931, 40
    %v2041 = vpop.permute.xlu0 %2040
    %2042 = vrot.lane.b32.xlu0 %v1955, 40
    %v2043 = vpop.permute.xlu0 %2042
    %2044 = vrot.lane.b32.xlu0 %v1971, 40
    %v2045 = vpop.permute.xlu0 %2044
    %2046 = vrot.lane.b32.xlu0 %v1987, 40
    %v2047 = vpop.permute.xlu0 %2046
    %2048 = vrot.lane.b32.xlu0 %v2003, 40
    %v2049 = vpop.permute.xlu0 %2048
    %2050 = vrot.lane.b32.xlu0 %v2011, 40
    %v2051 = vpop.permute.xlu0 %2050
    %2052 = vrot.lane.b32.xlu0 %v2035, 40
    %v2053 = vpop.permute.xlu0 %2052
    %vm2063 = vcmask 388416
    %2064 = vst.msk [vmem:[#allocation2] sm:$0xf] %vm2063, %v2037
    %2065 = vst.msk [vmem:[#allocation2 + $0x4] sm:$0xf] %vm2063, %v2039
    %2066 = vst.msk [vmem:[#allocation2 + $0x8] sm:$0xf] %vm2063, %v2041
    %2067 = vst.msk [vmem:[#allocation2 + $0xc] sm:$0xf] %vm2063, %v2043
    %2068 = vst.msk [vmem:[#allocation2 + $0x10] sm:$0xf] %vm2063, %v2045
    %2069 = vst.msk [vmem:[#allocation2 + $0x14] sm:$0xf] %vm2063, %v2047
    %2070 = vst.msk [vmem:[#allocation2 + $0x18] sm:$0xf] %vm2063, %v2049
    %2071 = vst.msk [vmem:[#allocation2 + $0x1c] sm:$0xf] %vm2063, %v2051
    %2072 = vst.msk [vmem:[#allocation2 + $0x20] sm:$0xf] %vm2063, %v2053
    %v2076 = vunpack.c.l.s4 1966171168
    %v2077 = vunpack.c.0.s8 %v2076
    %v2078 = vlaneseq
    %v2079 = vshrl.u32 %v2078, 7
    %v2080 = vsub.s32 %v2077, %v2079
    %v2081 = vrot.slane %v41, %v2080
    %v2082 = vcombine.high %v2081, %v2081
    %v2084 = vunpack.c.l.s4 1966171168
    %v2085 = vunpack.c.0.s8 %v2084
    %v2086 = vlaneseq
    %v2087 = vshrl.u32 %v2086, 7
    %v2088 = vsub.s32 %v2085, %v2087
    %v2089 = vrot.slane %v2081, %v2088
    %v2091 = vunpack.c.l.s4 1966171168
    %v2092 = vunpack.c.0.s8 %v2091
    %v2093 = vlaneseq
    %v2094 = vshrl.u32 %v2093, 7
    %v2095 = vsub.s32 %v2092, %v2094
    %v2096 = vrot.slane %v2082, %v2095
    %v2097 = vcombine.high %v2089, %v2089
    %v2099 = vunpack.c.l.s4 1966171168
    %v2100 = vunpack.c.0.s8 %v2099
    %v2101 = vlaneseq
    %v2102 = vshrl.u32 %v2101, 7
    %v2103 = vsub.s32 %v2100, %v2102
    %v2104 = vrot.slane %v49, %v2103
    %v2105 = vcombine.high %v2104, %v2104
    %v2107 = vunpack.c.l.s4 1966171168
    %v2108 = vunpack.c.0.s8 %v2107
    %v2109 = vlaneseq
    %v2110 = vshrl.u32 %v2109, 7
    %v2111 = vsub.s32 %v2108, %v2110
    %v2112 = vrot.slane %v2104, %v2111
    %v2114 = vunpack.c.l.s4 1966171168
    %v2115 = vunpack.c.0.s8 %v2114
    %v2116 = vlaneseq
    %v2117 = vshrl.u32 %v2116, 7
    %v2118 = vsub.s32 %v2115, %v2117
    %v2119 = vrot.slane %v2105, %v2118
    %v2120 = vcombine.high %v2112, %v2112
    %v2121 = vcombine.low %v122, %v130
    %v2123 = vunpack.c.l.s4 1935823168
    %v2124 = vunpack.c.0.s8 %v2123
    %v2125 = vlaneseq
    %v2126 = vshrl.u32 %v2125, 7
    %v2127 = vsub.s32 %v2124, %v2126
    %v2128 = vrot.slane %v2121, %v2127
    %v2129 = vcombine.low %v2128, %v1453
    %v2131 = vunpack.c.l.s4 1935823168
    %v2132 = vunpack.c.0.s8 %v2131
    %v2133 = vlaneseq
    %v2134 = vshrl.u32 %v2133, 7
    %v2135 = vsub.s32 %v2132, %v2134
    %v2136 = vrot.slane %v2129, %v2135
    %v2137 = vcombine.low %v152, %v168
    %v2139 = vunpack.c.l.s4 1935823168
    %v2140 = vunpack.c.0.s8 %v2139
    %v2141 = vlaneseq
    %v2142 = vshrl.u32 %v2141, 7
    %v2143 = vsub.s32 %v2140, %v2142
    %v2144 = vrot.slane %v2137, %v2143
    %v2145 = vcombine.low %v2144, %v1469
    %v2147 = vunpack.c.l.s4 1935823168
    %v2148 = vunpack.c.0.s8 %v2147
    %v2149 = vlaneseq
    %v2150 = vshrl.u32 %v2149, 7
    %v2151 = vsub.s32 %v2148, %v2150
    %v2152 = vrot.slane %v2145, %v2151
    %v2153 = vcombine.low %v1232, %v1486
    %v2155 = vunpack.c.l.s4 1935823168
    %v2156 = vunpack.c.0.s8 %v2155
    %v2157 = vlaneseq
    %v2158 = vshrl.u32 %v2157, 7
    %v2159 = vsub.s32 %v2156, %v2158
    %v2160 = vrot.slane %v2153, %v2159
    %v2161 = vcombine.low %v1398, %v1406
    %v2162 = vcombine.low %v1405, %v2089
    %v2164 = vunpack.c.l.s4 1935823168
    %v2165 = vunpack.c.0.s8 %v2164
    %v2166 = vlaneseq
    %v2167 = vshrl.u32 %v2166, 7
    %v2168 = vsub.s32 %v2165, %v2167
    %v2169 = vrot.slane %v2161, %v2168
    %v2171 = vunpack.c.l.s4 1935823168
    %v2172 = vunpack.c.0.s8 %v2171
    %v2173 = vlaneseq
    %v2174 = vshrl.u32 %v2173, 7
    %v2175 = vsub.s32 %v2172, %v2174
    %v2176 = vrot.slane %v2162, %v2175
    %v2177 = vcombine.low %v2169, %v2176
    %v2179 = vunpack.c.l.s4 1935823168
    %v2180 = vunpack.c.0.s8 %v2179
    %v2181 = vlaneseq
    %v2182 = vshrl.u32 %v2181, 7
    %v2183 = vsub.s32 %v2180, %v2182
    %v2184 = vrot.slane %v2177, %v2183
    %v2185 = vcombine.low %v2096, %v260
    %v2186 = vcombine.low %v2097, %v267
    %v2188 = vunpack.c.l.s4 1935823168
    %v2189 = vunpack.c.0.s8 %v2188
    %v2190 = vlaneseq
    %v2191 = vshrl.u32 %v2190, 7
    %v2192 = vsub.s32 %v2189, %v2191
    %v2193 = vrot.slane %v2185, %v2192
    %v2195 = vunpack.c.l.s4 1935823168
    %v2196 = vunpack.c.0.s8 %v2195
    %v2197 = vlaneseq
    %v2198 = vshrl.u32 %v2197, 7
    %v2199 = vsub.s32 %v2196, %v2198
    %v2200 = vrot.slane %v2186, %v2199
    %v2201 = vcombine.low %v2193, %v2200
    %v2203 = vunpack.c.l.s4 1935823168
    %v2204 = vunpack.c.0.s8 %v2203
    %v2205 = vlaneseq
    %v2206 = vshrl.u32 %v2205, 7
    %v2207 = vsub.s32 %v2204, %v2206
    %v2208 = vrot.slane %v2201, %v2207
    %v2209 = vcombine.low %v1296, %v1549
    %v2211 = vunpack.c.l.s4 1935823168
    %v2212 = vunpack.c.0.s8 %v2211
    %v2213 = vlaneseq
    %v2214 = vshrl.u32 %v2213, 7
    %v2215 = vsub.s32 %v2212, %v2214
    %v2216 = vrot.slane %v2209, %v2215
    %v2217 = vcombine.low %v306, %v314
    %v2219 = vunpack.c.l.s4 1935823168
    %v2220 = vunpack.c.0.s8 %v2219
    %v2221 = vlaneseq
    %v2222 = vshrl.u32 %v2221, 7
    %v2223 = vsub.s32 %v2220, %v2222
    %v2224 = vrot.slane %v2217, %v2223
    %v2225 = vcombine.low %v2224, %v1565
    %v2227 = vunpack.c.l.s4 1935823168
    %v2228 = vunpack.c.0.s8 %v2227
    %v2229 = vlaneseq
    %v2230 = vshrl.u32 %v2229, 7
    %v2231 = vsub.s32 %v2228, %v2230
    %v2232 = vrot.slane %v2225, %v2231
    %v2233 = vcombine.low %v336, %v1421
    %v2235 = vunpack.c.l.s4 1935823168
    %v2236 = vunpack.c.0.s8 %v2235
    %v2237 = vlaneseq
    %v2238 = vshrl.u32 %v2237, 7
    %v2239 = vsub.s32 %v2236, %v2238
    %v2240 = vrot.slane %v2233, %v2239
    %v2241 = vcombine.low %v2240, %v1582
    %v2243 = vunpack.c.l.s4 1935823168
    %v2244 = vunpack.c.0.s8 %v2243
    %v2245 = vlaneseq
    %v2246 = vshrl.u32 %v2245, 7
    %v2247 = vsub.s32 %v2244, %v2246
    %v2248 = vrot.slane %v2241, %v2247
    %v2249 = vcombine.low %v1429, %v2119
    %v2250 = vcombine.low %v2112, %v2120
    %v2252 = vunpack.c.l.s4 1935823168
    %v2253 = vunpack.c.0.s8 %v2252
    %v2254 = vlaneseq
    %v2255 = vshrl.u32 %v2254, 7
    %v2256 = vsub.s32 %v2253, %v2255
    %v2257 = vrot.slane %v2249, %v2256
    %v2259 = vunpack.c.l.s4 1935823168
    %v2260 = vunpack.c.0.s8 %v2259
    %v2261 = vlaneseq
    %v2262 = vshrl.u32 %v2261, 7
    %v2263 = vsub.s32 %v2260, %v2262
    %v2264 = vrot.slane %v2250, %v2263
    %v2265 = vcombine.low %v2257, %v2264
    %v2267 = vunpack.c.l.s4 1935823168
    %v2268 = vunpack.c.0.s8 %v2267
    %v2269 = vlaneseq
    %v2270 = vshrl.u32 %v2269, 7
    %v2271 = vsub.s32 %v2268, %v2270
    %v2272 = vrot.slane %v2265, %v2271
    %2273 = vrot.lane.b32.xlu0 %v2136, 48
    %v2274 = vpop.permute.xlu0 %2273
    %2275 = vrot.lane.b32.xlu0 %v2152, 48
    %v2276 = vpop.permute.xlu0 %2275
    %2277 = vrot.lane.b32.xlu0 %v2160, 48
    %v2278 = vpop.permute.xlu0 %2277
    %2279 = vrot.lane.b32.xlu0 %v2184, 48
    %v2280 = vpop.permute.xlu0 %2279
    %2281 = vrot.lane.b32.xlu0 %v2208, 48
    %v2282 = vpop.permute.xlu0 %2281
    %2283 = vrot.lane.b32.xlu0 %v2216, 48
    %v2284 = vpop.permute.xlu0 %2283
    %2285 = vrot.lane.b32.xlu0 %v2232, 48
    %v2286 = vpop.permute.xlu0 %2285
    %2287 = vrot.lane.b32.xlu0 %v2248, 48
    %v2288 = vpop.permute.xlu0 %2287
    %2289 = vrot.lane.b32.xlu0 %v2272, 48
    %v2290 = vpop.permute.xlu0 %2289
    %vm2300 = vcmask 454016
    %2301 = vst.msk [vmem:[#allocation2] sm:$0xf] %vm2300, %v2274
    %2302 = vst.msk [vmem:[#allocation2 + $0x4] sm:$0xf] %vm2300, %v2276
    %2303 = vst.msk [vmem:[#allocation2 + $0x8] sm:$0xf] %vm2300, %v2278
    %2304 = vst.msk [vmem:[#allocation2 + $0xc] sm:$0xf] %vm2300, %v2280
    %2305 = vst.msk [vmem:[#allocation2 + $0x10] sm:$0xf] %vm2300, %v2282
    %2306 = vst.msk [vmem:[#allocation2 + $0x14] sm:$0xf] %vm2300, %v2284
    %2307 = vst.msk [vmem:[#allocation2 + $0x18] sm:$0xf] %vm2300, %v2286
    %2308 = vst.msk [vmem:[#allocation2 + $0x1c] sm:$0xf] %vm2300, %v2288
    %2309 = vst.msk [vmem:[#allocation2 + $0x20] sm:$0xf] %vm2300, %v2290
    %v2310 = vcombine.high %v2096, %v2096
    %v2311 = vcombine.high %v2119, %v2119
    %v2313 = vshrl.u32 %v2089, 16
    %v2315 = vrot.slane %v2313, 7
    %v2316 = vrot.slane %v2315, 1
    %v2318 = vshll.u32 %v2096, 16
    %v2320 = vsel %vm599, %v2316, %v2318
    %v2321 = vshrl.u32 %v2096, 16
    %v2323 = vrot.slane %v2321, 7
    %v2324 = vrot.slane %v2323, 1
    %v2326 = vshll.u32 %v2097, 16
    %v2328 = vsel %vm599, %v2324, %v2326
    %v2329 = vshrl.u32 %v2097, 16
    %v2331 = vrot.slane %v2329, 7
    %v2332 = vrot.slane %v2331, 1
    %v2334 = vshll.u32 %v2310, 16
    %v2336 = vsel %vm599, %v2332, %v2334
    %v2338 = vshrl.u32 %v2112, 16
    %v2340 = vrot.slane %v2338, 7
    %v2341 = vrot.slane %v2340, 1
    %v2343 = vshll.u32 %v2119, 16
    %v2345 = vsel %vm599, %v2341, %v2343
    %v2346 = vshrl.u32 %v2119, 16
    %v2348 = vrot.slane %v2346, 7
    %v2349 = vrot.slane %v2348, 1
    %v2351 = vshll.u32 %v2120, 16
    %v2353 = vsel %vm599, %v2349, %v2351
    %v2354 = vshrl.u32 %v2120, 16
    %v2356 = vrot.slane %v2354, 7
    %v2357 = vrot.slane %v2356, 1
    %v2359 = vshll.u32 %v2311, 16
    %v2361 = vsel %vm599, %v2357, %v2359
    %v2362 = vcombine.low %v658, %v674
    %v2364 = vunpack.c.l.s4 1935823168
    %v2365 = vunpack.c.0.s8 %v2364
    %v2366 = vlaneseq
    %v2367 = vshrl.u32 %v2366, 7
    %v2368 = vsub.s32 %v2365, %v2367
    %v2369 = vrot.slane %v2362, %v2368
    %v2370 = vcombine.low %v2369, %v1710
    %v2372 = vunpack.c.l.s4 1935823168
    %v2373 = vunpack.c.0.s8 %v2372
    %v2374 = vlaneseq
    %v2375 = vshrl.u32 %v2374, 7
    %v2376 = vsub.s32 %v2373, %v2375
    %v2377 = vrot.slane %v2370, %v2376
    %v2378 = vcombine.low %v691, %v708
    %v2380 = vunpack.c.l.s4 1935823168
    %v2381 = vunpack.c.0.s8 %v2380
    %v2382 = vlaneseq
    %v2383 = vshrl.u32 %v2382, 7
    %v2384 = vsub.s32 %v2381, %v2383
    %v2385 = vrot.slane %v2378, %v2384
    %v2386 = vcombine.low %v2385, %v1726
    %v2388 = vunpack.c.l.s4 1935823168
    %v2389 = vunpack.c.0.s8 %v2388
    %v2390 = vlaneseq
    %v2391 = vshrl.u32 %v2390, 7
    %v2392 = vsub.s32 %v2389, %v2391
    %v2393 = vrot.slane %v2386, %v2392
    %v2394 = vcombine.low %v724, %v741
    %v2396 = vunpack.c.l.s4 1935823168
    %v2397 = vunpack.c.0.s8 %v2396
    %v2398 = vlaneseq
    %v2399 = vshrl.u32 %v2398, 7
    %v2400 = vsub.s32 %v2397, %v2399
    %v2401 = vrot.slane %v2394, %v2400
    %v2402 = vcombine.low %v2401, %v1743
    %v2404 = vunpack.c.l.s4 1935823168
    %v2405 = vunpack.c.0.s8 %v2404
    %v2406 = vlaneseq
    %v2407 = vshrl.u32 %v2406, 7
    %v2408 = vsub.s32 %v2405, %v2407
    %v2409 = vrot.slane %v2402, %v2408
    %v2410 = vcombine.low %v1645, %v1661
    %v2411 = vcombine.low %v1653, %v2320
    %v2413 = vunpack.c.l.s4 1935823168
    %v2414 = vunpack.c.0.s8 %v2413
    %v2415 = vlaneseq
    %v2416 = vshrl.u32 %v2415, 7
    %v2417 = vsub.s32 %v2414, %v2416
    %v2418 = vrot.slane %v2410, %v2417
    %v2420 = vunpack.c.l.s4 1935823168
    %v2421 = vunpack.c.0.s8 %v2420
    %v2422 = vlaneseq
    %v2423 = vshrl.u32 %v2422, 7
    %v2424 = vsub.s32 %v2421, %v2423
    %v2425 = vrot.slane %v2411, %v2424
    %v2426 = vcombine.low %v2418, %v2425
    %v2428 = vunpack.c.l.s4 1935823168
    %v2429 = vunpack.c.0.s8 %v2428
    %v2430 = vlaneseq
    %v2431 = vshrl.u32 %v2430, 7
    %v2432 = vsub.s32 %v2429, %v2431
    %v2433 = vrot.slane %v2426, %v2432
    %v2434 = vcombine.low %v2328, %v808
    %v2435 = vcombine.low %v2336, %v816
    %v2437 = vunpack.c.l.s4 1935823168
    %v2438 = vunpack.c.0.s8 %v2437
    %v2439 = vlaneseq
    %v2440 = vshrl.u32 %v2439, 7
    %v2441 = vsub.s32 %v2438, %v2440
    %v2442 = vrot.slane %v2434, %v2441
    %v2444 = vunpack.c.l.s4 1935823168
    %v2445 = vunpack.c.0.s8 %v2444
    %v2446 = vlaneseq
    %v2447 = vshrl.u32 %v2446, 7
    %v2448 = vsub.s32 %v2445, %v2447
    %v2449 = vrot.slane %v2435, %v2448
    %v2450 = vcombine.low %v2442, %v2449
    %v2452 = vunpack.c.l.s4 1935823168
    %v2453 = vunpack.c.0.s8 %v2452
    %v2454 = vlaneseq
    %v2455 = vshrl.u32 %v2454, 7
    %v2456 = vsub.s32 %v2453, %v2455
    %v2457 = vrot.slane %v2450, %v2456
    %v2458 = vcombine.low %v824, %v841
    %v2460 = vunpack.c.l.s4 1935823168
    %v2461 = vunpack.c.0.s8 %v2460
    %v2462 = vlaneseq
    %v2463 = vshrl.u32 %v2462, 7
    %v2464 = vsub.s32 %v2461, %v2463
    %v2465 = vrot.slane %v2458, %v2464
    %v2466 = vcombine.low %v2465, %v1806
    %v2468 = vunpack.c.l.s4 1935823168
    %v2469 = vunpack.c.0.s8 %v2468
    %v2470 = vlaneseq
    %v2471 = vshrl.u32 %v2470, 7
    %v2472 = vsub.s32 %v2469, %v2471
    %v2473 = vrot.slane %v2466, %v2472
    %v2474 = vcombine.low %v858, %v874
    %v2476 = vunpack.c.l.s4 1935823168
    %v2477 = vunpack.c.0.s8 %v2476
    %v2478 = vlaneseq
    %v2479 = vshrl.u32 %v2478, 7
    %v2480 = vsub.s32 %v2477, %v2479
    %v2481 = vrot.slane %v2474, %v2480
    %v2482 = vcombine.low %v2481, %v1822
    %v2484 = vunpack.c.l.s4 1935823168
    %v2485 = vunpack.c.0.s8 %v2484
    %v2486 = vlaneseq
    %v2487 = vshrl.u32 %v2486, 7
    %v2488 = vsub.s32 %v2485, %v2487
    %v2489 = vrot.slane %v2482, %v2488
    %v2490 = vcombine.low %v891, %v1670
    %v2492 = vunpack.c.l.s4 1935823168
    %v2493 = vunpack.c.0.s8 %v2492
    %v2494 = vlaneseq
    %v2495 = vshrl.u32 %v2494, 7
    %v2496 = vsub.s32 %v2493, %v2495
    %v2497 = vrot.slane %v2490, %v2496
    %v2498 = vcombine.low %v2497, %v1839
    %v2500 = vunpack.c.l.s4 1935823168
    %v2501 = vunpack.c.0.s8 %v2500
    %v2502 = vlaneseq
    %v2503 = vshrl.u32 %v2502, 7
    %v2504 = vsub.s32 %v2501, %v2503
    %v2505 = vrot.slane %v2498, %v2504
    %v2506 = vcombine.low %v1686, %v2353
    %v2507 = vcombine.low %v2345, %v2361
    %v2509 = vunpack.c.l.s4 1935823168
    %v2510 = vunpack.c.0.s8 %v2509
    %v2511 = vlaneseq
    %v2512 = vshrl.u32 %v2511, 7
    %v2513 = vsub.s32 %v2510, %v2512
    %v2514 = vrot.slane %v2506, %v2513
    %v2516 = vunpack.c.l.s4 1935823168
    %v2517 = vunpack.c.0.s8 %v2516
    %v2518 = vlaneseq
    %v2519 = vshrl.u32 %v2518, 7
    %v2520 = vsub.s32 %v2517, %v2519
    %v2521 = vrot.slane %v2507, %v2520
    %v2522 = vcombine.low %v2514, %v2521
    %v2524 = vunpack.c.l.s4 1935823168
    %v2525 = vunpack.c.0.s8 %v2524
    %v2526 = vlaneseq
    %v2527 = vshrl.u32 %v2526, 7
    %v2528 = vsub.s32 %v2525, %v2527
    %v2529 = vrot.slane %v2522, %v2528
    %2530 = vrot.lane.b32.xlu0 %v2377, 56
    %v2531 = vpop.permute.xlu0 %2530
    %2532 = vrot.lane.b32.xlu0 %v2393, 56
    %v2533 = vpop.permute.xlu0 %2532
    %2534 = vrot.lane.b32.xlu0 %v2409, 56
    %v2535 = vpop.permute.xlu0 %2534
    %2536 = vrot.lane.b32.xlu0 %v2433, 56
    %v2537 = vpop.permute.xlu0 %2536
    %2538 = vrot.lane.b32.xlu0 %v2457, 56
    %v2539 = vpop.permute.xlu0 %2538
    %2540 = vrot.lane.b32.xlu0 %v2473, 56
    %v2541 = vpop.permute.xlu0 %2540
    %2542 = vrot.lane.b32.xlu0 %v2489, 56
    %v2543 = vpop.permute.xlu0 %2542
    %2544 = vrot.lane.b32.xlu0 %v2505, 56
    %v2545 = vpop.permute.xlu0 %2544
    %2546 = vrot.lane.b32.xlu0 %v2529, 56
    %v2547 = vpop.permute.xlu0 %2546
    %vm2557 = vcmask 519616
    %2558 = vst.msk [vmem:[#allocation2] sm:$0xf] %vm2557, %v2531
    %2559 = vst.msk [vmem:[#allocation2 + $0x4] sm:$0xf] %vm2557, %v2533
    %2560 = vst.msk [vmem:[#allocation2 + $0x8] sm:$0xf] %vm2557, %v2535
    %2561 = vst.msk [vmem:[#allocation2 + $0xc] sm:$0xf] %vm2557, %v2537
    %2562 = vst.msk [vmem:[#allocation2 + $0x10] sm:$0xf] %vm2557, %v2539
    %2563 = vst.msk [vmem:[#allocation2 + $0x14] sm:$0xf] %vm2557, %v2541
    %2564 = vst.msk [vmem:[#allocation2 + $0x18] sm:$0xf] %vm2557, %v2543
    %2565 = vst.msk [vmem:[#allocation2 + $0x1c] sm:$0xf] %vm2557, %v2545
    %2566 = vst.msk [vmem:[#allocation2 + $0x20] sm:$0xf] %vm2557, %v2547
    %v2567 = vcombine.low %v129, %v575
    %v2569 = vunpack.c.l.s4 1935823168
    %v2570 = vunpack.c.0.s8 %v2569
    %v2571 = vlaneseq
    %v2572 = vshrl.u32 %v2571, 7
    %v2573 = vsub.s32 %v2570, %v2572
    %v2574 = vrot.slane %v2567, %v2573
    %v2575 = vcombine.low %v2574, %v394
    %v2577 = vunpack.c.l.s4 1935823168
    %v2578 = vunpack.c.0.s8 %v2577
    %v2579 = vlaneseq
    %v2580 = vshrl.u32 %v2579, 7
    %v2581 = vsub.s32 %v2578, %v2580
    %v2582 = vrot.slane %v2575, %v2581
    %v2583 = vcombine.low %v1469, %v1923
    %v2585 = vunpack.c.l.s4 1935823168
    %v2586 = vunpack.c.0.s8 %v2585
    %v2587 = vlaneseq
    %v2588 = vshrl.u32 %v2587, 7
    %v2589 = vsub.s32 %v2586, %v2588
    %v2590 = vrot.slane %v2583, %v2589
    %v2591 = vcombine.low %v577, %v199
    %v2593 = vunpack.c.l.s4 1935823168
    %v2594 = vunpack.c.0.s8 %v2593
    %v2595 = vlaneseq
    %v2596 = vshrl.u32 %v2595, 7
    %v2597 = vsub.s32 %v2594, %v2596
    %v2598 = vrot.slane %v2591, %v2597
    %v2599 = vcombine.low %v2598, %v1940
    %v2601 = vunpack.c.l.s4 1935823168
    %v2602 = vunpack.c.0.s8 %v2601
    %v2603 = vlaneseq
    %v2604 = vshrl.u32 %v2603, 7
    %v2605 = vsub.s32 %v2602, %v2604
    %v2606 = vrot.slane %v2599, %v2605
    %v2607 = vcombine.low %v1405, %v1635
    %v2608 = vcombine.low %v1406, %v2096
    %v2610 = vunpack.c.l.s4 1935823168
    %v2611 = vunpack.c.0.s8 %v2610
    %v2612 = vlaneseq
    %v2613 = vshrl.u32 %v2612, 7
    %v2614 = vsub.s32 %v2611, %v2613
    %v2615 = vrot.slane %v2607, %v2614
    %v2617 = vunpack.c.l.s4 1935823168
    %v2618 = vunpack.c.0.s8 %v2617
    %v2619 = vlaneseq
    %v2620 = vshrl.u32 %v2619, 7
    %v2621 = vsub.s32 %v2618, %v2620
    %v2622 = vrot.slane %v2608, %v2621
    %v2623 = vcombine.low %v2615, %v2622
    %v2625 = vunpack.c.l.s4 1935823168
    %v2626 = vunpack.c.0.s8 %v2625
    %v2627 = vlaneseq
    %v2628 = vshrl.u32 %v2627, 7
    %v2629 = vsub.s32 %v2626, %v2628
    %v2630 = vrot.slane %v2623, %v2629
    %v2631 = vcombine.low %v2310, %v268
    %v2633 = vunpack.c.l.s4 1935823168
    %v2634 = vunpack.c.0.s8 %v2633
    %v2635 = vlaneseq
    %v2636 = vshrl.u32 %v2635, 7
    %v2637 = vsub.s32 %v2634, %v2636
    %v2638 = vrot.slane %v2631, %v2637
    %v2639 = vcombine.low %v2200, %v2638
    %v2641 = vunpack.c.l.s4 1935823168
    %v2642 = vunpack.c.0.s8 %v2641
    %v2643 = vlaneseq
    %v2644 = vshrl.u32 %v2643, 7
    %v2645 = vsub.s32 %v2642, %v2644
    %v2646 = vrot.slane %v2639, %v2645
    %v2647 = vcombine.low %v581, %v291
    %v2649 = vunpack.c.l.s4 1935823168
    %v2650 = vunpack.c.0.s8 %v2649
    %v2651 = vlaneseq
    %v2652 = vshrl.u32 %v2651, 7
    %v2653 = vsub.s32 %v2650, %v2652
    %v2654 = vrot.slane %v2647, %v2653
    %v2655 = vcombine.low %v2654, %v1995
    %v2657 = vunpack.c.l.s4 1935823168
    %v2658 = vunpack.c.0.s8 %v2657
    %v2659 = vlaneseq
    %v2660 = vshrl.u32 %v2659, 7
    %v2661 = vsub.s32 %v2658, %v2660
    %v2662 = vrot.slane %v2655, %v2661
    %v2663 = vcombine.low %v313, %v583
    %v2665 = vunpack.c.l.s4 1935823168
    %v2666 = vunpack.c.0.s8 %v2665
    %v2667 = vlaneseq
    %v2668 = vshrl.u32 %v2667, 7
    %v2669 = vsub.s32 %v2666, %v2668
    %v2670 = vrot.slane %v2663, %v2669
    %v2671 = vcombine.low %v2670, %v538
    %v2673 = vunpack.c.l.s4 1935823168
    %v2674 = vunpack.c.0.s8 %v2673
    %v2675 = vlaneseq
    %v2676 = vshrl.u32 %v2675, 7
    %v2677 = vsub.s32 %v2674, %v2676
    %v2678 = vrot.slane %v2671, %v2677
    %v2679 = vcombine.low %v1582, %v2020
    %v2681 = vunpack.c.l.s4 1935823168
    %v2682 = vunpack.c.0.s8 %v2681
    %v2683 = vlaneseq
    %v2684 = vshrl.u32 %v2683, 7
    %v2685 = vsub.s32 %v2682, %v2684
    %v2686 = vrot.slane %v2679, %v2685
    %v2687 = vcombine.low %v1636, %v2120
    %v2688 = vcombine.low %v2119, %v2311
    %v2690 = vunpack.c.l.s4 1935823168
    %v2691 = vunpack.c.0.s8 %v2690
    %v2692 = vlaneseq
    %v2693 = vshrl.u32 %v2692, 7
    %v2694 = vsub.s32 %v2691, %v2693
    %v2695 = vrot.slane %v2687, %v2694
    %v2697 = vunpack.c.l.s4 1935823168
    %v2698 = vunpack.c.0.s8 %v2697
    %v2699 = vlaneseq
    %v2700 = vshrl.u32 %v2699, 7
    %v2701 = vsub.s32 %v2698, %v2700
    %v2702 = vrot.slane %v2688, %v2701
    %v2703 = vcombine.low %v2695, %v2702
    %v2705 = vunpack.c.l.s4 1935823168
    %v2706 = vunpack.c.0.s8 %v2705
    %v2707 = vlaneseq
    %v2708 = vshrl.u32 %v2707, 7
    %v2709 = vsub.s32 %v2706, %v2708
    %v2710 = vrot.slane %v2703, %v2709
    %2711 = vrot.lane.b32.xlu0 %v2582, 64
    %v2712 = vpop.permute.xlu0 %2711
    %2713 = vrot.lane.b32.xlu0 %v2590, 64
    %v2714 = vpop.permute.xlu0 %2713
    %2715 = vrot.lane.b32.xlu0 %v2606, 64
    %v2716 = vpop.permute.xlu0 %2715
    %2717 = vrot.lane.b32.xlu0 %v2630, 64
    %v2718 = vpop.permute.xlu0 %2717
    %2719 = vrot.lane.b32.xlu0 %v2646, 64
    %v2720 = vpop.permute.xlu0 %2719
    %2721 = vrot.lane.b32.xlu0 %v2662, 64
    %v2722 = vpop.permute.xlu0 %2721
    %2723 = vrot.lane.b32.xlu0 %v2678, 64
    %v2724 = vpop.permute.xlu0 %2723
    %2725 = vrot.lane.b32.xlu0 %v2686, 64
    %v2726 = vpop.permute.xlu0 %2725
    %2727 = vrot.lane.b32.xlu0 %v2710, 64
    %v2728 = vpop.permute.xlu0 %2727
    %vm2738 = vcmask 585216
    %2739 = vst.msk [vmem:[#allocation2] sm:$0xf] %vm2738, %v2712
    %2740 = vst.msk [vmem:[#allocation2 + $0x4] sm:$0xf] %vm2738, %v2714
    %2741 = vst.msk [vmem:[#allocation2 + $0x8] sm:$0xf] %vm2738, %v2716
    %2742 = vst.msk [vmem:[#allocation2 + $0xc] sm:$0xf] %vm2738, %v2718
    %2743 = vst.msk [vmem:[#allocation2 + $0x10] sm:$0xf] %vm2738, %v2720
    %2744 = vst.msk [vmem:[#allocation2 + $0x14] sm:$0xf] %vm2738, %v2722
    %2745 = vst.msk [vmem:[#allocation2 + $0x18] sm:$0xf] %vm2738, %v2724
    %2746 = vst.msk [vmem:[#allocation2 + $0x1c] sm:$0xf] %vm2738, %v2726
    %2747 = vst.msk [vmem:[#allocation2 + $0x20] sm:$0xf] %vm2738, %v2728
    %v2748 = vld [vmem:[#allocation2] sm:$0xf]
    %v2749 = vld [vmem:[#allocation2 + $0x4] sm:$0xf]
    %v2750 = vld [vmem:[#allocation2 + $0x8] sm:$0xf]
    %v2751 = vld [vmem:[#allocation2 + $0xc] sm:$0xf]
    %v2752 = vld [vmem:[#allocation2 + $0x10] sm:$0xf]
    %v2753 = vld [vmem:[#allocation2 + $0x14] sm:$0xf]
    %v2754 = vld [vmem:[#allocation2 + $0x18] sm:$0xf]
    %v2755 = vld [vmem:[#allocation2 + $0x1c] sm:$0xf]
    %v2756 = vld [vmem:[#allocation2 + $0x20] sm:$0xf]
    %v2757 = vld [vmem:[%s1] sm:$0xf]
    %v2758 = vld [vmem:[%s1 + $0x4] sm:$0xf]
    %v2759 = vld [vmem:[%s1 + $0x8] sm:$0xf]
    %v2760 = vld [vmem:[%s1 + $0xc] sm:$0xf]
    %v2761 = vld [vmem:[%s1 + $0x10] sm:$0xf]
    %v2762 = vld [vmem:[%s1 + $0x14] sm:$0xf]
    %v2763 = vld [vmem:[%s1 + $0x18] sm:$0xf]
    %v2764 = vld [vmem:[%s1 + $0x1c] sm:$0xf]
    %v2765 = vld [vmem:[%s1 + $0x20] sm:$0xf]
    %v2766 = vld [vmem:[%s2] sm:$0x1]
    %v2768 = vlaneseq
    %v2769 = vshrl.u32 %v2768, 7
    %v2770 = vsub.s32 0, %v2769
    %v2771 = vrot.slane %v2766, %v2770
    %v2782 = vunpack.c.l.b16 %v2748
    %v2783 = vunpack.c.l.b16 %v2749
    %v2784 = vunpack.c.l.b16 %v2750
    %v2785 = vunpack.c.l.b16 %v2751
    %v2786 = vunpack.c.l.b16 %v2752
    %v2787 = vunpack.c.l.b16 %v2753
    %v2788 = vunpack.c.l.b16 %v2754
    %v2789 = vunpack.c.l.b16 %v2755
    %v2790 = vunpack.c.l.b16 %v2756
    %v2791 = vpack.c.b16 %v2783, %v2782
    %v2792 = vpack.c.b16 %v2785, %v2784
    %v2793 = vpack.c.b16 %v2787, %v2786
    %v2794 = vpack.c.b16 %v2789, %v2788
    %v2795 = vpack.c.b16 %v2790, %v2790
    %v2805 = vunpack.c.l.b16 %v2757
    %v2806 = vunpack.c.l.b16 %v2758
    %v2807 = vunpack.c.l.b16 %v2759
    %v2808 = vunpack.c.l.b16 %v2760
    %v2809 = vunpack.c.l.b16 %v2761
    %v2810 = vunpack.c.l.b16 %v2762
    %v2811 = vunpack.c.l.b16 %v2763
    %v2812 = vunpack.c.l.b16 %v2764
    %v2813 = vunpack.c.l.b16 %v2765
    %v2814 = vpack.c.b16 %v2806, %v2805
    %v2815 = vpack.c.b16 %v2808, %v2807
    %v2816 = vpack.c.b16 %v2810, %v2809
    %v2817 = vpack.c.b16 %v2812, %v2811
    %v2818 = vpack.c.b16 %v2813, %v2813
    %vm2823 = vcmask 588800
    %v2825 = vsel %vm2823, %v2791, 0
    %v2828 = vsel %vm2823, %v2792, 0
    %v2831 = vsel %vm2823, %v2793, 0
    %v2834 = vsel %vm2823, %v2794, 0
    %v2837 = vsel %vm2823, %v2795, 0
    %vm2839 = vcmask 1043456
    %v2841 = vsel %vm2839, %v2818, 0
    %2843 = vmatprep.subr.bf16.mxu0 0
    %2844 = vmatpush1.bf16.msra.mxu0 0
    %2845 = vmatprep.subr.bf16.mxu0 0
    %2846 = vmatpush1.bf16.msra.mxu0 0
    %2847 = vmatprep.subr.bf16.mxu0 0
    %2848 = vmatpush1.bf16.msra.mxu0 0
    %2849 = vmatprep.subr.bf16.mxu0 0
    %2850 = vmatpush1.bf16.msra.mxu0 %v2841
    %2851 = vmatprep.subr.bf16.mxu0 0
    %2852 = vmatpush1.bf16.msra.mxu0 %v2817
    %2853 = vmatprep.subr.bf16.mxu0 0
    %2854 = vmatpush1.bf16.msra.mxu0 %v2816
    %2855 = vmatprep.subr.bf16.mxu0 0
    %2856 = vmatpush1.bf16.msra.mxu0 %v2815
    %2857 = vmatprep.subr.bf16.mxu0 0
    %2858 = vmatpush1.bf16.msra.mxu0 %v2814
    %2859 = vmatprep.subr.bf16.mxu0 0
    %2860 = vmatpush2.bf16.msra.mxu0 0
    %2861 = vmatprep.subr.bf16.mxu0 0
    %2862 = vmatpush2.bf16.msra.mxu0 0
    %2863 = vmatprep.subr.bf16.mxu0 0
    %2864 = vmatpush2.bf16.msra.mxu0 0
    %2865 = vmatprep.subr.bf16.mxu0 0
    %2866 = vmatpush2.bf16.msra.mxu0 0
    %2867 = vmatprep.subr.bf16.mxu0 0
    %2868 = vmatpush2.bf16.msra.mxu0 0
    %2869 = vmatprep.subr.bf16.mxu0 0
    %2870 = vmatpush2.bf16.msra.mxu0 0
    %2871 = vmatprep.subr.bf16.mxu0 0
    %2872 = vmatpush2.bf16.msra.mxu0 0
    %2873 = vmatprep.subr.bf16.mxu0 0
    %2874 = vmatpush2.bf16.msra.mxu0 0
    %2875 = vmatprep.mubr.bf16.mxu0 0
    %2876 = vmatmul.mubr.bf16.gmra.mxu0 %v2825
    %v2877 = vpop.f32.mrf.mxu0
    %v2878 = vadd.f32 %v2771, %v2877
    %v2879 = vpop.f32.mrf.mxu0
    %v2880 = vpop.f32.mrf.mxu0
    %v2881 = vadd.f32 %v2771, %v2880
    %v2882 = vpop.f32.mrf.mxu0
    %2883 = vmatprep.mubr.bf16.mxu0 0
    %2884 = vmatmul.mubr.bf16.gmra.mxu0 %v2828
    %v2885 = vpop.f32.mrf.mxu0
    %v2886 = vadd.f32 %v2771, %v2885
    %v2887 = vpop.f32.mrf.mxu0
    %v2888 = vpop.f32.mrf.mxu0
    %v2889 = vadd.f32 %v2771, %v2888
    %v2890 = vpop.f32.mrf.mxu0
    %2891 = vmatprep.mubr.bf16.mxu0 0
    %2892 = vmatmul.mubr.bf16.gmra.mxu0 %v2831
    %v2893 = vpop.f32.mrf.mxu0
    %v2894 = vadd.f32 %v2771, %v2893
    %v2895 = vpop.f32.mrf.mxu0
    %v2896 = vpop.f32.mrf.mxu0
    %v2897 = vadd.f32 %v2771, %v2896
    %v2898 = vpop.f32.mrf.mxu0
    %2899 = vmatprep.mubr.bf16.mxu0 0
    %2900 = vmatmul.mubr.bf16.gmra.mxu0 %v2834
    %v2901 = vpop.f32.mrf.mxu0
    %v2902 = vadd.f32 %v2771, %v2901
    %v2903 = vpop.f32.mrf.mxu0
    %v2904 = vpop.f32.mrf.mxu0
    %v2905 = vadd.f32 %v2771, %v2904
    %v2906 = vpop.f32.mrf.mxu0
    %2907 = vmatprep.mubr.bf16.mxu0 0
    %2908 = vmatmul.mubr.bf16.gmra.mxu0 %v2837
    %v2909 = vpop.f32.mrf.mxu0
    %v2910 = vadd.f32 %v2771, %v2909
    %v2911 = vpop.f32.mrf.mxu0
    %v2912 = vpop.f32.mrf.mxu0
    %v2913 = vpop.f32.mrf.mxu0
    %2914 = vdwg.mxu0
    %v2915 = vmax.f32 %v2878, 0.0
    %v2916 = vmax.f32 %v2881, 0.0
    %v2917 = vmax.f32 %v2886, 0.0
    %v2918 = vmax.f32 %v2889, 0.0
    %v2919 = vmax.f32 %v2894, 0.0
    %v2920 = vmax.f32 %v2897, 0.0
    %v2921 = vmax.f32 %v2902, 0.0
    %v2922 = vmax.f32 %v2905, 0.0
    %v2923 = vmax.f32 %v2910, 0.0
    %v2924 = vld [vmem:[%s7] sm:$0xff]
    %v2925 = vld [vmem:[%s7 + $0x8] sm:$0xff]
    %v2926 = vld [vmem:[%s7 + $0x10] sm:$0xff]
    %v2927 = vld [vmem:[%s7 + $0x18] sm:$0xff]
    %v2928 = vld [vmem:[%s7 + $0x20] sm:$0xff]
    %v2929 = vld [vmem:[%s7 + $0x28] sm:$0xff]
    %v2930 = vld [vmem:[%s7 + $0x30] sm:$0xff]
    %v2931 = vld [vmem:[%s7 + $0x38] sm:$0xff]
    %v2932 = vld [vmem:[%s7 + $0x40] sm:$0xff]
    %2934 = vset.pattern.permute.xlu0 0
    %2935 = vperm.xlu0 %2934, %v2924
    %v2936 = vpop.permute.xlu0 %2935
    %2939 = vset.pattern.permute.xlu0 0
    %2940 = vperm.xlu0 %2939, %v2925
    %v2941 = vpop.permute.xlu0 %2940
    %2944 = vset.pattern.permute.xlu0 0
    %2945 = vperm.xlu0 %2944, %v2926
    %v2946 = vpop.permute.xlu0 %2945
    %2949 = vset.pattern.permute.xlu0 0
    %2950 = vperm.xlu0 %2949, %v2927
    %v2951 = vpop.permute.xlu0 %2950
    %2954 = vset.pattern.permute.xlu0 0
    %2955 = vperm.xlu0 %2954, %v2928
    %v2956 = vpop.permute.xlu0 %2955
    %2959 = vset.pattern.permute.xlu0 0
    %2960 = vperm.xlu0 %2959, %v2929
    %v2961 = vpop.permute.xlu0 %2960
    %2964 = vset.pattern.permute.xlu0 0
    %2965 = vperm.xlu0 %2964, %v2930
    %v2966 = vpop.permute.xlu0 %2965
    %2969 = vset.pattern.permute.xlu0 0
    %2970 = vperm.xlu0 %2969, %v2931
    %v2971 = vpop.permute.xlu0 %2970
    %2974 = vset.pattern.permute.xlu0 0
    %2975 = vperm.xlu0 %2974, %v2932
    %v2976 = vpop.permute.xlu0 %2975
    %v2978 = vmul.f32 %v2915, %v2936
    %v2979 = vmul.f32 %v2916, %v2941
    %v2980 = vmul.f32 %v2917, %v2946
    %v2981 = vmul.f32 %v2918, %v2951
    %v2982 = vmul.f32 %v2919, %v2956
    %v2983 = vmul.f32 %v2920, %v2961
    %v2984 = vmul.f32 %v2921, %v2966
    %v2985 = vmul.f32 %v2922, %v2971
    %v2986 = vmul.f32 %v2923, %v2976
    %vm2987 = vcmask 64512
    %v2988 = vsel %vm2987, %v2978, 0.0
    %v2989 = vsel %vm2987, %v2979, 0.0
    %v2990 = vadd.f32 %v2988, %v2989
    %v2991 = vsel %vm2987, %v2980, 0.0
    %v2992 = vadd.f32 %v2990, %v2991
    %v2993 = vsel %vm2987, %v2981, 0.0
    %v2994 = vadd.f32 %v2992, %v2993
    %v2995 = vsel %vm2987, %v2982, 0.0
    %v2996 = vadd.f32 %v2994, %v2995
    %v2997 = vsel %vm2987, %v2983, 0.0
    %v2998 = vadd.f32 %v2996, %v2997
    %v2999 = vsel %vm2987, %v2984, 0.0
    %v3000 = vadd.f32 %v2998, %v2999
    %v3001 = vsel %vm2987, %v2985, 0.0
    %v3002 = vadd.f32 %v3000, %v3001
    %v3003 = vsel %vm2987, %v2986, 0.0
    %v3004 = vadd.f32 %v3002, %v3003
    %v3005 = vrot.slane %v3004, 4
    %v3006 = vadd.f32 %v3004, %v3005
    %v3007 = vrot.slane %v3006, 2
    %v3008 = vadd.f32 %v3006, %v3007
    %v3009 = vrot.slane %v3008, 1
    %v3010 = vadd.f32 %v3008, %v3009
    %v3011 = vmul.f32 %v3010, 0.03125
    %v3012 = vmul.f32 %v2978, %v2978
    %v3013 = vmul.f32 %v2979, %v2979
    %v3014 = vmul.f32 %v2980, %v2980
    %v3015 = vmul.f32 %v2981, %v2981
    %v3016 = vmul.f32 %v2982, %v2982
    %v3017 = vmul.f32 %v2983, %v2983
    %v3018 = vmul.f32 %v2984, %v2984
    %v3019 = vmul.f32 %v2985, %v2985
    %v3020 = vmul.f32 %v2986, %v2986
    %v3021 = vsel %vm2987, %v3012, 0.0
    %v3022 = vsel %vm2987, %v3013, 0.0
    %v3023 = vadd.f32 %v3021, %v3022
    %v3024 = vsel %vm2987, %v3014, 0.0
    %v3025 = vadd.f32 %v3023, %v3024
    %v3026 = vsel %vm2987, %v3015, 0.0
    %v3027 = vadd.f32 %v3025, %v3026
    %v3028 = vsel %vm2987, %v3016, 0.0
    %v3029 = vadd.f32 %v3027, %v3028
    %v3030 = vsel %vm2987, %v3017, 0.0
    %v3031 = vadd.f32 %v3029, %v3030
    %v3032 = vsel %vm2987, %v3018, 0.0
    %v3033 = vadd.f32 %v3031, %v3032
    %v3034 = vsel %vm2987, %v3019, 0.0
    %v3035 = vadd.f32 %v3033, %v3034
    %v3036 = vsel %vm2987, %v3020, 0.0
    %v3037 = vadd.f32 %v3035, %v3036
    %v3038 = vrot.slane %v3037, 4
    %v3039 = vadd.f32 %v3037, %v3038
    %v3040 = vrot.slane %v3039, 2
    %v3041 = vadd.f32 %v3039, %v3040
    %v3042 = vrot.slane %v3041, 1
    %v3043 = vadd.f32 %v3041, %v3042
    %v3044 = vmul.f32 %v3043, 0.03125
    %v3045 = vmul.f32 %v3011, %v3011
    %v3046 = vsub.f32 %v3044, %v3045
    %v3047 = vld [vmem:[%s3] sm:$0x1]
    %v3048 = vadd.f32 %v3046, 1e-05
    %v3049 = vrsqrt.pop %v3048
    %v3050 = vmul.f32 %v3047, %v3049
    %v3051 = vld [vmem:[%s4] sm:$0x1]
    %v3052 = vmul.f32 %v3011, %v3050
    %v3053 = vsub.f32 %v3051, %v3052
    %v3055 = vlaneseq
    %v3056 = vshrl.u32 %v3055, 7
    %v3057 = vsub.s32 0, %v3056
    %v3058 = vrot.slane %v3050, %v3057
    %v3060 = vmul.f32 %v2978, %v3058
    %v3061 = vmul.f32 %v2979, %v3058
    %v3062 = vmul.f32 %v2980, %v3058
    %v3063 = vmul.f32 %v2981, %v3058
    %v3064 = vmul.f32 %v2982, %v3058
    %v3065 = vmul.f32 %v2983, %v3058
    %v3066 = vmul.f32 %v2984, %v3058
    %v3067 = vmul.f32 %v2985, %v3058
    %v3068 = vmul.f32 %v2986, %v3058
    %v3070 = vlaneseq
    %v3071 = vshrl.u32 %v3070, 7
    %v3072 = vsub.s32 0, %v3071
    %v3073 = vrot.slane %v3053, %v3072
    %v3075 = vadd.f32 %v3060, %v3073
    %v3076 = vadd.f32 %v3061, %v3073
    %v3077 = vadd.f32 %v3062, %v3073
    %v3078 = vadd.f32 %v3063, %v3073
    %v3079 = vadd.f32 %v3064, %v3073
    %v3080 = vadd.f32 %v3065, %v3073
    %v3081 = vadd.f32 %v3066, %v3073
    %v3082 = vadd.f32 %v3067, %v3073
    %v3083 = vadd.f32 %v3068, %v3073
    %v3084 = vmul.f32 %v3075, %v2936
    %v3085 = vmul.f32 %v3076, %v2941
    %v3086 = vmul.f32 %v3077, %v2946
    %v3087 = vmul.f32 %v3078, %v2951
    %v3088 = vmul.f32 %v3079, %v2956
    %v3089 = vmul.f32 %v3080, %v2961
    %v3090 = vmul.f32 %v3081, %v2966
    %v3091 = vmul.f32 %v3082, %v2971
    %v3092 = vmul.f32 %v3083, %v2976
    %v3093 = vpack.c.bf16 %v3085, %v3084
    %v3094 = vpack.c.bf16 %v3087, %v3086
    %v3095 = vpack.c.bf16 %v3089, %v3088
    %v3096 = vpack.c.bf16 %v3091, %v3090
    %v3097 = vpack.c.bf16 %v3092, %v3092
    %v3103 = vcombine.high %v3093, %v3093
    %v3105 = vunpack.c.l.s4 1966171168
    %v3106 = vunpack.c.0.s8 %v3105
    %v3107 = vlaneseq
    %v3108 = vshrl.u32 %v3107, 7
    %v3109 = vsub.s32 %v3106, %v3108
    %v3110 = vrot.slane %v3093, %v3109
    %v3112 = vunpack.c.l.s4 1966171168
    %v3113 = vunpack.c.0.s8 %v3112
    %v3114 = vlaneseq
    %v3115 = vshrl.u32 %v3114, 7
    %v3116 = vsub.s32 %v3113, %v3115
    %v3117 = vrot.slane %v3103, %v3116
    %v3118 = vcombine.high %v3110, %v3110
    %v3119 = vcombine.high %v3117, %v3117
    %v3121 = vunpack.c.l.s4 1966171168
    %v3122 = vunpack.c.0.s8 %v3121
    %v3123 = vlaneseq
    %v3124 = vshrl.u32 %v3123, 7
    %v3125 = vsub.s32 %v3122, %v3124
    %v3126 = vrot.slane %v3110, %v3125
    %v3128 = vunpack.c.l.s4 1966171168
    %v3129 = vunpack.c.0.s8 %v3128
    %v3130 = vlaneseq
    %v3131 = vshrl.u32 %v3130, 7
    %v3132 = vsub.s32 %v3129, %v3131
    %v3133 = vrot.slane %v3117, %v3132
    %v3135 = vunpack.c.l.s4 1966171168
    %v3136 = vunpack.c.0.s8 %v3135
    %v3137 = vlaneseq
    %v3138 = vshrl.u32 %v3137, 7
    %v3139 = vsub.s32 %v3136, %v3138
    %v3140 = vrot.slane %v3118, %v3139
    %v3142 = vunpack.c.l.s4 1966171168
    %v3143 = vunpack.c.0.s8 %v3142
    %v3144 = vlaneseq
    %v3145 = vshrl.u32 %v3144, 7
    %v3146 = vsub.s32 %v3143, %v3145
    %v3147 = vrot.slane %v3119, %v3146
    %v3148 = vcombine.high %v3126, %v3126
    %v3149 = vcombine.high %v3133, %v3133
    %v3150 = vcombine.high %v3140, %v3140
    %v3151 = vcombine.high %v3147, %v3147
    %v3152 = vcombine.high %v3094, %v3094
    %v3154 = vunpack.c.l.s4 1966171168
    %v3155 = vunpack.c.0.s8 %v3154
    %v3156 = vlaneseq
    %v3157 = vshrl.u32 %v3156, 7
    %v3158 = vsub.s32 %v3155, %v3157
    %v3159 = vrot.slane %v3094, %v3158
    %v3161 = vunpack.c.l.s4 1966171168
    %v3162 = vunpack.c.0.s8 %v3161
    %v3163 = vlaneseq
    %v3164 = vshrl.u32 %v3163, 7
    %v3165 = vsub.s32 %v3162, %v3164
    %v3166 = vrot.slane %v3152, %v3165
    %v3167 = vcombine.high %v3159, %v3159
    %v3168 = vcombine.high %v3166, %v3166
    %v3170 = vunpack.c.l.s4 1966171168
    %v3171 = vunpack.c.0.s8 %v3170
    %v3172 = vlaneseq
    %v3173 = vshrl.u32 %v3172, 7
    %v3174 = vsub.s32 %v3171, %v3173
    %v3175 = vrot.slane %v3159, %v3174
    %v3177 = vunpack.c.l.s4 1966171168
    %v3178 = vunpack.c.0.s8 %v3177
    %v3179 = vlaneseq
    %v3180 = vshrl.u32 %v3179, 7
    %v3181 = vsub.s32 %v3178, %v3180
    %v3182 = vrot.slane %v3166, %v3181
    %v3184 = vunpack.c.l.s4 1966171168
    %v3185 = vunpack.c.0.s8 %v3184
    %v3186 = vlaneseq
    %v3187 = vshrl.u32 %v3186, 7
    %v3188 = vsub.s32 %v3185, %v3187
    %v3189 = vrot.slane %v3167, %v3188
    %v3191 = vunpack.c.l.s4 1966171168
    %v3192 = vunpack.c.0.s8 %v3191
    %v3193 = vlaneseq
    %v3194 = vshrl.u32 %v3193, 7
    %v3195 = vsub.s32 %v3192, %v3194
    %v3196 = vrot.slane %v3168, %v3195
    %v3197 = vcombine.high %v3175, %v3175
    %v3198 = vcombine.high %v3182, %v3182
    %v3199 = vcombine.high %v3189, %v3189
    %v3200 = vcombine.high %v3196, %v3196
    %v3201 = vcombine.high %v3095, %v3095
    %v3203 = vunpack.c.l.s4 1966171168
    %v3204 = vunpack.c.0.s8 %v3203
    %v3205 = vlaneseq
    %v3206 = vshrl.u32 %v3205, 7
    %v3207 = vsub.s32 %v3204, %v3206
    %v3208 = vrot.slane %v3095, %v3207
    %v3210 = vunpack.c.l.s4 1966171168
    %v3211 = vunpack.c.0.s8 %v3210
    %v3212 = vlaneseq
    %v3213 = vshrl.u32 %v3212, 7
    %v3214 = vsub.s32 %v3211, %v3213
    %v3215 = vrot.slane %v3201, %v3214
    %v3216 = vcombine.high %v3208, %v3208
    %v3217 = vcombine.high %v3215, %v3215
    %v3219 = vunpack.c.l.s4 1966171168
    %v3220 = vunpack.c.0.s8 %v3219
    %v3221 = vlaneseq
    %v3222 = vshrl.u32 %v3221, 7
    %v3223 = vsub.s32 %v3220, %v3222
    %v3224 = vrot.slane %v3208, %v3223
    %v3226 = vunpack.c.l.s4 1966171168
    %v3227 = vunpack.c.0.s8 %v3226
    %v3228 = vlaneseq
    %v3229 = vshrl.u32 %v3228, 7
    %v3230 = vsub.s32 %v3227, %v3229
    %v3231 = vrot.slane %v3215, %v3230
    %v3233 = vunpack.c.l.s4 1966171168
    %v3234 = vunpack.c.0.s8 %v3233
    %v3235 = vlaneseq
    %v3236 = vshrl.u32 %v3235, 7
    %v3237 = vsub.s32 %v3234, %v3236
    %v3238 = vrot.slane %v3216, %v3237
    %v3240 = vunpack.c.l.s4 1966171168
    %v3241 = vunpack.c.0.s8 %v3240
    %v3242 = vlaneseq
    %v3243 = vshrl.u32 %v3242, 7
    %v3244 = vsub.s32 %v3241, %v3243
    %v3245 = vrot.slane %v3217, %v3244
    %v3246 = vcombine.high %v3224, %v3224
    %v3247 = vcombine.high %v3231, %v3231
    %v3248 = vcombine.high %v3238, %v3238
    %v3249 = vcombine.high %v3245, %v3245
    %v3250 = vcombine.high %v3096, %v3096
    %v3252 = vunpack.c.l.s4 1966171168
    %v3253 = vunpack.c.0.s8 %v3252
    %v3254 = vlaneseq
    %v3255 = vshrl.u32 %v3254, 7
    %v3256 = vsub.s32 %v3253, %v3255
    %v3257 = vrot.slane %v3096, %v3256
    %v3259 = vunpack.c.l.s4 1966171168
    %v3260 = vunpack.c.0.s8 %v3259
    %v3261 = vlaneseq
    %v3262 = vshrl.u32 %v3261, 7
    %v3263 = vsub.s32 %v3260, %v3262
    %v3264 = vrot.slane %v3250, %v3263
    %v3265 = vcombine.high %v3257, %v3257
    %v3266 = vcombine.high %v3264, %v3264
    %v3268 = vunpack.c.l.s4 1966171168
    %v3269 = vunpack.c.0.s8 %v3268
    %v3270 = vlaneseq
    %v3271 = vshrl.u32 %v3270, 7
    %v3272 = vsub.s32 %v3269, %v3271
    %v3273 = vrot.slane %v3257, %v3272
    %v3275 = vunpack.c.l.s4 1966171168
    %v3276 = vunpack.c.0.s8 %v3275
    %v3277 = vlaneseq
    %v3278 = vshrl.u32 %v3277, 7
    %v3279 = vsub.s32 %v3276, %v3278
    %v3280 = vrot.slane %v3264, %v3279
    %v3282 = vunpack.c.l.s4 1966171168
    %v3283 = vunpack.c.0.s8 %v3282
    %v3284 = vlaneseq
    %v3285 = vshrl.u32 %v3284, 7
    %v3286 = vsub.s32 %v3283, %v3285
    %v3287 = vrot.slane %v3265, %v3286
    %v3289 = vunpack.c.l.s4 1966171168
    %v3290 = vunpack.c.0.s8 %v3289
    %v3291 = vlaneseq
    %v3292 = vshrl.u32 %v3291, 7
    %v3293 = vsub.s32 %v3290, %v3292
    %v3294 = vrot.slane %v3266, %v3293
    %v3295 = vcombine.high %v3273, %v3273
    %v3296 = vcombine.high %v3280, %v3280
    %v3297 = vcombine.high %v3287, %v3287
    %v3298 = vcombine.high %v3294, %v3294
    %v3300 = vunpack.c.l.s4 1966171168
    %v3301 = vunpack.c.0.s8 %v3300
    %v3302 = vlaneseq
    %v3303 = vshrl.u32 %v3302, 7
    %v3304 = vsub.s32 %v3301, %v3303
    %v3305 = vrot.slane %v3097, %v3304
    %v3306 = vcombine.high %v3305, %v3305
    %v3308 = vunpack.c.l.s4 1966171168
    %v3309 = vunpack.c.0.s8 %v3308
    %v3310 = vlaneseq
    %v3311 = vshrl.u32 %v3310, 7
    %v3312 = vsub.s32 %v3309, %v3311
    %v3313 = vrot.slane %v3305, %v3312
    %v3315 = vunpack.c.l.s4 1966171168
    %v3316 = vunpack.c.0.s8 %v3315
    %v3317 = vlaneseq
    %v3318 = vshrl.u32 %v3317, 7
    %v3319 = vsub.s32 %v3316, %v3318
    %v3320 = vrot.slane %v3306, %v3319
    %v3321 = vcombine.high %v3313, %v3313
    %v3322 = vcombine.high %v3320, %v3320
    %v3323 = vcombine.low %v3126, %v3150
    %v3324 = vcombine.low %v3140, %v3133
    %v3326 = vunpack.c.l.s4 1935823168
    %v3327 = vunpack.c.0.s8 %v3326
    %v3328 = vlaneseq
    %v3329 = vshrl.u32 %v3328, 7
    %v3330 = vsub.s32 %v3327, %v3329
    %v3331 = vrot.slane %v3323, %v3330
    %v3333 = vunpack.c.l.s4 1935823168
    %v3334 = vunpack.c.0.s8 %v3333
    %v3335 = vlaneseq
    %v3336 = vshrl.u32 %v3335, 7
    %v3337 = vsub.s32 %v3334, %v3336
    %v3338 = vrot.slane %v3324, %v3337
    %v3339 = vcombine.low %v3331, %v3338
    %v3341 = vunpack.c.l.s4 1935823168
    %v3342 = vunpack.c.0.s8 %v3341
    %v3343 = vlaneseq
    %v3344 = vshrl.u32 %v3343, 7
    %v3345 = vsub.s32 %v3342, %v3344
    %v3346 = vrot.slane %v3339, %v3345
    %v3347 = vcombine.low %v3149, %v3189
    %v3348 = vcombine.low %v3151, %v3197
    %v3350 = vunpack.c.l.s4 1935823168
    %v3351 = vunpack.c.0.s8 %v3350
    %v3352 = vlaneseq
    %v3353 = vshrl.u32 %v3352, 7
    %v3354 = vsub.s32 %v3351, %v3353
    %v3355 = vrot.slane %v3347, %v3354
    %v3357 = vunpack.c.l.s4 1935823168
    %v3358 = vunpack.c.0.s8 %v3357
    %v3359 = vlaneseq
    %v3360 = vshrl.u32 %v3359, 7
    %v3361 = vsub.s32 %v3358, %v3360
    %v3362 = vrot.slane %v3348, %v3361
    %v3363 = vcombine.low %v3355, %v3362
    %v3365 = vunpack.c.l.s4 1935823168
    %v3366 = vunpack.c.0.s8 %v3365
    %v3367 = vlaneseq
    %v3368 = vshrl.u32 %v3367, 7
    %v3369 = vsub.s32 %v3366, %v3368
    %v3370 = vrot.slane %v3363, %v3369
    %v3371 = vcombine.low %v3246, %v3245
    %v3372 = vcombine.low %v3248, %v3247
    %v3374 = vunpack.c.l.s4 1935823168
    %v3375 = vunpack.c.0.s8 %v3374
    %v3376 = vlaneseq
    %v3377 = vshrl.u32 %v3376, 7
    %v3378 = vsub.s32 %v3375, %v3377
    %v3379 = vrot.slane %v3371, %v3378
    %v3381 = vunpack.c.l.s4 1935823168
    %v3382 = vunpack.c.0.s8 %v3381
    %v3383 = vlaneseq
    %v3384 = vshrl.u32 %v3383, 7
    %v3385 = vsub.s32 %v3382, %v3384
    %v3386 = vrot.slane %v3372, %v3385
    %v3387 = vcombine.low %v3379, %v3386
    %v3389 = vunpack.c.l.s4 1935823168
    %v3390 = vunpack.c.0.s8 %v3389
    %v3391 = vlaneseq
    %v3392 = vshrl.u32 %v3391, 7
    %v3393 = vsub.s32 %v3390, %v3392
    %v3394 = vrot.slane %v3387, %v3393
    %v3395 = vcombine.low %v3273, %v3297
    %v3396 = vcombine.low %v3287, %v3280
    %v3398 = vunpack.c.l.s4 1935823168
    %v3399 = vunpack.c.0.s8 %v3398
    %v3400 = vlaneseq
    %v3401 = vshrl.u32 %v3400, 7
    %v3402 = vsub.s32 %v3399, %v3401
    %v3403 = vrot.slane %v3395, %v3402
    %v3405 = vunpack.c.l.s4 1935823168
    %v3406 = vunpack.c.0.s8 %v3405
    %v3407 = vlaneseq
    %v3408 = vshrl.u32 %v3407, 7
    %v3409 = vsub.s32 %v3406, %v3408
    %v3410 = vrot.slane %v3396, %v3409
    %v3411 = vcombine.low %v3403, %v3410
    %v3413 = vunpack.c.l.s4 1935823168
    %v3414 = vunpack.c.0.s8 %v3413
    %v3415 = vlaneseq
    %v3416 = vshrl.u32 %v3415, 7
    %v3417 = vsub.s32 %v3414, %v3416
    %v3418 = vrot.slane %v3411, %v3417
    %3423 = vst.msk [vmem:[#allocation3] sm:$0xf] %vm563, %v3346
    %3424 = vst.msk [vmem:[#allocation3 + $0x4] sm:$0xf] %vm563, %v3370
    %3425 = vst.msk [vmem:[#allocation3 + $0x8] sm:$0xf] %vm563, %v3394
    %3426 = vst.msk [vmem:[#allocation3 + $0xc] sm:$0xf] %vm563, %v3418
    %v3428 = vshrl.u32 %v3126, 16
    %v3430 = vrot.slane %v3428, 7
    %v3431 = vrot.slane %v3430, 1
    %v3433 = vshll.u32 %v3140, 16
    %v3435 = vsel %vm599, %v3431, %v3433
    %v3436 = vshrl.u32 %v3140, 16
    %v3438 = vrot.slane %v3436, 7
    %v3439 = vrot.slane %v3438, 1
    %v3441 = vshll.u32 %v3148, 16
    %v3443 = vsel %vm599, %v3439, %v3441
    %v3445 = vshrl.u32 %v3150, 16
    %v3447 = vrot.slane %v3445, 7
    %v3448 = vrot.slane %v3447, 1
    %v3450 = vshll.u32 %v3133, 16
    %v3452 = vsel %vm599, %v3448, %v3450
    %v3453 = vshrl.u32 %v3133, 16
    %v3455 = vrot.slane %v3453, 7
    %v3456 = vrot.slane %v3455, 1
    %v3458 = vshll.u32 %v3147, 16
    %v3460 = vsel %vm599, %v3456, %v3458
    %v3462 = vshrl.u32 %v3149, 16
    %v3464 = vrot.slane %v3462, 7
    %v3465 = vrot.slane %v3464, 1
    %v3467 = vshll.u32 %v3151, 16
    %v3469 = vsel %vm599, %v3465, %v3467
    %v3470 = vshrl.u32 %v3151, 16
    %v3472 = vrot.slane %v3470, 7
    %v3473 = vrot.slane %v3472, 1
    %v3475 = vshll.u32 %v3175, 16
    %v3477 = vsel %vm599, %v3473, %v3475
    %v3479 = vshrl.u32 %v3189, 16
    %v3481 = vrot.slane %v3479, 7
    %v3482 = vrot.slane %v3481, 1
    %v3484 = vshll.u32 %v3197, 16
    %v3486 = vsel %vm599, %v3482, %v3484
    %v3487 = vshrl.u32 %v3197, 16
    %v3489 = vrot.slane %v3487, 7
    %v3490 = vrot.slane %v3489, 1
    %v3492 = vshll.u32 %v3199, 16
    %v3494 = vsel %vm599, %v3490, %v3492
    %v3496 = vshrl.u32 %v3246, 16
    %v3498 = vrot.slane %v3496, 7
    %v3499 = vrot.slane %v3498, 1
    %v3501 = vshll.u32 %v3248, 16
    %v3503 = vsel %vm599, %v3499, %v3501
    %v3504 = vshrl.u32 %v3248, 16
    %v3506 = vrot.slane %v3504, 7
    %v3507 = vrot.slane %v3506, 1
    %v3509 = vshll.u32 %v3231, 16
    %v3511 = vsel %vm599, %v3507, %v3509
    %v3513 = vshrl.u32 %v3245, 16
    %v3515 = vrot.slane %v3513, 7
    %v3516 = vrot.slane %v3515, 1
    %v3518 = vshll.u32 %v3247, 16
    %v3520 = vsel %vm599, %v3516, %v3518
    %v3521 = vshrl.u32 %v3247, 16
    %v3523 = vrot.slane %v3521, 7
    %v3524 = vrot.slane %v3523, 1
    %v3526 = vshll.u32 %v3249, 16
    %v3528 = vsel %vm599, %v3524, %v3526
    %v3530 = vshrl.u32 %v3273, 16
    %v3532 = vrot.slane %v3530, 7
    %v3533 = vrot.slane %v3532, 1
    %v3535 = vshll.u32 %v3287, 16
    %v3537 = vsel %vm599, %v3533, %v3535
    %v3538 = vshrl.u32 %v3287, 16
    %v3540 = vrot.slane %v3538, 7
    %v3541 = vrot.slane %v3540, 1
    %v3543 = vshll.u32 %v3295, 16
    %v3545 = vsel %vm599, %v3541, %v3543
    %v3547 = vshrl.u32 %v3297, 16
    %v3549 = vrot.slane %v3547, 7
    %v3550 = vrot.slane %v3549, 1
    %v3552 = vshll.u32 %v3280, 16
    %v3554 = vsel %vm599, %v3550, %v3552
    %v3555 = vshrl.u32 %v3280, 16
    %v3557 = vrot.slane %v3555, 7
    %v3558 = vrot.slane %v3557, 1
    %v3560 = vshll.u32 %v3294, 16
    %v3562 = vsel %vm599, %v3558, %v3560
    %v3563 = vcombine.low %v3435, %v3452
    %v3564 = vcombine.low %v3443, %v3460
    %v3566 = vunpack.c.l.s4 1935823168
    %v3567 = vunpack.c.0.s8 %v3566
    %v3568 = vlaneseq
    %v3569 = vshrl.u32 %v3568, 7
    %v3570 = vsub.s32 %v3567, %v3569
    %v3571 = vrot.slane %v3563, %v3570
    %v3573 = vunpack.c.l.s4 1935823168
    %v3574 = vunpack.c.0.s8 %v3573
    %v3575 = vlaneseq
    %v3576 = vshrl.u32 %v3575, 7
    %v3577 = vsub.s32 %v3574, %v3576
    %v3578 = vrot.slane %v3564, %v3577
    %v3579 = vcombine.low %v3571, %v3578
    %v3581 = vunpack.c.l.s4 1935823168
    %v3582 = vunpack.c.0.s8 %v3581
    %v3583 = vlaneseq
    %v3584 = vshrl.u32 %v3583, 7
    %v3585 = vsub.s32 %v3582, %v3584
    %v3586 = vrot.slane %v3579, %v3585
    %v3587 = vcombine.low %v3469, %v3486
    %v3588 = vcombine.low %v3477, %v3494
    %v3590 = vunpack.c.l.s4 1935823168
    %v3591 = vunpack.c.0.s8 %v3590
    %v3592 = vlaneseq
    %v3593 = vshrl.u32 %v3592, 7
    %v3594 = vsub.s32 %v3591, %v3593
    %v3595 = vrot.slane %v3587, %v3594
    %v3597 = vunpack.c.l.s4 1935823168
    %v3598 = vunpack.c.0.s8 %v3597
    %v3599 = vlaneseq
    %v3600 = vshrl.u32 %v3599, 7
    %v3601 = vsub.s32 %v3598, %v3600
    %v3602 = vrot.slane %v3588, %v3601
    %v3603 = vcombine.low %v3595, %v3602
    %v3605 = vunpack.c.l.s4 1935823168
    %v3606 = vunpack.c.0.s8 %v3605
    %v3607 = vlaneseq
    %v3608 = vshrl.u32 %v3607, 7
    %v3609 = vsub.s32 %v3606, %v3608
    %v3610 = vrot.slane %v3603, %v3609
    %v3611 = vcombine.low %v3503, %v3520
    %v3612 = vcombine.low %v3511, %v3528
    %v3614 = vunpack.c.l.s4 1935823168
    %v3615 = vunpack.c.0.s8 %v3614
    %v3616 = vlaneseq
    %v3617 = vshrl.u32 %v3616, 7
    %v3618 = vsub.s32 %v3615, %v3617
    %v3619 = vrot.slane %v3611, %v3618
    %v3621 = vunpack.c.l.s4 1935823168
    %v3622 = vunpack.c.0.s8 %v3621
    %v3623 = vlaneseq
    %v3624 = vshrl.u32 %v3623, 7
    %v3625 = vsub.s32 %v3622, %v3624
    %v3626 = vrot.slane %v3612, %v3625
    %v3627 = vcombine.low %v3619, %v3626
    %v3629 = vunpack.c.l.s4 1935823168
    %v3630 = vunpack.c.0.s8 %v3629
    %v3631 = vlaneseq
    %v3632 = vshrl.u32 %v3631, 7
    %v3633 = vsub.s32 %v3630, %v3632
    %v3634 = vrot.slane %v3627, %v3633
    %v3635 = vcombine.low %v3537, %v3554
    %v3636 = vcombine.low %v3545, %v3562
    %v3638 = vunpack.c.l.s4 1935823168
    %v3639 = vunpack.c.0.s8 %v3638
    %v3640 = vlaneseq
    %v3641 = vshrl.u32 %v3640, 7
    %v3642 = vsub.s32 %v3639, %v3641
    %v3643 = vrot.slane %v3635, %v3642
    %v3645 = vunpack.c.l.s4 1935823168
    %v3646 = vunpack.c.0.s8 %v3645
    %v3647 = vlaneseq
    %v3648 = vshrl.u32 %v3647, 7
    %v3649 = vsub.s32 %v3646, %v3648
    %v3650 = vrot.slane %v3636, %v3649
    %v3651 = vcombine.low %v3643, %v3650
    %v3653 = vunpack.c.l.s4 1935823168
    %v3654 = vunpack.c.0.s8 %v3653
    %v3655 = vlaneseq
    %v3656 = vshrl.u32 %v3655, 7
    %v3657 = vsub.s32 %v3654, %v3656
    %v3658 = vrot.slane %v3651, %v3657
    %3659 = vrot.lane.b32.xlu0 %v3586, 8
    %v3660 = vpop.permute.xlu0 %3659
    %3661 = vrot.lane.b32.xlu0 %v3610, 8
    %v3662 = vpop.permute.xlu0 %3661
    %3663 = vrot.lane.b32.xlu0 %v3634, 8
    %v3664 = vpop.permute.xlu0 %3663
    %3665 = vrot.lane.b32.xlu0 %v3658, 8
    %v3666 = vpop.permute.xlu0 %3665
    %3671 = vst.msk [vmem:[#allocation3] sm:$0xf] %vm1143, %v3660
    %3672 = vst.msk [vmem:[#allocation3 + $0x4] sm:$0xf] %vm1143, %v3662
    %3673 = vst.msk [vmem:[#allocation3 + $0x8] sm:$0xf] %vm1143, %v3664
    %3674 = vst.msk [vmem:[#allocation3 + $0xc] sm:$0xf] %vm1143, %v3666
    %v3675 = vcombine.low %v3148, %v3147
    %v3677 = vunpack.c.l.s4 1935823168
    %v3678 = vunpack.c.0.s8 %v3677
    %v3679 = vlaneseq
    %v3680 = vshrl.u32 %v3679, 7
    %v3681 = vsub.s32 %v3678, %v3680
    %v3682 = vrot.slane %v3675, %v3681
    %v3683 = vcombine.low %v3338, %v3682
    %v3685 = vunpack.c.l.s4 1935823168
    %v3686 = vunpack.c.0.s8 %v3685
    %v3687 = vlaneseq
    %v3688 = vshrl.u32 %v3687, 7
    %v3689 = vsub.s32 %v3686, %v3688
    %v3690 = vrot.slane %v3683, %v3689
    %v3691 = vcombine.low %v3175, %v3199
    %v3693 = vunpack.c.l.s4 1935823168
    %v3694 = vunpack.c.0.s8 %v3693
    %v3695 = vlaneseq
    %v3696 = vshrl.u32 %v3695, 7
    %v3697 = vsub.s32 %v3694, %v3696
    %v3698 = vrot.slane %v3691, %v3697
    %v3699 = vcombine.low %v3362, %v3698
    %v3701 = vunpack.c.l.s4 1935823168
    %v3702 = vunpack.c.0.s8 %v3701
    %v3703 = vlaneseq
    %v3704 = vshrl.u32 %v3703, 7
    %v3705 = vsub.s32 %v3702, %v3704
    %v3706 = vrot.slane %v3699, %v3705
    %v3707 = vcombine.low %v3231, %v3249
    %v3709 = vunpack.c.l.s4 1935823168
    %v3710 = vunpack.c.0.s8 %v3709
    %v3711 = vlaneseq
    %v3712 = vshrl.u32 %v3711, 7
    %v3713 = vsub.s32 %v3710, %v3712
    %v3714 = vrot.slane %v3707, %v3713
    %v3715 = vcombine.low %v3386, %v3714
    %v3717 = vunpack.c.l.s4 1935823168
    %v3718 = vunpack.c.0.s8 %v3717
    %v3719 = vlaneseq
    %v3720 = vshrl.u32 %v3719, 7
    %v3721 = vsub.s32 %v3718, %v3720
    %v3722 = vrot.slane %v3715, %v3721
    %v3723 = vcombine.low %v3295, %v3294
    %v3725 = vunpack.c.l.s4 1935823168
    %v3726 = vunpack.c.0.s8 %v3725
    %v3727 = vlaneseq
    %v3728 = vshrl.u32 %v3727, 7
    %v3729 = vsub.s32 %v3726, %v3728
    %v3730 = vrot.slane %v3723, %v3729
    %v3731 = vcombine.low %v3410, %v3730
    %v3733 = vunpack.c.l.s4 1935823168
    %v3734 = vunpack.c.0.s8 %v3733
    %v3735 = vlaneseq
    %v3736 = vshrl.u32 %v3735, 7
    %v3737 = vsub.s32 %v3734, %v3736
    %v3738 = vrot.slane %v3731, %v3737
    %3739 = vrot.lane.b32.xlu0 %v3690, 16
    %v3740 = vpop.permute.xlu0 %3739
    %3741 = vrot.lane.b32.xlu0 %v3706, 16
    %v3742 = vpop.permute.xlu0 %3741
    %3743 = vrot.lane.b32.xlu0 %v3722, 16
    %v3744 = vpop.permute.xlu0 %3743
    %3745 = vrot.lane.b32.xlu0 %v3738, 16
    %v3746 = vpop.permute.xlu0 %3745
    %3751 = vst.msk [vmem:[#allocation3] sm:$0xf] %vm1372, %v3740
    %3752 = vst.msk [vmem:[#allocation3 + $0x4] sm:$0xf] %vm1372, %v3742
    %3753 = vst.msk [vmem:[#allocation3 + $0x8] sm:$0xf] %vm1372, %v3744
    %3754 = vst.msk [vmem:[#allocation3 + $0xc] sm:$0xf] %vm1372, %v3746
    %v3755 = vcombine.low %v3150, %v3149
    %v3756 = vcombine.low %v3133, %v3151
    %v3758 = vunpack.c.l.s4 1935823168
    %v3759 = vunpack.c.0.s8 %v3758
    %v3760 = vlaneseq
    %v3761 = vshrl.u32 %v3760, 7
    %v3762 = vsub.s32 %v3759, %v3761
    %v3763 = vrot.slane %v3755, %v3762
    %v3765 = vunpack.c.l.s4 1935823168
    %v3766 = vunpack.c.0.s8 %v3765
    %v3767 = vlaneseq
    %v3768 = vshrl.u32 %v3767, 7
    %v3769 = vsub.s32 %v3766, %v3768
    %v3770 = vrot.slane %v3756, %v3769
    %v3771 = vcombine.low %v3763, %v3770
    %v3773 = vunpack.c.l.s4 1935823168
    %v3774 = vunpack.c.0.s8 %v3773
    %v3775 = vlaneseq
    %v3776 = vshrl.u32 %v3775, 7
    %v3777 = vsub.s32 %v3774, %v3776
    %v3778 = vrot.slane %v3771, %v3777
    %v3779 = vcombine.low %v3189, %v3182
    %v3780 = vcombine.low %v3197, %v3196
    %v3782 = vunpack.c.l.s4 1935823168
    %v3783 = vunpack.c.0.s8 %v3782
    %v3784 = vlaneseq
    %v3785 = vshrl.u32 %v3784, 7
    %v3786 = vsub.s32 %v3783, %v3785
    %v3787 = vrot.slane %v3779, %v3786
    %v3789 = vunpack.c.l.s4 1935823168
    %v3790 = vunpack.c.0.s8 %v3789
    %v3791 = vlaneseq
    %v3792 = vshrl.u32 %v3791, 7
    %v3793 = vsub.s32 %v3790, %v3792
    %v3794 = vrot.slane %v3780, %v3793
    %v3795 = vcombine.low %v3787, %v3794
    %v3797 = vunpack.c.l.s4 1935823168
    %v3798 = vunpack.c.0.s8 %v3797
    %v3799 = vlaneseq
    %v3800 = vshrl.u32 %v3799, 7
    %v3801 = vsub.s32 %v3798, %v3800
    %v3802 = vrot.slane %v3795, %v3801
    %v3803 = vcombine.low %v3245, %v3273
    %v3804 = vcombine.low %v3247, %v3287
    %v3806 = vunpack.c.l.s4 1935823168
    %v3807 = vunpack.c.0.s8 %v3806
    %v3808 = vlaneseq
    %v3809 = vshrl.u32 %v3808, 7
    %v3810 = vsub.s32 %v3807, %v3809
    %v3811 = vrot.slane %v3803, %v3810
    %v3813 = vunpack.c.l.s4 1935823168
    %v3814 = vunpack.c.0.s8 %v3813
    %v3815 = vlaneseq
    %v3816 = vshrl.u32 %v3815, 7
    %v3817 = vsub.s32 %v3814, %v3816
    %v3818 = vrot.slane %v3804, %v3817
    %v3819 = vcombine.low %v3811, %v3818
    %v3821 = vunpack.c.l.s4 1935823168
    %v3822 = vunpack.c.0.s8 %v3821
    %v3823 = vlaneseq
    %v3824 = vshrl.u32 %v3823, 7
    %v3825 = vsub.s32 %v3822, %v3824
    %v3826 = vrot.slane %v3819, %v3825
    %v3827 = vcombine.low %v3297, %v3296
    %v3828 = vcombine.low %v3280, %v3298
    %v3830 = vunpack.c.l.s4 1935823168
    %v3831 = vunpack.c.0.s8 %v3830
    %v3832 = vlaneseq
    %v3833 = vshrl.u32 %v3832, 7
    %v3834 = vsub.s32 %v3831, %v3833
    %v3835 = vrot.slane %v3827, %v3834
    %v3837 = vunpack.c.l.s4 1935823168
    %v3838 = vunpack.c.0.s8 %v3837
    %v3839 = vlaneseq
    %v3840 = vshrl.u32 %v3839, 7
    %v3841 = vsub.s32 %v3838, %v3840
    %v3842 = vrot.slane %v3828, %v3841
    %v3843 = vcombine.low %v3835, %v3842
    %v3845 = vunpack.c.l.s4 1935823168
    %v3846 = vunpack.c.0.s8 %v3845
    %v3847 = vlaneseq
    %v3848 = vshrl.u32 %v3847, 7
    %v3849 = vsub.s32 %v3846, %v3848
    %v3850 = vrot.slane %v3843, %v3849
    %3851 = vrot.lane.b32.xlu0 %v3778, 24
    %v3852 = vpop.permute.xlu0 %3851
    %3853 = vrot.lane.b32.xlu0 %v3802, 24
    %v3854 = vpop.permute.xlu0 %3853
    %3855 = vrot.lane.b32.xlu0 %v3826, 24
    %v3856 = vpop.permute.xlu0 %3855
    %3857 = vrot.lane.b32.xlu0 %v3850, 24
    %v3858 = vpop.permute.xlu0 %3857
    %3863 = vst.msk [vmem:[#allocation3] sm:$0xf] %vm1625, %v3852
    %3864 = vst.msk [vmem:[#allocation3 + $0x4] sm:$0xf] %vm1625, %v3854
    %3865 = vst.msk [vmem:[#allocation3 + $0x8] sm:$0xf] %vm1625, %v3856
    %3866 = vst.msk [vmem:[#allocation3 + $0xc] sm:$0xf] %vm1625, %v3858
    %v3868 = vshrl.u32 %v3182, 16
    %v3870 = vrot.slane %v3868, 7
    %v3871 = vrot.slane %v3870, 1
    %v3873 = vshll.u32 %v3196, 16
    %v3875 = vsel %vm599, %v3871, %v3873
    %v3876 = vshrl.u32 %v3196, 16
    %v3878 = vrot.slane %v3876, 7
    %v3879 = vrot.slane %v3878, 1
    %v3881 = vshll.u32 %v3198, 16
    %v3883 = vsel %vm599, %v3879, %v3881
    %v3885 = vshrl.u32 %v3296, 16
    %v3887 = vrot.slane %v3885, 7
    %v3888 = vrot.slane %v3887, 1
    %v3890 = vshll.u32 %v3298, 16
    %v3892 = vsel %vm599, %v3888, %v3890
    %v3893 = vshrl.u32 %v3298, 16
    %v3895 = vrot.slane %v3893, 7
    %v3896 = vrot.slane %v3895, 1
    %v3898 = vshll.u32 %v3313, 16
    %v3900 = vsel %vm599, %v3896, %v3898
    %v3901 = vcombine.low %v3452, %v3469
    %v3902 = vcombine.low %v3460, %v3477
    %v3904 = vunpack.c.l.s4 1935823168
    %v3905 = vunpack.c.0.s8 %v3904
    %v3906 = vlaneseq
    %v3907 = vshrl.u32 %v3906, 7
    %v3908 = vsub.s32 %v3905, %v3907
    %v3909 = vrot.slane %v3901, %v3908
    %v3911 = vunpack.c.l.s4 1935823168
    %v3912 = vunpack.c.0.s8 %v3911
    %v3913 = vlaneseq
    %v3914 = vshrl.u32 %v3913, 7
    %v3915 = vsub.s32 %v3912, %v3914
    %v3916 = vrot.slane %v3902, %v3915
    %v3917 = vcombine.low %v3909, %v3916
    %v3919 = vunpack.c.l.s4 1935823168
    %v3920 = vunpack.c.0.s8 %v3919
    %v3921 = vlaneseq
    %v3922 = vshrl.u32 %v3921, 7
    %v3923 = vsub.s32 %v3920, %v3922
    %v3924 = vrot.slane %v3917, %v3923
    %v3925 = vcombine.low %v3486, %v3875
    %v3926 = vcombine.low %v3494, %v3883
    %v3928 = vunpack.c.l.s4 1935823168
    %v3929 = vunpack.c.0.s8 %v3928
    %v3930 = vlaneseq
    %v3931 = vshrl.u32 %v3930, 7
    %v3932 = vsub.s32 %v3929, %v3931
    %v3933 = vrot.slane %v3925, %v3932
    %v3935 = vunpack.c.l.s4 1935823168
    %v3936 = vunpack.c.0.s8 %v3935
    %v3937 = vlaneseq
    %v3938 = vshrl.u32 %v3937, 7
    %v3939 = vsub.s32 %v3936, %v3938
    %v3940 = vrot.slane %v3926, %v3939
    %v3941 = vcombine.low %v3933, %v3940
    %v3943 = vunpack.c.l.s4 1935823168
    %v3944 = vunpack.c.0.s8 %v3943
    %v3945 = vlaneseq
    %v3946 = vshrl.u32 %v3945, 7
    %v3947 = vsub.s32 %v3944, %v3946
    %v3948 = vrot.slane %v3941, %v3947
    %v3949 = vcombine.low %v3520, %v3537
    %v3950 = vcombine.low %v3528, %v3545
    %v3952 = vunpack.c.l.s4 1935823168
    %v3953 = vunpack.c.0.s8 %v3952
    %v3954 = vlaneseq
    %v3955 = vshrl.u32 %v3954, 7
    %v3956 = vsub.s32 %v3953, %v3955
    %v3957 = vrot.slane %v3949, %v3956
    %v3959 = vunpack.c.l.s4 1935823168
    %v3960 = vunpack.c.0.s8 %v3959
    %v3961 = vlaneseq
    %v3962 = vshrl.u32 %v3961, 7
    %v3963 = vsub.s32 %v3960, %v3962
    %v3964 = vrot.slane %v3950, %v3963
    %v3965 = vcombine.low %v3957, %v3964
    %v3967 = vunpack.c.l.s4 1935823168
    %v3968 = vunpack.c.0.s8 %v3967
    %v3969 = vlaneseq
    %v3970 = vshrl.u32 %v3969, 7
    %v3971 = vsub.s32 %v3968, %v3970
    %v3972 = vrot.slane %v3965, %v3971
    %v3973 = vcombine.low %v3554, %v3892
    %v3974 = vcombine.low %v3562, %v3900
    %v3976 = vunpack.c.l.s4 1935823168
    %v3977 = vunpack.c.0.s8 %v3976
    %v3978 = vlaneseq
    %v3979 = vshrl.u32 %v3978, 7
    %v3980 = vsub.s32 %v3977, %v3979
    %v3981 = vrot.slane %v3973, %v3980
    %v3983 = vunpack.c.l.s4 1935823168
    %v3984 = vunpack.c.0.s8 %v3983
    %v3985 = vlaneseq
    %v3986 = vshrl.u32 %v3985, 7
    %v3987 = vsub.s32 %v3984, %v3986
    %v3988 = vrot.slane %v3974, %v3987
    %v3989 = vcombine.low %v3981, %v3988
    %v3991 = vunpack.c.l.s4 1935823168
    %v3992 = vunpack.c.0.s8 %v3991
    %v3993 = vlaneseq
    %v3994 = vshrl.u32 %v3993, 7
    %v3995 = vsub.s32 %v3992, %v3994
    %v3996 = vrot.slane %v3989, %v3995
    %3997 = vrot.lane.b32.xlu0 %v3924, 32
    %v3998 = vpop.permute.xlu0 %3997
    %3999 = vrot.lane.b32.xlu0 %v3948, 32
    %v4000 = vpop.permute.xlu0 %3999
    %4001 = vrot.lane.b32.xlu0 %v3972, 32
    %v4002 = vpop.permute.xlu0 %4001
    %4003 = vrot.lane.b32.xlu0 %v3996, 32
    %v4004 = vpop.permute.xlu0 %4003
    %4009 = vst.msk [vmem:[#allocation3] sm:$0xf] %vm1882, %v3998
    %4010 = vst.msk [vmem:[#allocation3 + $0x4] sm:$0xf] %vm1882, %v4000
    %4011 = vst.msk [vmem:[#allocation3 + $0x8] sm:$0xf] %vm1882, %v4002
    %4012 = vst.msk [vmem:[#allocation3 + $0xc] sm:$0xf] %vm1882, %v4004
    %v4013 = vcombine.low %v3147, %v3175
    %v4015 = vunpack.c.l.s4 1935823168
    %v4016 = vunpack.c.0.s8 %v4015
    %v4017 = vlaneseq
    %v4018 = vshrl.u32 %v4017, 7
    %v4019 = vsub.s32 %v4016, %v4018
    %v4020 = vrot.slane %v4013, %v4019
    %v4021 = vcombine.low %v3770, %v4020
    %v4023 = vunpack.c.l.s4 1935823168
    %v4024 = vunpack.c.0.s8 %v4023
    %v4025 = vlaneseq
    %v4026 = vshrl.u32 %v4025, 7
    %v4027 = vsub.s32 %v4024, %v4026
    %v4028 = vrot.slane %v4021, %v4027
    %v4029 = vcombine.low %v3199, %v3198
    %v4031 = vunpack.c.l.s4 1935823168
    %v4032 = vunpack.c.0.s8 %v4031
    %v4033 = vlaneseq
    %v4034 = vshrl.u32 %v4033, 7
    %v4035 = vsub.s32 %v4032, %v4034
    %v4036 = vrot.slane %v4029, %v4035
    %v4037 = vcombine.low %v3794, %v4036
    %v4039 = vunpack.c.l.s4 1935823168
    %v4040 = vunpack.c.0.s8 %v4039
    %v4041 = vlaneseq
    %v4042 = vshrl.u32 %v4041, 7
    %v4043 = vsub.s32 %v4040, %v4042
    %v4044 = vrot.slane %v4037, %v4043
    %v4045 = vcombine.low %v3249, %v3295
    %v4047 = vunpack.c.l.s4 1935823168
    %v4048 = vunpack.c.0.s8 %v4047
    %v4049 = vlaneseq
    %v4050 = vshrl.u32 %v4049, 7
    %v4051 = vsub.s32 %v4048, %v4050
    %v4052 = vrot.slane %v4045, %v4051
    %v4053 = vcombine.low %v3818, %v4052
    %v4055 = vunpack.c.l.s4 1935823168
    %v4056 = vunpack.c.0.s8 %v4055
    %v4057 = vlaneseq
    %v4058 = vshrl.u32 %v4057, 7
    %v4059 = vsub.s32 %v4056, %v4058
    %v4060 = vrot.slane %v4053, %v4059
    %v4061 = vcombine.low %v3294, %v3313
    %v4063 = vunpack.c.l.s4 1935823168
    %v4064 = vunpack.c.0.s8 %v4063
    %v4065 = vlaneseq
    %v4066 = vshrl.u32 %v4065, 7
    %v4067 = vsub.s32 %v4064, %v4066
    %v4068 = vrot.slane %v4061, %v4067
    %v4069 = vcombine.low %v3842, %v4068
    %v4071 = vunpack.c.l.s4 1935823168
    %v4072 = vunpack.c.0.s8 %v4071
    %v4073 = vlaneseq
    %v4074 = vshrl.u32 %v4073, 7
    %v4075 = vsub.s32 %v4072, %v4074
    %v4076 = vrot.slane %v4069, %v4075
    %4077 = vrot.lane.b32.xlu0 %v4028, 40
    %v4078 = vpop.permute.xlu0 %4077
    %4079 = vrot.lane.b32.xlu0 %v4044, 40
    %v4080 = vpop.permute.xlu0 %4079
    %4081 = vrot.lane.b32.xlu0 %v4060, 40
    %v4082 = vpop.permute.xlu0 %4081
    %4083 = vrot.lane.b32.xlu0 %v4076, 40
    %v4084 = vpop.permute.xlu0 %4083
    %4089 = vst.msk [vmem:[#allocation3] sm:$0xf] %vm2063, %v4078
    %4090 = vst.msk [vmem:[#allocation3 + $0x4] sm:$0xf] %vm2063, %v4080
    %4091 = vst.msk [vmem:[#allocation3 + $0x8] sm:$0xf] %vm2063, %v4082
    %4092 = vst.msk [vmem:[#allocation3 + $0xc] sm:$0xf] %vm2063, %v4084
    %v4093 = vcombine.low %v3182, %v3200
    %v4094 = vcombine.low %v3196, %v3224
    %v4096 = vunpack.c.l.s4 1935823168
    %v4097 = vunpack.c.0.s8 %v4096
    %v4098 = vlaneseq
    %v4099 = vshrl.u32 %v4098, 7
    %v4100 = vsub.s32 %v4097, %v4099
    %v4101 = vrot.slane %v4093, %v4100
    %v4103 = vunpack.c.l.s4 1935823168
    %v4104 = vunpack.c.0.s8 %v4103
    %v4105 = vlaneseq
    %v4106 = vshrl.u32 %v4105, 7
    %v4107 = vsub.s32 %v4104, %v4106
    %v4108 = vrot.slane %v4094, %v4107
    %v4109 = vcombine.low %v4101, %v4108
    %v4111 = vunpack.c.l.s4 1935823168
    %v4112 = vunpack.c.0.s8 %v4111
    %v4113 = vlaneseq
    %v4114 = vshrl.u32 %v4113, 7
    %v4115 = vsub.s32 %v4112, %v4114
    %v4116 = vrot.slane %v4109, %v4115
    %v4117 = vcombine.low %v3296, %v3320
    %v4118 = vcombine.low %v3298, %v3321
    %v4120 = vunpack.c.l.s4 1935823168
    %v4121 = vunpack.c.0.s8 %v4120
    %v4122 = vlaneseq
    %v4123 = vshrl.u32 %v4122, 7
    %v4124 = vsub.s32 %v4121, %v4123
    %v4125 = vrot.slane %v4117, %v4124
    %v4127 = vunpack.c.l.s4 1935823168
    %v4128 = vunpack.c.0.s8 %v4127
    %v4129 = vlaneseq
    %v4130 = vshrl.u32 %v4129, 7
    %v4131 = vsub.s32 %v4128, %v4130
    %v4132 = vrot.slane %v4118, %v4131
    %v4133 = vcombine.low %v4125, %v4132
    %v4135 = vunpack.c.l.s4 1935823168
    %v4136 = vunpack.c.0.s8 %v4135
    %v4137 = vlaneseq
    %v4138 = vshrl.u32 %v4137, 7
    %v4139 = vsub.s32 %v4136, %v4138
    %v4140 = vrot.slane %v4133, %v4139
    %4141 = vrot.lane.b32.xlu0 %v3370, 48
    %v4142 = vpop.permute.xlu0 %4141
    %4143 = vrot.lane.b32.xlu0 %v4116, 48
    %v4144 = vpop.permute.xlu0 %4143
    %4145 = vrot.lane.b32.xlu0 %v3418, 48
    %v4146 = vpop.permute.xlu0 %4145
    %4147 = vrot.lane.b32.xlu0 %v4140, 48
    %v4148 = vpop.permute.xlu0 %4147
    %4153 = vst.msk [vmem:[#allocation3] sm:$0xf] %vm2300, %v4142
    %4154 = vst.msk [vmem:[#allocation3 + $0x4] sm:$0xf] %vm2300, %v4144
    %4155 = vst.msk [vmem:[#allocation3 + $0x8] sm:$0xf] %vm2300, %v4146
    %4156 = vst.msk [vmem:[#allocation3 + $0xc] sm:$0xf] %vm2300, %v4148
    %v4158 = vshrl.u32 %v3200, 16
    %v4160 = vrot.slane %v4158, 7
    %v4161 = vrot.slane %v4160, 1
    %v4163 = vshll.u32 %v3224, 16
    %v4165 = vsel %vm599, %v4161, %v4163
    %v4166 = vshrl.u32 %v3224, 16
    %v4168 = vrot.slane %v4166, 7
    %v4169 = vrot.slane %v4168, 1
    %v4171 = vshll.u32 %v3238, 16
    %v4173 = vsel %vm599, %v4169, %v4171
    %v4175 = vshrl.u32 %v3320, 16
    %v4177 = vrot.slane %v4175, 7
    %v4178 = vrot.slane %v4177, 1
    %v4180 = vshll.u32 %v3321, 16
    %v4182 = vsel %vm599, %v4178, %v4180
    %v4183 = vshrl.u32 %v3321, 16
    %v4185 = vrot.slane %v4183, 7
    %v4186 = vrot.slane %v4185, 1
    %v4188 = vshll.u32 %v3322, 16
    %v4190 = vsel %vm599, %v4186, %v4188
    %v4191 = vcombine.low %v3875, %v4165
    %v4192 = vcombine.low %v3883, %v4173
    %v4194 = vunpack.c.l.s4 1935823168
    %v4195 = vunpack.c.0.s8 %v4194
    %v4196 = vlaneseq
    %v4197 = vshrl.u32 %v4196, 7
    %v4198 = vsub.s32 %v4195, %v4197
    %v4199 = vrot.slane %v4191, %v4198
    %v4201 = vunpack.c.l.s4 1935823168
    %v4202 = vunpack.c.0.s8 %v4201
    %v4203 = vlaneseq
    %v4204 = vshrl.u32 %v4203, 7
    %v4205 = vsub.s32 %v4202, %v4204
    %v4206 = vrot.slane %v4192, %v4205
    %v4207 = vcombine.low %v4199, %v4206
    %v4209 = vunpack.c.l.s4 1935823168
    %v4210 = vunpack.c.0.s8 %v4209
    %v4211 = vlaneseq
    %v4212 = vshrl.u32 %v4211, 7
    %v4213 = vsub.s32 %v4210, %v4212
    %v4214 = vrot.slane %v4207, %v4213
    %v4215 = vcombine.low %v3892, %v4182
    %v4216 = vcombine.low %v3900, %v4190
    %v4218 = vunpack.c.l.s4 1935823168
    %v4219 = vunpack.c.0.s8 %v4218
    %v4220 = vlaneseq
    %v4221 = vshrl.u32 %v4220, 7
    %v4222 = vsub.s32 %v4219, %v4221
    %v4223 = vrot.slane %v4215, %v4222
    %v4225 = vunpack.c.l.s4 1935823168
    %v4226 = vunpack.c.0.s8 %v4225
    %v4227 = vlaneseq
    %v4228 = vshrl.u32 %v4227, 7
    %v4229 = vsub.s32 %v4226, %v4228
    %v4230 = vrot.slane %v4216, %v4229
    %v4231 = vcombine.low %v4223, %v4230
    %v4233 = vunpack.c.l.s4 1935823168
    %v4234 = vunpack.c.0.s8 %v4233
    %v4235 = vlaneseq
    %v4236 = vshrl.u32 %v4235, 7
    %v4237 = vsub.s32 %v4234, %v4236
    %v4238 = vrot.slane %v4231, %v4237
    %4239 = vrot.lane.b32.xlu0 %v3610, 56
    %v4240 = vpop.permute.xlu0 %4239
    %4241 = vrot.lane.b32.xlu0 %v4214, 56
    %v4242 = vpop.permute.xlu0 %4241
    %4243 = vrot.lane.b32.xlu0 %v3658, 56
    %v4244 = vpop.permute.xlu0 %4243
    %4245 = vrot.lane.b32.xlu0 %v4238, 56
    %v4246 = vpop.permute.xlu0 %4245
    %4251 = vst.msk [vmem:[#allocation3] sm:$0xf] %vm2557, %v4240
    %4252 = vst.msk [vmem:[#allocation3 + $0x4] sm:$0xf] %vm2557, %v4242
    %4253 = vst.msk [vmem:[#allocation3 + $0x8] sm:$0xf] %vm2557, %v4244
    %4254 = vst.msk [vmem:[#allocation3 + $0xc] sm:$0xf] %vm2557, %v4246
    %v4255 = vcombine.low %v3198, %v3238
    %v4257 = vunpack.c.l.s4 1935823168
    %v4258 = vunpack.c.0.s8 %v4257
    %v4259 = vlaneseq
    %v4260 = vshrl.u32 %v4259, 7
    %v4261 = vsub.s32 %v4258, %v4260
    %v4262 = vrot.slane %v4255, %v4261
    %v4263 = vcombine.low %v4108, %v4262
    %v4265 = vunpack.c.l.s4 1935823168
    %v4266 = vunpack.c.0.s8 %v4265
    %v4267 = vlaneseq
    %v4268 = vshrl.u32 %v4267, 7
    %v4269 = vsub.s32 %v4266, %v4268
    %v4270 = vrot.slane %v4263, %v4269
    %v4271 = vcombine.low %v3313, %v3322
    %v4273 = vunpack.c.l.s4 1935823168
    %v4274 = vunpack.c.0.s8 %v4273
    %v4275 = vlaneseq
    %v4276 = vshrl.u32 %v4275, 7
    %v4277 = vsub.s32 %v4274, %v4276
    %v4278 = vrot.slane %v4271, %v4277
    %v4279 = vcombine.low %v4132, %v4278
    %v4281 = vunpack.c.l.s4 1935823168
    %v4282 = vunpack.c.0.s8 %v4281
    %v4283 = vlaneseq
    %v4284 = vshrl.u32 %v4283, 7
    %v4285 = vsub.s32 %v4282, %v4284
    %v4286 = vrot.slane %v4279, %v4285
    %4287 = vrot.lane.b32.xlu0 %v3706, 64
    %v4288 = vpop.permute.xlu0 %4287
    %4289 = vrot.lane.b32.xlu0 %v4270, 64
    %v4290 = vpop.permute.xlu0 %4289
    %4291 = vrot.lane.b32.xlu0 %v3738, 64
    %v4292 = vpop.permute.xlu0 %4291
    %4293 = vrot.lane.b32.xlu0 %v4286, 64
    %v4294 = vpop.permute.xlu0 %4293
    %4299 = vst.msk [vmem:[#allocation3] sm:$0xf] %vm2738, %v4288
    %4300 = vst.msk [vmem:[#allocation3 + $0x4] sm:$0xf] %vm2738, %v4290
    %4301 = vst.msk [vmem:[#allocation3 + $0x8] sm:$0xf] %vm2738, %v4292
    %4302 = vst.msk [vmem:[#allocation3 + $0xc] sm:$0xf] %vm2738, %v4294
    %v4303 = vld [vmem:[#allocation3] sm:$0xf]
    %v4304 = vld [vmem:[#allocation3 + $0x4] sm:$0xf]
    %v4305 = vld [vmem:[#allocation3 + $0x8] sm:$0xf]
    %v4306 = vld [vmem:[#allocation3 + $0xc] sm:$0xf]
    %v4307 = vld [vmem:[%s5] sm:$0xf]
    %v4308 = vld [vmem:[%s5 + $0x4] sm:$0xf]
    %v4309 = vld [vmem:[%s5 + $0x8] sm:$0xf]
    %v4310 = vld [vmem:[%s5 + $0xc] sm:$0xf]
    %v4311 = vld [vmem:[%s5 + $0x10] sm:$0xf]
    %v4312 = vld [vmem:[%s5 + $0x14] sm:$0xf]
    %v4313 = vld [vmem:[%s5 + $0x18] sm:$0xf]
    %v4314 = vld [vmem:[%s5 + $0x1c] sm:$0xf]
    %v4315 = vld [vmem:[%s5 + $0x20] sm:$0xf]
    %v4316 = vld [vmem:[%s6] sm:$0x1]
    %v4318 = vlaneseq
    %v4319 = vshrl.u32 %v4318, 7
    %v4320 = vsub.s32 0, %v4319
    %v4321 = vrot.slane %v4316, %v4320
    %v4327 = vunpack.c.l.b16 %v4303
    %v4328 = vunpack.c.l.b16 %v4304
    %v4329 = vunpack.c.l.b16 %v4305
    %v4330 = vunpack.c.l.b16 %v4306
    %v4331 = vpack.c.b16 %v4328, %v4327
    %v4332 = vpack.c.b16 %v4330, %v4329
    %v4342 = vunpack.c.l.b16 %v4307
    %v4343 = vunpack.c.l.b16 %v4308
    %v4344 = vunpack.c.l.b16 %v4309
    %v4345 = vunpack.c.l.b16 %v4310
    %v4346 = vunpack.c.l.b16 %v4311
    %v4347 = vunpack.c.l.b16 %v4312
    %v4348 = vunpack.c.l.b16 %v4313
    %v4349 = vunpack.c.l.b16 %v4314
    %v4350 = vunpack.c.l.b16 %v4315
    %v4351 = vpack.c.b16 %v4343, %v4342
    %v4352 = vpack.c.b16 %v4345, %v4344
    %v4353 = vpack.c.b16 %v4347, %v4346
    %v4354 = vpack.c.b16 %v4349, %v4348
    %v4355 = vpack.c.b16 %v4350, %v4350
    %v4361 = vsel %vm2823, %v4331, 0
    %v4364 = vsel %vm2823, %v4332, 0
    %v4367 = vsel %vm2839, %v4355, 0
    %4369 = vmatprep.subr.bf16.mxu0 0
    %4370 = vmatpush1.bf16.msra.mxu0 0
    %4371 = vmatprep.subr.bf16.mxu0 0
    %4372 = vmatpush1.bf16.msra.mxu0 0
    %4373 = vmatprep.subr.bf16.mxu0 0
    %4374 = vmatpush1.bf16.msra.mxu0 0
    %4375 = vmatprep.subr.bf16.mxu0 0
    %4376 = vmatpush1.bf16.msra.mxu0 %v4367
    %4377 = vmatprep.subr.bf16.mxu0 0
    %4378 = vmatpush1.bf16.msra.mxu0 %v4354
    %4379 = vmatprep.subr.bf16.mxu0 0
    %4380 = vmatpush1.bf16.msra.mxu0 %v4353
    %4381 = vmatprep.subr.bf16.mxu0 0
    %4382 = vmatpush1.bf16.msra.mxu0 %v4352
    %4383 = vmatprep.subr.bf16.mxu0 0
    %4384 = vmatpush1.bf16.msra.mxu0 %v4351
    %4385 = vmatprep.subr.bf16.mxu0 0
    %4386 = vmatpush2.bf16.msra.mxu0 0
    %4387 = vmatprep.subr.bf16.mxu0 0
    %4388 = vmatpush2.bf16.msra.mxu0 0
    %4389 = vmatprep.subr.bf16.mxu0 0
    %4390 = vmatpush2.bf16.msra.mxu0 0
    %4391 = vmatprep.subr.bf16.mxu0 0
    %4392 = vmatpush2.bf16.msra.mxu0 0
    %4393 = vmatprep.subr.bf16.mxu0 0
    %4394 = vmatpush2.bf16.msra.mxu0 0
    %4395 = vmatprep.subr.bf16.mxu0 0
    %4396 = vmatpush2.bf16.msra.mxu0 0
    %4397 = vmatprep.subr.bf16.mxu0 0
    %4398 = vmatpush2.bf16.msra.mxu0 0
    %4399 = vmatprep.subr.bf16.mxu0 0
    %4400 = vmatpush2.bf16.msra.mxu0 0
    %4401 = vmatprep.mubr.bf16.mxu0 0
    %4402 = vmatmul.mubr.bf16.gmra.mxu0 %v4361
    %v4403 = vpop.f32.mrf.mxu0
    %v4404 = vadd.f32 %v4321, %v4403
    %v4405 = vpop.f32.mrf.mxu0
    %v4406 = vpop.f32.mrf.mxu0
    %v4407 = vadd.f32 %v4321, %v4406
    %v4408 = vpop.f32.mrf.mxu0
    %4409 = vmatprep.mubr.bf16.mxu0 0
    %4410 = vmatmul.mubr.bf16.gmra.mxu0 %v4364
    %v4411 = vpop.f32.mrf.mxu0
    %v4412 = vadd.f32 %v4321, %v4411
    %v4413 = vpop.f32.mrf.mxu0
    %v4414 = vpop.f32.mrf.mxu0
    %v4415 = vadd.f32 %v4321, %v4414
    %v4416 = vpop.f32.mrf.mxu0
    %4417 = vdwg.mxu0
    %v4422 = vcombine.high %v4404, %v4404
    %v4423 = vcombine.high %v4407, %v4407
    %v4424 = vcombine.high %v4412, %v4412
    %v4425 = vcombine.high %v4415, %v4415
    %v4430 = vpack.c.bf16 %v4404, %v4404
    %v4431 = vpack.c.bf16 %v4422, %v4422
    %v4432 = vpack.c.bf16 %v4407, %v4407
    %v4433 = vpack.c.bf16 %v4423, %v4423
    %v4434 = vpack.c.bf16 %v4412, %v4412
    %v4435 = vpack.c.bf16 %v4424, %v4424
    %v4436 = vpack.c.bf16 %v4415, %v4415
    %v4437 = vpack.c.bf16 %v4425, %v4425
    %v4446 = vunpack.c.l.b16 %v4430
    %v4447 = vunpack.c.l.b16 %v4431
    %v4448 = vunpack.c.l.b16 %v4432
    %v4449 = vunpack.c.l.b16 %v4433
    %v4450 = vunpack.c.l.b16 %v4434
    %v4451 = vunpack.c.l.b16 %v4435
    %v4452 = vunpack.c.l.b16 %v4436
    %v4453 = vunpack.c.l.b16 %v4437
    %v4454 = vpack.c.b16 %v4446, %v4446
    %v4455 = vpack.c.b16 %v4447, %v4447
    %v4456 = vpack.c.b16 %v4448, %v4448
    %v4457 = vpack.c.b16 %v4449, %v4449
    %v4458 = vpack.c.b16 %v4450, %v4450
    %v4459 = vpack.c.b16 %v4451, %v4451
    %v4460 = vpack.c.b16 %v4452, %v4452
    %v4461 = vpack.c.b16 %v4453, %v4453
    %v4462 = vunpack.c.l.b16 %v4454
    %v4463 = vunpack.c.l.b16 %v4455
    %v4464 = vunpack.c.l.b16 %v4456
    %v4465 = vunpack.c.l.b16 %v4457
    %v4466 = vunpack.c.l.b16 %v4458
    %v4467 = vunpack.c.l.b16 %v4459
    %v4468 = vunpack.c.l.b16 %v4460
    %v4469 = vunpack.c.l.b16 %v4461
    %v4470 = vrot.slane %v4463, 7
    %vm4471 = vcmask 1041409
    %v4472 = vsel %vm4471, %v4470, %v4462
    %v4473 = vrot.slane %v4464, 6
    %vm4474 = vcmask 1042434
    %v4475 = vsel %vm4474, %v4473, %v4472
    %v4476 = vrot.slane %v4465, 5
    %vm4477 = vcmask 1043459
    %v4478 = vsel %vm4477, %v4476, %v4475
    %v4479 = vrot.slane %v4466, 4
    %vm4480 = vcmask 1044484
    %v4481 = vsel %vm4480, %v4479, %v4478
    %v4482 = vrot.slane %v4467, 3
    %vm4483 = vcmask 1045509
    %v4484 = vsel %vm4483, %v4482, %v4481
    %v4485 = vrot.slane %v4468, 2
    %vm4486 = vcmask 1046534
    %v4487 = vsel %vm4486, %v4485, %v4484
    %v4488 = vrot.slane %v4469, 1
    %vm4489 = vcmask 1047559
    %v4490 = vsel %vm4489, %v4488, %v4487
    %v4491 = vpack.c.b16 %v4490, %v4490
    %vm4493 = vcmask 27648
    %4494 = vst.msk [vmem:[#allocation4] sm:$0xf] %vm4493, %v4491
    %4495 = vrot.lane.b32.xlu0 %v4491, 4
    %v4496 = vpop.permute.xlu0 %4495
    %vm4498 = vcmask 60448
    %4499 = vst.msk [vmem:[#allocation4] sm:$0xf] %vm4498, %v4496
    %v4500 = vmul.f32 %v4404, 0.875
    %v4501 = vmul.f32 %v4422, 0.875
    %v4502 = vmul.f32 %v4407, 0.875
    %v4503 = vmul.f32 %v4423, 0.875
    %v4504 = vmul.f32 %v4412, 0.875
    %v4505 = vmul.f32 %v4424, 0.875
    %v4506 = vmul.f32 %v4415, 0.875
    %v4507 = vmul.f32 %v4425, 0.875
    %v4508 = vmul.f32 %v4404, 0.125
    %v4509 = vmul.f32 %v4422, 0.125
    %v4510 = vmul.f32 %v4407, 0.125
    %v4511 = vmul.f32 %v4423, 0.125
    %v4512 = vmul.f32 %v4412, 0.125
    %v4513 = vmul.f32 %v4424, 0.125
    %v4514 = vmul.f32 %v4415, 0.125
    %v4515 = vmul.f32 %v4425, 0.125
    %v4524 = vrot.slane %v4508, 5
    %v4525 = vrot.slane %v4524, 4
    %v4526 = vrot.slane %v4509, 5
    %v4527 = vrot.slane %v4526, 4
    %v4528 = vrot.slane %v4510, 5
    %v4529 = vrot.slane %v4528, 4
    %v4530 = vrot.slane %v4511, 5
    %v4531 = vrot.slane %v4530, 4
    %v4532 = vrot.slane %v4512, 5
    %v4533 = vrot.slane %v4532, 4
    %v4534 = vrot.slane %v4513, 5
    %v4535 = vrot.slane %v4534, 4
    %v4536 = vrot.slane %v4514, 5
    %v4537 = vrot.slane %v4536, 4
    %v4538 = vrot.slane %v4515, 5
    %v4539 = vrot.slane %v4538, 4
    %v4548 = vadd.f32 %v4500, %v4525
    %v4549 = vadd.f32 %v4501, %v4527
    %v4550 = vadd.f32 %v4502, %v4529
    %v4551 = vadd.f32 %v4503, %v4531
    %v4552 = vadd.f32 %v4504, %v4533
    %v4553 = vadd.f32 %v4505, %v4535
    %v4554 = vadd.f32 %v4506, %v4537
    %v4555 = vadd.f32 %v4507, %v4539
    %v4556 = vpack.c.bf16 %v4548, %v4548
    %v4557 = vpack.c.bf16 %v4549, %v4549
    %v4558 = vpack.c.bf16 %v4550, %v4550
    %v4559 = vpack.c.bf16 %v4551, %v4551
    %v4560 = vpack.c.bf16 %v4552, %v4552
    %v4561 = vpack.c.bf16 %v4553, %v4553
    %v4562 = vpack.c.bf16 %v4554, %v4554
    %v4563 = vpack.c.bf16 %v4555, %v4555
    %v4572 = vunpack.c.l.b16 %v4556
    %v4573 = vunpack.c.l.b16 %v4557
    %v4574 = vunpack.c.l.b16 %v4558
    %v4575 = vunpack.c.l.b16 %v4559
    %v4576 = vunpack.c.l.b16 %v4560
    %v4577 = vunpack.c.l.b16 %v4561
    %v4578 = vunpack.c.l.b16 %v4562
    %v4579 = vunpack.c.l.b16 %v4563
    %v4580 = vpack.c.b16 %v4572, %v4572
    %v4581 = vpack.c.b16 %v4573, %v4573
    %v4582 = vpack.c.b16 %v4574, %v4574
    %v4583 = vpack.c.b16 %v4575, %v4575
    %v4584 = vpack.c.b16 %v4576, %v4576
    %v4585 = vpack.c.b16 %v4577, %v4577
    %v4586 = vpack.c.b16 %v4578, %v4578
    %v4587 = vpack.c.b16 %v4579, %v4579
    %v4588 = vunpack.c.l.b16 %v4580
    %v4589 = vunpack.c.l.b16 %v4581
    %v4590 = vunpack.c.l.b16 %v4582
    %v4591 = vunpack.c.l.b16 %v4583
    %v4592 = vunpack.c.l.b16 %v4584
    %v4593 = vunpack.c.l.b16 %v4585
    %v4594 = vunpack.c.l.b16 %v4586
    %v4595 = vunpack.c.l.b16 %v4587
    %v4596 = vrot.slane %v4589, 7
    %v4597 = vsel %vm4471, %v4596, %v4588
    %v4598 = vrot.slane %v4590, 6
    %v4599 = vsel %vm4474, %v4598, %v4597
    %v4600 = vrot.slane %v4591, 5
    %v4601 = vsel %vm4477, %v4600, %v4599
    %v4602 = vrot.slane %v4592, 4
    %v4603 = vsel %vm4480, %v4602, %v4601
    %v4604 = vrot.slane %v4593, 3
    %v4605 = vsel %vm4483, %v4604, %v4603
    %v4606 = vrot.slane %v4594, 2
    %v4607 = vsel %vm4486, %v4606, %v4605
    %v4608 = vrot.slane %v4595, 1
    %v4609 = vsel %vm4489, %v4608, %v4607
    %v4610 = vpack.c.b16 %v4609, %v4609
    %4611 = vrot.lane.b32.xlu0 %v4610, 8
    %v4612 = vpop.permute.xlu0 %4611
    %vm4614 = vcmask 93248
    %4615 = vst.msk [vmem:[#allocation4] sm:$0xf] %vm4614, %v4612
    %v4616 = vmul.f32 %v4404, 0.625
    %v4617 = vmul.f32 %v4422, 0.625
    %v4618 = vmul.f32 %v4407, 0.625
    %v4619 = vmul.f32 %v4423, 0.625
    %v4620 = vmul.f32 %v4412, 0.625
    %v4621 = vmul.f32 %v4424, 0.625
    %v4622 = vmul.f32 %v4415, 0.625
    %v4623 = vmul.f32 %v4425, 0.625
    %v4624 = vmul.f32 %v4404, 0.375
    %v4625 = vmul.f32 %v4422, 0.375
    %v4626 = vmul.f32 %v4407, 0.375
    %v4627 = vmul.f32 %v4423, 0.375
    %v4628 = vmul.f32 %v4412, 0.375
    %v4629 = vmul.f32 %v4424, 0.375
    %v4630 = vmul.f32 %v4415, 0.375
    %v4631 = vmul.f32 %v4425, 0.375
    %v4640 = vrot.slane %v4624, 5
    %v4641 = vrot.slane %v4640, 4
    %v4642 = vrot.slane %v4625, 5
    %v4643 = vrot.slane %v4642, 4
    %v4644 = vrot.slane %v4626, 5
    %v4645 = vrot.slane %v4644, 4
    %v4646 = vrot.slane %v4627, 5
    %v4647 = vrot.slane %v4646, 4
    %v4648 = vrot.slane %v4628, 5
    %v4649 = vrot.slane %v4648, 4
    %v4650 = vrot.slane %v4629, 5
    %v4651 = vrot.slane %v4650, 4
    %v4652 = vrot.slane %v4630, 5
    %v4653 = vrot.slane %v4652, 4
    %v4654 = vrot.slane %v4631, 5
    %v4655 = vrot.slane %v4654, 4
    %v4664 = vadd.f32 %v4616, %v4641
    %v4665 = vadd.f32 %v4617, %v4643
    %v4666 = vadd.f32 %v4618, %v4645
    %v4667 = vadd.f32 %v4619, %v4647
    %v4668 = vadd.f32 %v4620, %v4649
    %v4669 = vadd.f32 %v4621, %v4651
    %v4670 = vadd.f32 %v4622, %v4653
    %v4671 = vadd.f32 %v4623, %v4655
    %v4672 = vpack.c.bf16 %v4664, %v4664
    %v4673 = vpack.c.bf16 %v4665, %v4665
    %v4674 = vpack.c.bf16 %v4666, %v4666
    %v4675 = vpack.c.bf16 %v4667, %v4667
    %v4676 = vpack.c.bf16 %v4668, %v4668
    %v4677 = vpack.c.bf16 %v4669, %v4669
    %v4678 = vpack.c.bf16 %v4670, %v4670
    %v4679 = vpack.c.bf16 %v4671, %v4671
    %v4688 = vunpack.c.l.b16 %v4672
    %v4689 = vunpack.c.l.b16 %v4673
    %v4690 = vunpack.c.l.b16 %v4674
    %v4691 = vunpack.c.l.b16 %v4675
    %v4692 = vunpack.c.l.b16 %v4676
    %v4693 = vunpack.c.l.b16 %v4677
    %v4694 = vunpack.c.l.b16 %v4678
    %v4695 = vunpack.c.l.b16 %v4679
    %v4696 = vpack.c.b16 %v4688, %v4688
    %v4697 = vpack.c.b16 %v4689, %v4689
    %v4698 = vpack.c.b16 %v4690, %v4690
    %v4699 = vpack.c.b16 %v4691, %v4691
    %v4700 = vpack.c.b16 %v4692, %v4692
    %v4701 = vpack.c.b16 %v4693, %v4693
    %v4702 = vpack.c.b16 %v4694, %v4694
    %v4703 = vpack.c.b16 %v4695, %v4695
    %v4704 = vunpack.c.l.b16 %v4696
    %v4705 = vunpack.c.l.b16 %v4697
    %v4706 = vunpack.c.l.b16 %v4698
    %v4707 = vunpack.c.l.b16 %v4699
    %v4708 = vunpack.c.l.b16 %v4700
    %v4709 = vunpack.c.l.b16 %v4701
    %v4710 = vunpack.c.l.b16 %v4702
    %v4711 = vunpack.c.l.b16 %v4703
    %v4712 = vrot.slane %v4705, 7
    %v4713 = vsel %vm4471, %v4712, %v4704
    %v4714 = vrot.slane %v4706, 6
    %v4715 = vsel %vm4474, %v4714, %v4713
    %v4716 = vrot.slane %v4707, 5
    %v4717 = vsel %vm4477, %v4716, %v4715
    %v4718 = vrot.slane %v4708, 4
    %v4719 = vsel %vm4480, %v4718, %v4717
    %v4720 = vrot.slane %v4709, 3
    %v4721 = vsel %vm4483, %v4720, %v4719
    %v4722 = vrot.slane %v4710, 2
    %v4723 = vsel %vm4486, %v4722, %v4721
    %v4724 = vrot.slane %v4711, 1
    %v4725 = vsel %vm4489, %v4724, %v4723
    %v4726 = vpack.c.b16 %v4725, %v4725
    %4727 = vrot.lane.b32.xlu0 %v4726, 12
    %v4728 = vpop.permute.xlu0 %4727
    %vm4730 = vcmask 126048
    %4731 = vst.msk [vmem:[#allocation4] sm:$0xf] %vm4730, %v4728
    %v4740 = vrot.slane %v4616, 5
    %v4741 = vrot.slane %v4740, 4
    %v4742 = vrot.slane %v4617, 5
    %v4743 = vrot.slane %v4742, 4
    %v4744 = vrot.slane %v4618, 5
    %v4745 = vrot.slane %v4744, 4
    %v4746 = vrot.slane %v4619, 5
    %v4747 = vrot.slane %v4746, 4
    %v4748 = vrot.slane %v4620, 5
    %v4749 = vrot.slane %v4748, 4
    %v4750 = vrot.slane %v4621, 5
    %v4751 = vrot.slane %v4750, 4
    %v4752 = vrot.slane %v4622, 5
    %v4753 = vrot.slane %v4752, 4
    %v4754 = vrot.slane %v4623, 5
    %v4755 = vrot.slane %v4754, 4
    %v4764 = vadd.f32 %v4624, %v4741
    %v4765 = vadd.f32 %v4625, %v4743
    %v4766 = vadd.f32 %v4626, %v4745
    %v4767 = vadd.f32 %v4627, %v4747
    %v4768 = vadd.f32 %v4628, %v4749
    %v4769 = vadd.f32 %v4629, %v4751
    %v4770 = vadd.f32 %v4630, %v4753
    %v4771 = vadd.f32 %v4631, %v4755
    %v4772 = vpack.c.bf16 %v4764, %v4764
    %v4773 = vpack.c.bf16 %v4765, %v4765
    %v4774 = vpack.c.bf16 %v4766, %v4766
    %v4775 = vpack.c.bf16 %v4767, %v4767
    %v4776 = vpack.c.bf16 %v4768, %v4768
    %v4777 = vpack.c.bf16 %v4769, %v4769
    %v4778 = vpack.c.bf16 %v4770, %v4770
    %v4779 = vpack.c.bf16 %v4771, %v4771
    %v4788 = vunpack.c.l.b16 %v4772
    %v4789 = vunpack.c.l.b16 %v4773
    %v4790 = vunpack.c.l.b16 %v4774
    %v4791 = vunpack.c.l.b16 %v4775
    %v4792 = vunpack.c.l.b16 %v4776
    %v4793 = vunpack.c.l.b16 %v4777
    %v4794 = vunpack.c.l.b16 %v4778
    %v4795 = vunpack.c.l.b16 %v4779
    %v4796 = vpack.c.b16 %v4788, %v4788
    %v4797 = vpack.c.b16 %v4789, %v4789
    %v4798 = vpack.c.b16 %v4790, %v4790
    %v4799 = vpack.c.b16 %v4791, %v4791
    %v4800 = vpack.c.b16 %v4792, %v4792
    %v4801 = vpack.c.b16 %v4793, %v4793
    %v4802 = vpack.c.b16 %v4794, %v4794
    %v4803 = vpack.c.b16 %v4795, %v4795
    %v4804 = vunpack.c.l.b16 %v4796
    %v4805 = vunpack.c.l.b16 %v4797
    %v4806 = vunpack.c.l.b16 %v4798
    %v4807 = vunpack.c.l.b16 %v4799
    %v4808 = vunpack.c.l.b16 %v4800
    %v4809 = vunpack.c.l.b16 %v4801
    %v4810 = vunpack.c.l.b16 %v4802
    %v4811 = vunpack.c.l.b16 %v4803
    %v4812 = vrot.slane %v4805, 7
    %v4813 = vsel %vm4471, %v4812, %v4804
    %v4814 = vrot.slane %v4806, 6
    %v4815 = vsel %vm4474, %v4814, %v4813
    %v4816 = vrot.slane %v4807, 5
    %v4817 = vsel %vm4477, %v4816, %v4815
    %v4818 = vrot.slane %v4808, 4
    %v4819 = vsel %vm4480, %v4818, %v4817
    %v4820 = vrot.slane %v4809, 3
    %v4821 = vsel %vm4483, %v4820, %v4819
    %v4822 = vrot.slane %v4810, 2
    %v4823 = vsel %vm4486, %v4822, %v4821
    %v4824 = vrot.slane %v4811, 1
    %v4825 = vsel %vm4489, %v4824, %v4823
    %v4826 = vpack.c.b16 %v4825, %v4825
    %4827 = vrot.lane.b32.xlu0 %v4826, 16
    %v4828 = vpop.permute.xlu0 %4827
    %vm4830 = vcmask 158848
    %4831 = vst.msk [vmem:[#allocation4] sm:$0xf] %vm4830, %v4828
    %v4840 = vrot.slane %v4500, 5
    %v4841 = vrot.slane %v4840, 4
    %v4842 = vrot.slane %v4501, 5
    %v4843 = vrot.slane %v4842, 4
    %v4844 = vrot.slane %v4502, 5
    %v4845 = vrot.slane %v4844, 4
    %v4846 = vrot.slane %v4503, 5
    %v4847 = vrot.slane %v4846, 4
    %v4848 = vrot.slane %v4504, 5
    %v4849 = vrot.slane %v4848, 4
    %v4850 = vrot.slane %v4505, 5
    %v4851 = vrot.slane %v4850, 4
    %v4852 = vrot.slane %v4506, 5
    %v4853 = vrot.slane %v4852, 4
    %v4854 = vrot.slane %v4507, 5
    %v4855 = vrot.slane %v4854, 4
    %v4864 = vadd.f32 %v4508, %v4841
    %v4865 = vadd.f32 %v4509, %v4843
    %v4866 = vadd.f32 %v4510, %v4845
    %v4867 = vadd.f32 %v4511, %v4847
    %v4868 = vadd.f32 %v4512, %v4849
    %v4869 = vadd.f32 %v4513, %v4851
    %v4870 = vadd.f32 %v4514, %v4853
    %v4871 = vadd.f32 %v4515, %v4855
    %v4872 = vpack.c.bf16 %v4864, %v4864
    %v4873 = vpack.c.bf16 %v4865, %v4865
    %v4874 = vpack.c.bf16 %v4866, %v4866
    %v4875 = vpack.c.bf16 %v4867, %v4867
    %v4876 = vpack.c.bf16 %v4868, %v4868
    %v4877 = vpack.c.bf16 %v4869, %v4869
    %v4878 = vpack.c.bf16 %v4870, %v4870
    %v4879 = vpack.c.bf16 %v4871, %v4871
    %v4888 = vunpack.c.l.b16 %v4872
    %v4889 = vunpack.c.l.b16 %v4873
    %v4890 = vunpack.c.l.b16 %v4874
    %v4891 = vunpack.c.l.b16 %v4875
    %v4892 = vunpack.c.l.b16 %v4876
    %v4893 = vunpack.c.l.b16 %v4877
    %v4894 = vunpack.c.l.b16 %v4878
    %v4895 = vunpack.c.l.b16 %v4879
    %v4896 = vpack.c.b16 %v4888, %v4888
    %v4897 = vpack.c.b16 %v4889, %v4889
    %v4898 = vpack.c.b16 %v4890, %v4890
    %v4899 = vpack.c.b16 %v4891, %v4891
    %v4900 = vpack.c.b16 %v4892, %v4892
    %v4901 = vpack.c.b16 %v4893, %v4893
    %v4902 = vpack.c.b16 %v4894, %v4894
    %v4903 = vpack.c.b16 %v4895, %v4895
    %v4904 = vunpack.c.l.b16 %v4896
    %v4905 = vunpack.c.l.b16 %v4897
    %v4906 = vunpack.c.l.b16 %v4898
    %v4907 = vunpack.c.l.b16 %v4899
    %v4908 = vunpack.c.l.b16 %v4900
    %v4909 = vunpack.c.l.b16 %v4901
    %v4910 = vunpack.c.l.b16 %v4902
    %v4911 = vunpack.c.l.b16 %v4903
    %v4912 = vrot.slane %v4905, 7
    %v4913 = vsel %vm4471, %v4912, %v4904
    %v4914 = vrot.slane %v4906, 6
    %v4915 = vsel %vm4474, %v4914, %v4913
    %v4916 = vrot.slane %v4907, 5
    %v4917 = vsel %vm4477, %v4916, %v4915
    %v4918 = vrot.slane %v4908, 4
    %v4919 = vsel %vm4480, %v4918, %v4917
    %v4920 = vrot.slane %v4909, 3
    %v4921 = vsel %vm4483, %v4920, %v4919
    %v4922 = vrot.slane %v4910, 2
    %v4923 = vsel %vm4486, %v4922, %v4921
    %v4924 = vrot.slane %v4911, 1
    %v4925 = vsel %vm4489, %v4924, %v4923
    %v4926 = vpack.c.b16 %v4925, %v4925
    %4927 = vrot.lane.b32.xlu0 %v4926, 20
    %v4928 = vpop.permute.xlu0 %4927
    %vm4930 = vcmask 191648
    %4931 = vst.msk [vmem:[#allocation4] sm:$0xf] %vm4930, %v4928
    %v4932 = vrot.slane %v4588, 1
    %v4933 = vsel %vm4471, %v4589, %v4932
    %v4934 = vrot.slane %v4590, 7
    %v4935 = vsel %vm4474, %v4934, %v4933
    %v4936 = vrot.slane %v4591, 6
    %v4937 = vsel %vm4477, %v4936, %v4935
    %v4938 = vrot.slane %v4592, 5
    %v4939 = vsel %vm4480, %v4938, %v4937
    %v4940 = vrot.slane %v4593, 4
    %v4941 = vsel %vm4483, %v4940, %v4939
    %v4942 = vrot.slane %v4594, 3
    %v4943 = vsel %vm4486, %v4942, %v4941
    %v4944 = vrot.slane %v4595, 2
    %v4945 = vsel %vm4489, %v4944, %v4943
    %v4946 = vpack.c.b16 %v4945, %v4945
    %4947 = vrot.lane.b32.xlu0 %v4946, 24
    %v4948 = vpop.permute.xlu0 %4947
    %vm4950 = vcmask 224448
    %4951 = vst.msk [vmem:[#allocation4] sm:$0xf] %vm4950, %v4948
    %v4952 = vrot.slane %v4704, 1
    %v4953 = vsel %vm4471, %v4705, %v4952
    %v4954 = vrot.slane %v4706, 7
    %v4955 = vsel %vm4474, %v4954, %v4953
    %v4956 = vrot.slane %v4707, 6
    %v4957 = vsel %vm4477, %v4956, %v4955
    %v4958 = vrot.slane %v4708, 5
    %v4959 = vsel %vm4480, %v4958, %v4957
    %v4960 = vrot.slane %v4709, 4
    %v4961 = vsel %vm4483, %v4960, %v4959
    %v4962 = vrot.slane %v4710, 3
    %v4963 = vsel %vm4486, %v4962, %v4961
    %v4964 = vrot.slane %v4711, 2
    %v4965 = vsel %vm4489, %v4964, %v4963
    %v4966 = vpack.c.b16 %v4965, %v4965
    %4967 = vrot.lane.b32.xlu0 %v4966, 28
    %v4968 = vpop.permute.xlu0 %4967
    %vm4970 = vcmask 257248
    %4971 = vst.msk [vmem:[#allocation4] sm:$0xf] %vm4970, %v4968
    %v4972 = vrot.slane %v4804, 1
    %v4973 = vsel %vm4471, %v4805, %v4972
    %v4974 = vrot.slane %v4806, 7
    %v4975 = vsel %vm4474, %v4974, %v4973
    %v4976 = vrot.slane %v4807, 6
    %v4977 = vsel %vm4477, %v4976, %v4975
    %v4978 = vrot.slane %v4808, 5
    %v4979 = vsel %vm4480, %v4978, %v4977
    %v4980 = vrot.slane %v4809, 4
    %v4981 = vsel %vm4483, %v4980, %v4979
    %v4982 = vrot.slane %v4810, 3
    %v4983 = vsel %vm4486, %v4982, %v4981
    %v4984 = vrot.slane %v4811, 2
    %v4985 = vsel %vm4489, %v4984, %v4983
    %v4986 = vpack.c.b16 %v4985, %v4985
    %4987 = vrot.lane.b32.xlu0 %v4986, 32
    %v4988 = vpop.permute.xlu0 %4987
    %vm4990 = vcmask 290048
    %4991 = vst.msk [vmem:[#allocation4] sm:$0xf] %vm4990, %v4988
    %v4992 = vrot.slane %v4904, 1
    %v4993 = vsel %vm4471, %v4905, %v4992
    %v4994 = vrot.slane %v4906, 7
    %v4995 = vsel %vm4474, %v4994, %v4993
    %v4996 = vrot.slane %v4907, 6
    %v4997 = vsel %vm4477, %v4996, %v4995
    %v4998 = vrot.slane %v4908, 5
    %v4999 = vsel %vm4480, %v4998, %v4997
    %v5000 = vrot.slane %v4909, 4
    %v5001 = vsel %vm4483, %v5000, %v4999
    %v5002 = vrot.slane %v4910, 3
    %v5003 = vsel %vm4486, %v5002, %v5001
    %v5004 = vrot.slane %v4911, 2
    %v5005 = vsel %vm4489, %v5004, %v5003
    %v5006 = vpack.c.b16 %v5005, %v5005
    %5007 = vrot.lane.b32.xlu0 %v5006, 36
    %v5008 = vpop.permute.xlu0 %5007
    %vm5010 = vcmask 322848
    %5011 = vst.msk [vmem:[#allocation4] sm:$0xf] %vm5010, %v5008
    %v5012 = vrot.slane %v4588, 2
    %v5013 = vrot.slane %v4589, 1
    %v5014 = vsel %vm4471, %v5013, %v5012
    %v5015 = vsel %vm4474, %v4590, %v5014
    %v5016 = vrot.slane %v4591, 7
    %v5017 = vsel %vm4477, %v5016, %v5015
    %v5018 = vrot.slane %v4592, 6
    %v5019 = vsel %vm4480, %v5018, %v5017
    %v5020 = vrot.slane %v4593, 5
    %v5021 = vsel %vm4483, %v5020, %v5019
    %v5022 = vrot.slane %v4594, 4
    %v5023 = vsel %vm4486, %v5022, %v5021
    %v5024 = vrot.slane %v4595, 3
    %v5025 = vsel %vm4489, %v5024, %v5023
    %v5026 = vpack.c.b16 %v5025, %v5025
    %5027 = vrot.lane.b32.xlu0 %v5026, 40
    %v5028 = vpop.permute.xlu0 %5027
    %vm5030 = vcmask 355648
    %5031 = vst.msk [vmem:[#allocation4] sm:$0xf] %vm5030, %v5028
    %v5032 = vrot.slane %v4704, 2
    %v5033 = vrot.slane %v4705, 1
    %v5034 = vsel %vm4471, %v5033, %v5032
    %v5035 = vsel %vm4474, %v4706, %v5034
    %v5036 = vrot.slane %v4707, 7
    %v5037 = vsel %vm4477, %v5036, %v5035
    %v5038 = vrot.slane %v4708, 6
    %v5039 = vsel %vm4480, %v5038, %v5037
    %v5040 = vrot.slane %v4709, 5
    %v5041 = vsel %vm4483, %v5040, %v5039
    %v5042 = vrot.slane %v4710, 4
    %v5043 = vsel %vm4486, %v5042, %v5041
    %v5044 = vrot.slane %v4711, 3
    %v5045 = vsel %vm4489, %v5044, %v5043
    %v5046 = vpack.c.b16 %v5045, %v5045
    %5047 = vrot.lane.b32.xlu0 %v5046, 44
    %v5048 = vpop.permute.xlu0 %5047
    %vm5050 = vcmask 388448
    %5051 = vst.msk [vmem:[#allocation4] sm:$0xf] %vm5050, %v5048
    %v5052 = vrot.slane %v4804, 2
    %v5053 = vrot.slane %v4805, 1
    %v5054 = vsel %vm4471, %v5053, %v5052
    %v5055 = vsel %vm4474, %v4806, %v5054
    %v5056 = vrot.slane %v4807, 7
    %v5057 = vsel %vm4477, %v5056, %v5055
    %v5058 = vrot.slane %v4808, 6
    %v5059 = vsel %vm4480, %v5058, %v5057
    %v5060 = vrot.slane %v4809, 5
    %v5061 = vsel %vm4483, %v5060, %v5059
    %v5062 = vrot.slane %v4810, 4
    %v5063 = vsel %vm4486, %v5062, %v5061
    %v5064 = vrot.slane %v4811, 3
    %v5065 = vsel %vm4489, %v5064, %v5063
    %v5066 = vpack.c.b16 %v5065, %v5065
    %5067 = vrot.lane.b32.xlu0 %v5066, 48
    %v5068 = vpop.permute.xlu0 %5067
    %vm5070 = vcmask 421248
    %5071 = vst.msk [vmem:[#allocation4] sm:$0xf] %vm5070, %v5068
    %v5072 = vrot.slane %v4904, 2
    %v5073 = vrot.slane %v4905, 1
    %v5074 = vsel %vm4471, %v5073, %v5072
    %v5075 = vsel %vm4474, %v4906, %v5074
    %v5076 = vrot.slane %v4907, 7
    %v5077 = vsel %vm4477, %v5076, %v5075
    %v5078 = vrot.slane %v4908, 6
    %v5079 = vsel %vm4480, %v5078, %v5077
    %v5080 = vrot.slane %v4909, 5
    %v5081 = vsel %vm4483, %v5080, %v5079
    %v5082 = vrot.slane %v4910, 4
    %v5083 = vsel %vm4486, %v5082, %v5081
    %v5084 = vrot.slane %v4911, 3
    %v5085 = vsel %vm4489, %v5084, %v5083
    %v5086 = vpack.c.b16 %v5085, %v5085
    %5087 = vrot.lane.b32.xlu0 %v5086, 52
    %v5088 = vpop.permute.xlu0 %5087
    %vm5090 = vcmask 454048
    %5091 = vst.msk [vmem:[#allocation4] sm:$0xf] %vm5090, %v5088
    %v5092 = vadd.f32 %v4500, %v4508
    %v5093 = vadd.f32 %v4501, %v4509
    %v5094 = vadd.f32 %v4502, %v4510
    %v5095 = vadd.f32 %v4503, %v4511
    %v5096 = vadd.f32 %v4504, %v4512
    %v5097 = vadd.f32 %v4505, %v4513
    %v5098 = vadd.f32 %v4506, %v4514
    %v5099 = vadd.f32 %v4507, %v4515
    %v5100 = vpack.c.bf16 %v5092, %v5092
    %v5101 = vpack.c.bf16 %v5093, %v5093
    %v5102 = vpack.c.bf16 %v5094, %v5094
    %v5103 = vpack.c.bf16 %v5095, %v5095
    %v5104 = vpack.c.bf16 %v5096, %v5096
    %v5105 = vpack.c.bf16 %v5097, %v5097
    %v5106 = vpack.c.bf16 %v5098, %v5098
    %v5107 = vpack.c.bf16 %v5099, %v5099
    %v5116 = vunpack.c.l.b16 %v5100
    %v5117 = vunpack.c.l.b16 %v5101
    %v5118 = vunpack.c.l.b16 %v5102
    %v5119 = vunpack.c.l.b16 %v5103
    %v5120 = vunpack.c.l.b16 %v5104
    %v5121 = vunpack.c.l.b16 %v5105
    %v5122 = vunpack.c.l.b16 %v5106
    %v5123 = vunpack.c.l.b16 %v5107
    %v5124 = vpack.c.b16 %v5116, %v5116
    %v5125 = vpack.c.b16 %v5117, %v5117
    %v5126 = vpack.c.b16 %v5118, %v5118
    %v5127 = vpack.c.b16 %v5119, %v5119
    %v5128 = vpack.c.b16 %v5120, %v5120
    %v5129 = vpack.c.b16 %v5121, %v5121
    %v5130 = vpack.c.b16 %v5122, %v5122
    %v5131 = vpack.c.b16 %v5123, %v5123
    %v5132 = vunpack.c.l.b16 %v5124
    %v5133 = vunpack.c.l.b16 %v5125
    %v5134 = vunpack.c.l.b16 %v5126
    %v5135 = vunpack.c.l.b16 %v5127
    %v5136 = vunpack.c.l.b16 %v5128
    %v5137 = vunpack.c.l.b16 %v5129
    %v5138 = vunpack.c.l.b16 %v5130
    %v5139 = vunpack.c.l.b16 %v5131
    %v5140 = vrot.slane %v5132, 3
    %v5141 = vrot.slane %v5133, 2
    %v5142 = vsel %vm4471, %v5141, %v5140
    %v5143 = vrot.slane %v5134, 1
    %v5144 = vsel %vm4474, %v5143, %v5142
    %v5145 = vsel %vm4477, %v5135, %v5144
    %v5146 = vrot.slane %v5136, 7
    %v5147 = vsel %vm4480, %v5146, %v5145
    %v5148 = vrot.slane %v5137, 6
    %v5149 = vsel %vm4483, %v5148, %v5147
    %v5150 = vrot.slane %v5138, 5
    %v5151 = vsel %vm4486, %v5150, %v5149
    %v5152 = vrot.slane %v5139, 4
    %v5153 = vsel %vm4489, %v5152, %v5151
    %v5154 = vpack.c.b16 %v5153, %v5153
    %5155 = vrot.lane.b32.xlu0 %v5154, 56
    %v5156 = vpop.permute.xlu0 %5155
    %vm5158 = vcmask 486848
    %5159 = vst.msk [vmem:[#allocation4] sm:$0xf] %vm5158, %v5156
    %v5160 = vadd.f32 %v4616, %v4624
    %v5161 = vadd.f32 %v4617, %v4625
    %v5162 = vadd.f32 %v4618, %v4626
    %v5163 = vadd.f32 %v4619, %v4627
    %v5164 = vadd.f32 %v4620, %v4628
    %v5165 = vadd.f32 %v4621, %v4629
    %v5166 = vadd.f32 %v4622, %v4630
    %v5167 = vadd.f32 %v4623, %v4631
    %v5168 = vpack.c.bf16 %v5160, %v5160
    %v5169 = vpack.c.bf16 %v5161, %v5161
    %v5170 = vpack.c.bf16 %v5162, %v5162
    %v5171 = vpack.c.bf16 %v5163, %v5163
    %v5172 = vpack.c.bf16 %v5164, %v5164
    %v5173 = vpack.c.bf16 %v5165, %v5165
    %v5174 = vpack.c.bf16 %v5166, %v5166
    %v5175 = vpack.c.bf16 %v5167, %v5167
    %v5184 = vunpack.c.l.b16 %v5168
    %v5185 = vunpack.c.l.b16 %v5169
    %v5186 = vunpack.c.l.b16 %v5170
    %v5187 = vunpack.c.l.b16 %v5171
    %v5188 = vunpack.c.l.b16 %v5172
    %v5189 = vunpack.c.l.b16 %v5173
    %v5190 = vunpack.c.l.b16 %v5174
    %v5191 = vunpack.c.l.b16 %v5175
    %v5192 = vpack.c.b16 %v5184, %v5184
    %v5193 = vpack.c.b16 %v5185, %v5185
    %v5194 = vpack.c.b16 %v5186, %v5186
    %v5195 = vpack.c.b16 %v5187, %v5187
    %v5196 = vpack.c.b16 %v5188, %v5188
    %v5197 = vpack.c.b16 %v5189, %v5189
    %v5198 = vpack.c.b16 %v5190, %v5190
    %v5199 = vpack.c.b16 %v5191, %v5191
    %v5200 = vunpack.c.l.b16 %v5192
    %v5201 = vunpack.c.l.b16 %v5193
    %v5202 = vunpack.c.l.b16 %v5194
    %v5203 = vunpack.c.l.b16 %v5195
    %v5204 = vunpack.c.l.b16 %v5196
    %v5205 = vunpack.c.l.b16 %v5197
    %v5206 = vunpack.c.l.b16 %v5198
    %v5207 = vunpack.c.l.b16 %v5199
    %v5208 = vrot.slane %v5200, 3
    %v5209 = vrot.slane %v5201, 2
    %v5210 = vsel %vm4471, %v5209, %v5208
    %v5211 = vrot.slane %v5202, 1
    %v5212 = vsel %vm4474, %v5211, %v5210
    %v5213 = vsel %vm4477, %v5203, %v5212
    %v5214 = vrot.slane %v5204, 7
    %v5215 = vsel %vm4480, %v5214, %v5213
    %v5216 = vrot.slane %v5205, 6
    %v5217 = vsel %vm4483, %v5216, %v5215
    %v5218 = vrot.slane %v5206, 5
    %v5219 = vsel %vm4486, %v5218, %v5217
    %v5220 = vrot.slane %v5207, 4
    %v5221 = vsel %vm4489, %v5220, %v5219
    %v5222 = vpack.c.b16 %v5221, %v5221
    %5223 = vrot.lane.b32.xlu0 %v5222, 60
    %v5224 = vpop.permute.xlu0 %5223
    %vm5226 = vcmask 519648
    %5227 = vst.msk [vmem:[#allocation4] sm:$0xf] %vm5226, %v5224
    %v5228 = vld [vmem:[%s8] sm:$0xf]
    %v5229 = vld [vmem:[%s8 + $0x4] sm:$0xf]
    %v5230 = vld [vmem:[#allocation4] sm:$0x3]
    %v5233 = vunpack.c.l.b16 %v5228
    %v5234 = vunpack.c.l.b16 %v5229
    %v5235 = vpack.c.b16 %v5234, %v5233
    %vm5236 = vcmask 31744
    %v5238 = vsel %vm5236, %v5235, 0
    %vm5240 = vcmask 1041408
    %v5242 = vsel %vm5240, %v5230, 0
    %5244 = vmatprep.subr.bf16.mxu0 0
    %5245 = vmatpush1.bf16.msra.mxu0 0
    %5246 = vmatprep.subr.bf16.mxu0 0
    %5247 = vmatpush1.bf16.msra.mxu0 0
    %5248 = vmatprep.subr.bf16.mxu0 0
    %5249 = vmatpush1.bf16.msra.mxu0 0
    %5250 = vmatprep.subr.bf16.mxu0 0
    %5251 = vmatpush1.bf16.msra.mxu0 0
    %5252 = vmatprep.subr.bf16.mxu0 0
    %5253 = vmatpush1.bf16.msra.mxu0 0
    %5254 = vmatprep.subr.bf16.mxu0 0
    %5255 = vmatpush1.bf16.msra.mxu0 0
    %5256 = vmatprep.subr.bf16.mxu0 0
    %5257 = vmatpush1.bf16.msra.mxu0 0
    %5258 = vmatprep.subr.bf16.mxu0 0
    %5259 = vmatpush1.bf16.msra.mxu0 %v5242
    %5260 = vmatprep.subr.bf16.mxu0 0
    %5261 = vmatpush2.bf16.msra.mxu0 0
    %5262 = vmatprep.subr.bf16.mxu0 0
    %5263 = vmatpush2.bf16.msra.mxu0 0
    %5264 = vmatprep.subr.bf16.mxu0 0
    %5265 = vmatpush2.bf16.msra.mxu0 0
    %5266 = vmatprep.subr.bf16.mxu0 0
    %5267 = vmatpush2.bf16.msra.mxu0 0
    %5268 = vmatprep.subr.bf16.mxu0 0
    %5269 = vmatpush2.bf16.msra.mxu0 0
    %5270 = vmatprep.subr.bf16.mxu0 0
    %5271 = vmatpush2.bf16.msra.mxu0 0
    %5272 = vmatprep.subr.bf16.mxu0 0
    %5273 = vmatpush2.bf16.msra.mxu0 0
    %5274 = vmatprep.subr.bf16.mxu0 0
    %5275 = vmatpush2.bf16.msra.mxu0 0
    %5276 = vmatprep.mubr.bf16.mxu0 0
    %5277 = vmatmul.mubr.bf16.gmra.mxu0 %v5238
    %v5278 = vpop.f32.mrf.mxu0
    %v5279 = vadd.f32 0.0, %v5278
    %v5280 = vpop.f32.mrf.mxu0
    %v5281 = vpop.f32.mrf.mxu0
    %v5282 = vadd.f32 0.0, %v5281
    %v5283 = vpop.f32.mrf.mxu0
    %5284 = vdwg.mxu0
    %vm5285 = vcmask 523264
    %5286 = vst.msk [vmem:[#allocation5] sm:$0xff] %vm5285, %v5279
    %5287 = vst.msk [vmem:[#allocation5 + $0x8] sm:$0xff] %vm5285, %v5282
    %v5288 = vld [vmem:[#allocation4] sm:$0xc]
    %v5290 = vunpack.c.l.b16 %v5288
    %v5291 = vpack.c.b16 %v5290, %v5290
    %v5292 = vrot.slane %v5291, 2
    %v5294 = vsel %vm5240, %v5292, 0
    %5296 = vmatprep.subr.bf16.mxu0 0
    %5297 = vmatpush1.bf16.msra.mxu0 0
    %5298 = vmatprep.subr.bf16.mxu0 0
    %5299 = vmatpush1.bf16.msra.mxu0 0
    %5300 = vmatprep.subr.bf16.mxu0 0
    %5301 = vmatpush1.bf16.msra.mxu0 0
    %5302 = vmatprep.subr.bf16.mxu0 0
    %5303 = vmatpush1.bf16.msra.mxu0 0
    %5304 = vmatprep.subr.bf16.mxu0 0
    %5305 = vmatpush1.bf16.msra.mxu0 0
    %5306 = vmatprep.subr.bf16.mxu0 0
    %5307 = vmatpush1.bf16.msra.mxu0 0
    %5308 = vmatprep.subr.bf16.mxu0 0
    %5309 = vmatpush1.bf16.msra.mxu0 0
    %5310 = vmatprep.subr.bf16.mxu0 0
    %5311 = vmatpush1.bf16.msra.mxu0 %v5294
    %5312 = vmatprep.subr.bf16.mxu0 0
    %5313 = vmatpush2.bf16.msra.mxu0 0
    %5314 = vmatprep.subr.bf16.mxu0 0
    %5315 = vmatpush2.bf16.msra.mxu0 0
    %5316 = vmatprep.subr.bf16.mxu0 0
    %5317 = vmatpush2.bf16.msra.mxu0 0
    %5318 = vmatprep.subr.bf16.mxu0 0
    %5319 = vmatpush2.bf16.msra.mxu0 0
    %5320 = vmatprep.subr.bf16.mxu0 0
    %5321 = vmatpush2.bf16.msra.mxu0 0
    %5322 = vmatprep.subr.bf16.mxu0 0
    %5323 = vmatpush2.bf16.msra.mxu0 0
    %5324 = vmatprep.subr.bf16.mxu0 0
    %5325 = vmatpush2.bf16.msra.mxu0 0
    %5326 = vmatprep.subr.bf16.mxu0 0
    %5327 = vmatpush2.bf16.msra.mxu0 0
    %5328 = vmatprep.mubr.bf16.mxu0 0
    %5329 = vmatmul.mubr.bf16.gmra.mxu0 %v5238
    %v5330 = vpop.f32.mrf.mxu0
    %v5331 = vadd.f32 0.0, %v5330
    %v5332 = vpop.f32.mrf.mxu0
    %v5333 = vpop.f32.mrf.mxu0
    %v5334 = vadd.f32 0.0, %v5333
    %v5335 = vpop.f32.mrf.mxu0
    %5336 = vdwg.mxu0
    %5337 = vst.msk [vmem:[#allocation5 + $0x10] sm:$0xff] %vm5285, %v5331
    %5338 = vst.msk [vmem:[#allocation5 + $0x18] sm:$0xff] %vm5285, %v5334
    // Predicated region
    $region38: #{tpu_custom_call.1} parent=1 // pred_check
      _
    $region39: #{tpu_custom_call.1} parent=1 // pred_check_branch
      %5340 = sbr.rel (0) target = $region41
    $region40: #{tpu_custom_call.1} parent=1 // pred_region
      %s5342 = ssub.s32 512, 512
      %5343 = vsyncadd [#allocation6], %s5342
      %s5344 = sshll.u32 [#allocation5], 4
      %s5345 = int_to_ptr.vmem [resolvable:$true] %s5344
      %5350 = dma.vmem_to_hbm [thread:$0]  %s5345, 512, %s9, [#allocation6], 128, 128, 8
    $region41: #{tpu_custom_call.1} parent=1 // pred_fallthru
      _
    // Predicated region
    $region42: #{tpu_custom_call.1} parent=1 // pred_check
      _
    $region43: #{tpu_custom_call.1} parent=1 // pred_check_branch
      %5352 = sbr.rel (0) target = $region45
    $region44: #{tpu_custom_call.1} parent=1 // pred_region
      %5353 = dma.done [#allocation6], 512
    $region45: #{tpu_custom_call.1} parent=1 // pred_fallthru
      _
    %5354 = vsyncpa [#allocation6], 1

</llo_original>
